<compile_context>
chip_gen: v7x
topology: tpu7x:2x2x1
jax: 0.10.0
libtpu: 0.0.40
codegen_flags: <defaults>
</compile_context>

<pallas_src>
import functools

import jax
import jax.numpy as jnp
from jax.experimental import pallas as pl
from jax.experimental.pallas import tpu as pltpu

EPS = 1e-5  # BatchNorm2d default eps


def _stage_kernel(x_ref, w_ref, p_ref, o_ref,
                  xpad_ref, sum_ref, ssq_ref, ss_ref, *,
                  tile_h, height, width, cin_p, cout, m_total, packed):
    # x_ref   : [1, H, W, Cin_p]        bf16 (unpadded image, resident per image)
    # w_ref   : [9*Cin_p, Cout]         bf16 (tap-major, channel-minor weights)
    # p_ref   : [3, Cout]               f32  (rows: bias, gamma, beta)
    # o_ref   : [1, tile_h, W, Cout]    out dtype (bf16 stage 1 / f32 stage 2)
    # xpad_ref: [H+2, W+2, Cin_p]       bf16 scratch (1-px halo padded image)
    # sum_ref / ssq_ref : [1, Cout] f32 scratch (BN stats, persist across grid)
    # ss_ref  : [2, Cout] f32 scratch   (hoisted BN scale / shift)
    pss = pl.program_id(0)          # 0 = stats pass, 1 = normalize+store pass
    img = pl.program_id(1)
    rt = pl.program_id(2)
    m_tile = tile_h * width

    @pl.when((pss == 0) & (img == 0) & (rt == 0))
    def _init_stats():
        sum_ref[...] = jnp.zeros_like(sum_ref)
        ssq_ref[...] = jnp.zeros_like(ssq_ref)

    # Build the padded image in VMEM once per (pass, image).  The x block index
    # ignores the row-tile axis, so its DMA also happens once per (pass, image).
    @pl.when(rt == 0)
    def _fill_padded():
        xpad_ref[...] = jnp.zeros_like(xpad_ref)
        xpad_ref[1:height + 1, 1:width + 1, :] = x_ref[0]

    r0 = pl.multiple_of(rt * tile_h, tile_h)   # first padded row of this tile

    # Conv(3x3, pad=1): recomputed in pass 1 (cheaper than a pre-BN HBM round
    # trip for small channel counts).  Row bands loaded once per di; dj shifts
    # are static slices of the resident band.
    if packed:
        taps = []
        for di in range(3):
            band = xpad_ref[pl.ds(r0 + di, tile_h)]          # [tile_h, W+2, Cin_p]
            for dj in range(3):
                taps.append(band[:, dj:dj + width, :])        # [tile_h, W, Cin_p]
        patch = jnp.concatenate(taps, axis=-1).reshape(m_tile, 9 * cin_p)
        acc = jnp.dot(patch, w_ref[...], preferred_element_type=jnp.float32)
    else:
        acc = jnp.zeros((m_tile, cout), jnp.float32)
        for di in range(3):
            band = xpad_ref[pl.ds(r0 + di, tile_h)]
            for dj in range(3):
                t = di * 3 + dj
                patch = band[:, dj:dj + width, :].reshape(m_tile, cin_p)
                acc = acc + jnp.dot(patch, w_ref[t * cin_p:(t + 1) * cin_p, :],
                                    preferred_element_type=jnp.float32)

    y = jnp.maximum(acc + p_ref[0:1, :], 0.0)                 # bias + ReLU, f32

    @pl.when(pss == 0)
    def _accumulate_stats():
        sum_ref[...] += jnp.sum(y, axis=0, keepdims=True)
        ssq_ref[...] += jnp.sum(y * y, axis=0, keepdims=True)

    # Hoisted BN epilogue constants: computed once at the first pass-1 step.
    @pl.when((pss == 1) & (img == 0) & (rt == 0))
    def _finalize_stats():
        inv_m = 1.0 / float(m_total)
        mean = sum_ref[...] * inv_m
        # NOTE: E[x^2]-E[x]^2 in f32; clamped at 0.  Fine for moderate N*H*W.
        var = jnp.maximum(ssq_ref[...] * inv_m - mean * mean, 0.0)
        scale = p_ref[1:2, :] * jax.lax.rsqrt(var + EPS)      # gamma*rsqrt(var+eps)
        ss_ref[0:1, :] = scale
        ss_ref[1:2, :] = p_ref[2:3, :] - scale * mean          # beta - scale*mean

    @pl.when(pss == 1)
    def _normalize_and_store():
        out = y * ss_ref[0:1, :] + ss_ref[1:2, :]
        o_ref[0, :, :, :] = out.reshape(tile_h, width, cout).astype(o_ref.dtype)


def _conv_relu_bn_stage(x_nhwc, weight, bias, gamma, beta, *, out_dtype):
    """One fused (Conv2d 3x3 pad=1 -> ReLU -> BatchNorm2d) stage, NHWC in/out."""
    n, h, w, cin = x_nhwc.shape
    cout, cin_w, kh, kw = weight.shape
    assert cin == cin_w and kh == 3 and kw == 3
    cin_p = ((cin + 7) // 8) * 8                  # pad K to a sublane multiple

    # Row tile: largest divisor of H with tile_h*W <= ~1024 (fill the MXU M dim,
    # cut per-grid-step overhead); falls back to single rows for very wide images.
    tile_h = 1
    for d in range(1, h + 1):
        if h % d == 0 and d * w <= 1024:
            tile_h = d
    n_row_tiles = h // tile_h
    m_tile = tile_h * w

    # Only the external (stage-1) input needs any XLA-side prep; the bf16 NHWC
    # intermediate (Cout already a multiple of 8) feeds the next stage directly.
    if cin_p != cin:
        x_nhwc = jnp.pad(x_nhwc, ((0, 0), (0, 0), (0, 0), (0, cin_p - cin)))
    if x_nhwc.dtype != jnp.bfloat16:
        x_nhwc = x_nhwc.astype(jnp.bfloat16)

    # [cout, cin, 3, 3] -> [(ki*3+kj)*cin_p + c, cout]  (tap-major, channel-minor)
    w_mat = jnp.transpose(weight, (2, 3, 1, 0))                     # [3,3,cin,cout]
    w_mat = jnp.pad(w_mat, ((0, 0), (0, 0), (0, cin_p - cin), (0, 0)))
    w_mat = w_mat.reshape(9 * cin_p, cout).astype(jnp.bfloat16)

    bn_params = jnp.stack([bias, gamma, beta]).astype(jnp.float32)  # [3, cout]

    packed = (9 * cin_p) <= 512      # pack taps into K only for small channels

    kernel = functools.partial(
        _stage_kernel, tile_h=tile_h, height=h, width=w, cin_p=cin_p,
        cout=cout, m_total=n * h * w, packed=packed)

    # Rough resident-VMEM estimate: double-buffered input block + padded scratch
    # + double-buffered output tile + weights + in-flight patch/acc values.
    out_bytes = jnp.dtype(out_dtype).itemsize
    est = (2 * h * w * cin_p * 2 + (h + 2) * (w + 2) * cin_p * 2
           + 2 * m_tile * cout * out_bytes + 9 * cin_p * cout * 2
           + 4 * m_tile * max(9 * cin_p, cout))
    cp_kwargs = dict(
        # Must stay "arbitrary": BN stats are a cross-grid reduction into shared
        # VMEM scratch (see megacore TODO above for v7x).
        dimension_semantics=("arbitrary", "arbitrary", "arbitrary"))
    if est > (12 << 20):
        cp_kwargs["vmem_limit_bytes"] = int(min(2 * est + (8 << 20), 64 << 20))

    out = pl.pallas_call(
        kernel,
        out_shape=jax.ShapeDtypeStruct((n, h, w, cout), out_dtype),
        grid_spec=pltpu.PrefetchScalarGridSpec(
            num_scalar_prefetch=0,
            grid=(2, n, n_row_tiles),                 # (pass, image, row-tile)
            in_specs=[
                # Whole (unpadded) image resident per (pass, image); reused
                # across row tiles since the index ignores the row axis.
                pl.BlockSpec((1, h, w, cin_p), lambda p, b, r: (b, 0, 0, 0)),
                pl.BlockSpec((9 * cin_p, cout), lambda p, b, r: (0, 0)),
                pl.BlockSpec((3, cout), lambda p, b, r: (0, 0)),
            ],
            # Pass 0 (stats) maps every step to block (0,0,0,0) and never
            # stores; pass 1 streams out the final tiles.
            out_specs=pl.BlockSpec((1, tile_h, w, cout),
                                   lambda p, b, r: (p * b, p * r, 0, 0)),
            scratch_shapes=[
                pltpu.VMEM((h + 2, w + 2, cin_p), jnp.bfloat16),  # padded image
                pltpu.VMEM((1, cout), jnp.float32),               # sum
                pltpu.VMEM((1, cout), jnp.float32),               # sum of squares
                pltpu.VMEM((2, cout), jnp.float32),               # scale / shift
            ],
        ),
        compiler_params=pltpu.CompilerParams(**cp_kwargs),
    )(x_nhwc, w_mat, bn_params)
    return out


def convolution_block(x_nchw, params):
    """Full ConvolutionBlock forward.  External layout: NCHW (like PyTorch)."""
    x = jnp.transpose(x_nchw, (0, 2, 3, 1))                  # NCHW -> NHWC once
    x = _conv_relu_bn_stage(x, params["w1"], params["b1"], params["g1"],
                            params["beta1"], out_dtype=jnp.bfloat16)
    x = _conv_relu_bn_stage(x, params["w2"], params["b2"], params["g2"],
                            params["beta2"], out_dtype=jnp.float32)
    return jnp.transpose(x, (0, 3, 1, 2))                    # NHWC -> NCHW


def init_params(key, in_channels, out_channels, kh=3, kw=3):
    """Deterministic init mirroring PyTorch default shapes."""
    k1, k2, k3, k4 = jax.random.split(key, 4)
    bound1 = 1.0 / (in_channels * kh * kw) ** 0.5
    bound2 = 1.0 / (out_channels * kh * kw) ** 0.5
    return {
        "w1": jax.random.uniform(k1, (out_channels, in_channels, kh, kw),
                                 jnp.float32, -bound1, bound1),
        "b1": jax.random.uniform(k2, (out_channels,), jnp.float32, -bound1, bound1),
        "g1": jnp.ones((out_channels,), jnp.float32),
        "beta1": jnp.zeros((out_channels,), jnp.float32),
        "w2": jax.random.uniform(k3, (out_channels, out_channels, kh, kw),
                                 jnp.float32, -bound2, bound2),
        "b2": jax.random.uniform(k4, (out_channels,), jnp.float32, -bound2, bound2),
        "g2": jnp.ones((out_channels,), jnp.float32),
        "beta2": jnp.zeros((out_channels,), jnp.float32),
    }


def _reference(x_nchw, params):
    """Pure-JAX reference (bf16 conv inputs to match the kernel's precision)."""
    def stage(x, w, b, g, beta):
        y = jax.lax.conv_general_dilated(
            x.astype(jnp.bfloat16), w.astype(jnp.bfloat16),
            window_strides=(1, 1), padding=((1, 1), (1, 1)),
            dimension_numbers=("NCHW", "OIHW", "NCHW"),
            preferred_element_type=jnp.float32)
        y = y + b[None, :, None, None]
        y = jnp.maximum(y, 0.0)
        mean = jnp.mean(y, axis=(0, 2, 3), keepdims=True)
        var = jnp.mean((y - mean) ** 2, axis=(0, 2, 3), keepdims=True)
        yhat = (y - mean) * jax.lax.rsqrt(var + EPS)
        return g[None, :, None, None] * yhat + beta[None, :, None, None]
    y = stage(x_nchw, params["w1"], params["b1"], params["g1"], params["beta1"])
    return stage(y, params["w2"], params["b2"], params["g2"], params["beta2"])


if __name__ == "__main__":
    key = jax.random.PRNGKey(0)
    kx, kp = jax.random.split(key)

    N, C_IN, C_OUT, H, W = 2, 4, 8, 16, 16
    x = jax.random.normal(kx, (N, C_IN, H, W), dtype=jnp.float32)   # NCHW input
    params = init_params(kp, C_IN, C_OUT)

    y = jax.jit(convolution_block)(x, params)
    y = jax.block_until_ready(y)
    assert y.shape == (N, C_OUT, H, W), y.shape

    y_ref = _reference(x, params)
    err = jnp.abs(y - y_ref)
    max_err = float(jnp.max(err))
    mean_err = float(jnp.mean(err))
    assert max_err < 0.3 and mean_err < 0.06, (max_err, mean_err)

    print("KERNEL_OK")
</pallas_src>

<mosaic_0001>
module attributes {stable_mosaic.version = 11 : i64} {
  func.func @_stage_kernel(%arg0: i32, %arg1: i32, %arg2: i32, %arg3: memref<1x16x16x8xbf16, #tpu.memory_space<vmem>>, %arg4: memref<72x8xbf16, #tpu.memory_space<vmem>>, %arg5: memref<3x8xf32, #tpu.memory_space<vmem>>, %arg6: memref<1x16x16x8xbf16, #tpu.memory_space<vmem>>, %arg7: memref<18x18x8xbf16, #tpu.memory_space<vmem>>, %arg8: memref<1x8xf32, #tpu.memory_space<vmem>>, %arg9: memref<1x8xf32, #tpu.memory_space<vmem>>, %arg10: memref<2x8xf32, #tpu.memory_space<vmem>>) attributes {dimension_semantics = [#tpu.dimension_semantics<arbitrary>, #tpu.dimension_semantics<arbitrary>, #tpu.dimension_semantics<arbitrary>], iteration_bounds = array<i64: 2, 2, 1>, scalar_prefetch = 0 : i64, scratch_operands = 4 : i64, tpu.core_type = #tpu.core_type<tc>, window_params = [{transform_indices = @transform_0, window_bounds = array<i64: 1, 16, 16, 8>}, {pipeline_mode = #tpu.pipeline_mode<synchronous>, transform_indices = @transform_1, window_bounds = array<i64: 72, 8>}, {pipeline_mode = #tpu.pipeline_mode<synchronous>, transform_indices = @transform_2, window_bounds = array<i64: 3, 8>}, {transform_indices = @transform_3, window_bounds = array<i64: 1, 16, 16, 8>}]} {
    %c0_i32 = arith.constant 0 : i32
    %0 = arith.cmpi eq, %arg0, %c0_i32 : i32
    %c0_i32_0 = arith.constant 0 : i32
    %1 = arith.cmpi eq, %arg1, %c0_i32_0 : i32
    %2 = arith.andi %0, %1 : i1
    %c0_i32_1 = arith.constant 0 : i32
    %3 = arith.cmpi eq, %arg2, %c0_i32_1 : i32
    %4 = arith.andi %2, %3 : i1
    %5 = arith.extui %4 : i1 to i32
    %c0_i32_2 = arith.constant 0 : i32
    %6 = arith.cmpi ne, %5, %c0_i32_2 : i32
    scf.if %6 {
      %cst_24 = arith.constant 0.000000e+00 : f32
      %52 = vector.broadcast %cst_24 : f32 to vector<1x8xf32>
      %c0_25 = arith.constant 0 : index
      %c0_26 = arith.constant 0 : index
      %53 = vector.load %arg8[%c0_25, %c0_26] : memref<1x8xf32, #tpu.memory_space<vmem>>, vector<1x8xf32>
      tpu.vector_store %arg8[%c0_25, %c0_26], %52 {strides = array<i32>} : memref<1x8xf32, #tpu.memory_space<vmem>>, vector<1x8xf32>,
      %cst_27 = arith.constant 0.000000e+00 : f32
      %54 = vector.broadcast %cst_27 : f32 to vector<1x8xf32>
      %c0_28 = arith.constant 0 : index
      %c0_29 = arith.constant 0 : index
      %55 = vector.load %arg9[%c0_28, %c0_29] : memref<1x8xf32, #tpu.memory_space<vmem>>, vector<1x8xf32>
      tpu.vector_store %arg9[%c0_28, %c0_29], %54 {strides = array<i32>} : memref<1x8xf32, #tpu.memory_space<vmem>>, vector<1x8xf32>,
    } else {
    }
    %c0_i32_3 = arith.constant 0 : i32
    %7 = arith.cmpi eq, %arg2, %c0_i32_3 : i32
    %8 = arith.extui %7 : i1 to i32
    %c0_i32_4 = arith.constant 0 : i32
    %9 = arith.cmpi ne, %8, %c0_i32_4 : i32
    scf.if %9 {
      %cst_24 = arith.constant 0.000000e+00 : bf16
      %52 = vector.broadcast %cst_24 : bf16 to vector<18x18x8xbf16>
      %c0_25 = arith.constant 0 : index
      %c0_26 = arith.constant 0 : index
      %c0_27 = arith.constant 0 : index
      %53 = vector.load %arg7[%c0_25, %c0_26, %c0_27] : memref<18x18x8xbf16, #tpu.memory_space<vmem>>, vector<18x18x8xbf16>
      tpu.vector_store %arg7[%c0_25, %c0_26, %c0_27], %52 {strides = array<i32>} : memref<18x18x8xbf16, #tpu.memory_space<vmem>>, vector<18x18x8xbf16>,
      %c0_28 = arith.constant 0 : index
      %c0_29 = arith.constant 0 : index
      %c0_30 = arith.constant 0 : index
      %c0_31 = arith.constant 0 : index
      %54 = vector.load %arg3[%c0_28, %c0_29, %c0_30, %c0_31] : memref<1x16x16x8xbf16, #tpu.memory_space<vmem>>, vector<1x16x16x8xbf16>
      %55 = vector.shape_cast %54 : vector<1x16x16x8xbf16> to vector<16x16x8xbf16>
      %c1 = arith.constant 1 : index
      %c1_32 = arith.constant 1 : index
      %c0_33 = arith.constant 0 : index
      %56 = vector.load %arg7[%c1, %c1_32, %c0_33] : memref<18x18x8xbf16, #tpu.memory_space<vmem>>, vector<16x16x8xbf16>
      tpu.vector_store %arg7[%c1, %c1_32, %c0_33], %55 {strides = array<i32>} : memref<18x18x8xbf16, #tpu.memory_space<vmem>>, vector<16x16x8xbf16>,
    } else {
    }
    %c16_i32 = arith.constant 16 : i32
    %10 = arith.muli %arg2, %c16_i32 : i32
    %11 = tpu.assume_multiple %10, 16 : i32
    %c0_i32_5 = arith.constant 0 : i32
    %12 = arith.addi %11, %c0_i32_5 : i32
    %13 = arith.index_cast %12 : i32 to index
    %c0 = arith.constant 0 : index
    %c0_6 = arith.constant 0 : index
    %14 = vector.load %arg7[%13, %c0, %c0_6] : memref<18x18x8xbf16, #tpu.memory_space<vmem>>, vector<16x18x8xbf16>
    %15 = vector.extract_strided_slice %14 {offsets = [0, 0, 0], sizes = [16, 16, 8], strides = [1, 1, 1]} : vector<16x18x8xbf16> to vector<16x16x8xbf16>
    %16 = vector.extract_strided_slice %14 {offsets = [0, 1, 0], sizes = [16, 16, 8], strides = [1, 1, 1]} : vector<16x18x8xbf16> to vector<16x16x8xbf16>
    %17 = vector.extract_strided_slice %14 {offsets = [0, 2, 0], sizes = [16, 16, 8], strides = [1, 1, 1]} : vector<16x18x8xbf16> to vector<16x16x8xbf16>
    %c1_i32 = arith.constant 1 : i32
    %18 = arith.addi %11, %c1_i32 : i32
    %19 = arith.index_cast %18 : i32 to index
    %c0_7 = arith.constant 0 : index
    %c0_8 = arith.constant 0 : index
    %20 = vector.load %arg7[%19, %c0_7, %c0_8] : memref<18x18x8xbf16, #tpu.memory_space<vmem>>, vector<16x18x8xbf16>
    %21 = vector.extract_strided_slice %20 {offsets = [0, 0, 0], sizes = [16, 16, 8], strides = [1, 1, 1]} : vector<16x18x8xbf16> to vector<16x16x8xbf16>
    %22 = vector.extract_strided_slice %20 {offsets = [0, 1, 0], sizes = [16, 16, 8], strides = [1, 1, 1]} : vector<16x18x8xbf16> to vector<16x16x8xbf16>
    %23 = vector.extract_strided_slice %20 {offsets = [0, 2, 0], sizes = [16, 16, 8], strides = [1, 1, 1]} : vector<16x18x8xbf16> to vector<16x16x8xbf16>
    %c2_i32 = arith.constant 2 : i32
    %24 = arith.addi %11, %c2_i32 : i32
    %25 = arith.index_cast %24 : i32 to index
    %c0_9 = arith.constant 0 : index
    %c0_10 = arith.constant 0 : index
    %26 = vector.load %arg7[%25, %c0_9, %c0_10] : memref<18x18x8xbf16, #tpu.memory_space<vmem>>, vector<16x18x8xbf16>
    %27 = vector.extract_strided_slice %26 {offsets = [0, 0, 0], sizes = [16, 16, 8], strides = [1, 1, 1]} : vector<16x18x8xbf16> to vector<16x16x8xbf16>
    %28 = vector.extract_strided_slice %26 {offsets = [0, 1, 0], sizes = [16, 16, 8], strides = [1, 1, 1]} : vector<16x18x8xbf16> to vector<16x16x8xbf16>
    %29 = vector.extract_strided_slice %26 {offsets = [0, 2, 0], sizes = [16, 16, 8], strides = [1, 1, 1]} : vector<16x18x8xbf16> to vector<16x16x8xbf16>
    %30 = tpu.concatenate %15, %16, %17, %21, %22, %23, %27, %28, %29 in 2 : vector<16x16x8xbf16>, vector<16x16x8xbf16>, vector<16x16x8xbf16>, vector<16x16x8xbf16>, vector<16x16x8xbf16>, vector<16x16x8xbf16>, vector<16x16x8xbf16>, vector<16x16x8xbf16>, vector<16x16x8xbf16> -> vector<16x16x72xbf16>
    %31 = vector.shape_cast %30 : vector<16x16x72xbf16> to vector<256x72xbf16>
    %c0_11 = arith.constant 0 : index
    %c0_12 = arith.constant 0 : index
    %32 = vector.load %arg4[%c0_11, %c0_12] : memref<72x8xbf16, #tpu.memory_space<vmem>>, vector<72x8xbf16>
    %cst = arith.constant dense<0.000000e+00> : vector<256x8xf32>
    %33 = tpu.matmul %31, %32, %cst {dimension_numbers = #tpu.dot_dimension_numbers<[1], [0], [0], [1], [0, 0, 1, 1], [], []>} : vector<256x72xbf16>, vector<72x8xbf16>, vector<256x8xf32> -> vector<256x8xf32>
    %c0_13 = arith.constant 0 : index
    %c0_14 = arith.constant 0 : index
    %34 = vector.load %arg5[%c0_13, %c0_14] : memref<3x8xf32, #tpu.memory_space<vmem>>, vector<1x8xf32>
    %35 = vector.broadcast %34 : vector<1x8xf32> to vector<256x8xf32>
    %36 = arith.addf %33, %35 : vector<256x8xf32>
    %cst_15 = arith.constant 0.000000e+00 : f32
    %37 = vector.broadcast %cst_15 : f32 to vector<256x8xf32>
    %38 = arith.maximumf %36, %37 : vector<256x8xf32>
    %c0_i32_16 = arith.constant 0 : i32
    %39 = arith.cmpi eq, %arg0, %c0_i32_16 : i32
    %40 = arith.extui %39 : i1 to i32
    %c0_i32_17 = arith.constant 0 : i32
    %41 = arith.cmpi ne, %40, %c0_i32_17 : i32
    scf.if %41 {
      %c0_24 = arith.constant 0 : index
      %c0_25 = arith.constant 0 : index
      %52 = vector.load %arg8[%c0_24, %c0_25] : memref<1x8xf32, #tpu.memory_space<vmem>>, vector<1x8xf32>
      %cst_26 = arith.constant dense<0.000000e+00> : vector<8xf32>
      %53 = vector.multi_reduction <add>, %38, %cst_26 [0] : vector<256x8xf32> to vector<8xf32>
      %54 = vector.shape_cast %53 : vector<8xf32> to vector<1x8xf32>
      %55 = arith.addf %52, %54 : vector<1x8xf32>
      %c0_27 = arith.constant 0 : index
      %c0_28 = arith.constant 0 : index
      %56 = vector.load %arg8[%c0_27, %c0_28] : memref<1x8xf32, #tpu.memory_space<vmem>>, vector<1x8xf32>
      tpu.vector_store %arg8[%c0_27, %c0_28], %55 {strides = array<i32>} : memref<1x8xf32, #tpu.memory_space<vmem>>, vector<1x8xf32>,
      %c0_29 = arith.constant 0 : index
      %c0_30 = arith.constant 0 : index
      %57 = vector.load %arg9[%c0_29, %c0_30] : memref<1x8xf32, #tpu.memory_space<vmem>>, vector<1x8xf32>
      %58 = arith.mulf %38, %38 : vector<256x8xf32>
      %cst_31 = arith.constant dense<0.000000e+00> : vector<8xf32>
      %59 = vector.multi_reduction <add>, %58, %cst_31 [0] : vector<256x8xf32> to vector<8xf32>
      %60 = vector.shape_cast %59 : vector<8xf32> to vector<1x8xf32>
      %61 = arith.addf %57, %60 : vector<1x8xf32>
      %c0_32 = arith.constant 0 : index
      %c0_33 = arith.constant 0 : index
      %62 = vector.load %arg9[%c0_32, %c0_33] : memref<1x8xf32, #tpu.memory_space<vmem>>, vector<1x8xf32>
      tpu.vector_store %arg9[%c0_32, %c0_33], %61 {strides = array<i32>} : memref<1x8xf32, #tpu.memory_space<vmem>>, vector<1x8xf32>,
    } else {
    }
    %c1_i32_18 = arith.constant 1 : i32
    %42 = arith.cmpi eq, %arg0, %c1_i32_18 : i32
    %c0_i32_19 = arith.constant 0 : i32
    %43 = arith.cmpi eq, %arg1, %c0_i32_19 : i32
    %44 = arith.andi %42, %43 : i1
    %c0_i32_20 = arith.constant 0 : i32
    %45 = arith.cmpi eq, %arg2, %c0_i32_20 : i32
    %46 = arith.andi %44, %45 : i1
    %47 = arith.extui %46 : i1 to i32
    %c0_i32_21 = arith.constant 0 : i32
    %48 = arith.cmpi ne, %47, %c0_i32_21 : i32
    scf.if %48 {
      %c0_24 = arith.constant 0 : index
      %c0_25 = arith.constant 0 : index
      %52 = vector.load %arg8[%c0_24, %c0_25] : memref<1x8xf32, #tpu.memory_space<vmem>>, vector<1x8xf32>
      %cst_26 = arith.constant 0.001953125 : f32
      %53 = vector.broadcast %cst_26 : f32 to vector<1x8xf32>
      %54 = arith.mulf %52, %53 : vector<1x8xf32>
      %c0_27 = arith.constant 0 : index
      %c0_28 = arith.constant 0 : index
      %55 = vector.load %arg9[%c0_27, %c0_28] : memref<1x8xf32, #tpu.memory_space<vmem>>, vector<1x8xf32>
      %cst_29 = arith.constant 0.001953125 : f32
      %56 = vector.broadcast %cst_29 : f32 to vector<1x8xf32>
      %57 = arith.mulf %55, %56 : vector<1x8xf32>
      %58 = arith.mulf %54, %54 : vector<1x8xf32>
      %59 = arith.subf %57, %58 : vector<1x8xf32>
      %cst_30 = arith.constant 0.000000e+00 : f32
      %60 = vector.broadcast %cst_30 : f32 to vector<1x8xf32>
      %61 = arith.maximumf %59, %60 : vector<1x8xf32>
      %c1 = arith.constant 1 : index
      %c0_31 = arith.constant 0 : index
      %62 = vector.load %arg5[%c1, %c0_31] : memref<3x8xf32, #tpu.memory_space<vmem>>, vector<1x8xf32>
      %cst_32 = arith.constant 9.99999974E-6 : f32
      %63 = vector.broadcast %cst_32 : f32 to vector<1x8xf32>
      %64 = arith.addf %61, %63 : vector<1x8xf32>
      %65 = math.rsqrt %64 : vector<1x8xf32>
      %66 = arith.mulf %62, %65 : vector<1x8xf32>
      %c0_33 = arith.constant 0 : index
      %c0_34 = arith.constant 0 : index
      %67 = vector.load %arg10[%c0_33, %c0_34] : memref<2x8xf32, #tpu.memory_space<vmem>>, vector<1x8xf32>
      tpu.vector_store %arg10[%c0_33, %c0_34], %66 {strides = array<i32>} : memref<2x8xf32, #tpu.memory_space<vmem>>, vector<1x8xf32>,
      %c2 = arith.constant 2 : index
      %c0_35 = arith.constant 0 : index
      %68 = vector.load %arg5[%c2, %c0_35] : memref<3x8xf32, #tpu.memory_space<vmem>>, vector<1x8xf32>
      %69 = arith.mulf %66, %54 : vector<1x8xf32>
      %70 = arith.subf %68, %69 : vector<1x8xf32>
      %c1_36 = arith.constant 1 : index
      %c0_37 = arith.constant 0 : index
      %71 = vector.load %arg10[%c1_36, %c0_37] : memref<2x8xf32, #tpu.memory_space<vmem>>, vector<1x8xf32>
      tpu.vector_store %arg10[%c1_36, %c0_37], %70 {strides = array<i32>} : memref<2x8xf32, #tpu.memory_space<vmem>>, vector<1x8xf32>,
    } else {
    }
    %c1_i32_22 = arith.constant 1 : i32
    %49 = arith.cmpi eq, %arg0, %c1_i32_22 : i32
    %50 = arith.extui %49 : i1 to i32
    %c0_i32_23 = arith.constant 0 : i32
    %51 = arith.cmpi ne, %50, %c0_i32_23 : i32
    scf.if %51 {
      %c0_24 = arith.constant 0 : index
      %c0_25 = arith.constant 0 : index
      %52 = vector.load %arg10[%c0_24, %c0_25] : memref<2x8xf32, #tpu.memory_space<vmem>>, vector<1x8xf32>
      %53 = vector.broadcast %52 : vector<1x8xf32> to vector<256x8xf32>
      %54 = arith.mulf %38, %53 : vector<256x8xf32>
      %c1 = arith.constant 1 : index
      %c0_26 = arith.constant 0 : index
      %55 = vector.load %arg10[%c1, %c0_26] : memref<2x8xf32, #tpu.memory_space<vmem>>, vector<1x8xf32>
      %56 = vector.broadcast %55 : vector<1x8xf32> to vector<256x8xf32>
      %57 = arith.addf %54, %56 : vector<256x8xf32>
      %58 = vector.shape_cast %57 : vector<256x8xf32> to vector<16x16x8xf32>
      %59 = arith.truncf %58 : vector<16x16x8xf32> to vector<16x16x8xbf16>
      %c0_27 = arith.constant 0 : index
      %c0_28 = arith.constant 0 : index
      %c0_29 = arith.constant 0 : index
      %c0_30 = arith.constant 0 : index
      %60 = vector.load %arg6[%c0_27, %c0_28, %c0_29, %c0_30] : memref<1x16x16x8xbf16, #tpu.memory_space<vmem>>, vector<1x16x16x8xbf16>
      %61 = vector.shape_cast %60 : vector<1x16x16x8xbf16> to vector<16x16x8xbf16>
      %62 = vector.shape_cast %59 : vector<16x16x8xbf16> to vector<1x16x16x8xbf16>
      tpu.vector_store %arg6[%c0_27, %c0_28, %c0_29, %c0_30], %62 {strides = array<i32>} : memref<1x16x16x8xbf16, #tpu.memory_space<vmem>>, vector<1x16x16x8xbf16>,
    } else {
    }
    return
  }
  func.func @transform_0(%arg0: i32, %arg1: i32, %arg2: i32) -> (i32, i32, i32, i32) {
    %c0_i32 = arith.constant 0 : i32
    %c0_i32_0 = arith.constant 0 : i32
    %c0_i32_1 = arith.constant 0 : i32
    %c0_i32_2 = arith.constant 0 : i32
    return %arg1, %c0_i32, %c0_i32_0, %c0_i32_1 : i32, i32, i32, i32
  }
  func.func @transform_1(%arg0: i32, %arg1: i32, %arg2: i32) -> (i32, i32) {
    %c0_i32 = arith.constant 0 : i32
    %c0_i32_0 = arith.constant 0 : i32
    %c0_i32_1 = arith.constant 0 : i32
    return %c0_i32, %c0_i32_0 : i32, i32
  }
  func.func @transform_2(%arg0: i32, %arg1: i32, %arg2: i32) -> (i32, i32) {
    %c0_i32 = arith.constant 0 : i32
    %c0_i32_0 = arith.constant 0 : i32
    %c0_i32_1 = arith.constant 0 : i32
    return %c0_i32, %c0_i32_0 : i32, i32
  }
  func.func @transform_3(%arg0: i32, %arg1: i32, %arg2: i32) -> (i32, i32, i32, i32) {
    %0 = arith.muli %arg0, %arg1 : i32
    %1 = arith.muli %arg0, %arg2 : i32
    %c0_i32 = arith.constant 0 : i32
    %c0_i32_0 = arith.constant 0 : i32
    %c0_i32_1 = arith.constant 0 : i32
    return %0, %1, %c0_i32, %c0_i32_0 : i32, i32, i32, i32
  }
}

module attributes {stable_mosaic.version = 11 : i64} {
  func.func @_stage_kernel(%arg0: i32, %arg1: i32, %arg2: i32, %arg3: memref<1x16x16x8xbf16, #tpu.memory_space<vmem>>, %arg4: memref<72x8xbf16, #tpu.memory_space<vmem>>, %arg5: memref<3x8xf32, #tpu.memory_space<vmem>>, %arg6: memref<1x16x16x8xf32, #tpu.memory_space<vmem>>, %arg7: memref<18x18x8xbf16, #tpu.memory_space<vmem>>, %arg8: memref<1x8xf32, #tpu.memory_space<vmem>>, %arg9: memref<1x8xf32, #tpu.memory_space<vmem>>, %arg10: memref<2x8xf32, #tpu.memory_space<vmem>>) attributes {dimension_semantics = [#tpu.dimension_semantics<arbitrary>, #tpu.dimension_semantics<arbitrary>, #tpu.dimension_semantics<arbitrary>], iteration_bounds = array<i64: 2, 2, 1>, scalar_prefetch = 0 : i64, scratch_operands = 4 : i64, tpu.core_type = #tpu.core_type<tc>, window_params = [{transform_indices = @transform_0, window_bounds = array<i64: 1, 16, 16, 8>}, {pipeline_mode = #tpu.pipeline_mode<synchronous>, transform_indices = @transform_1, window_bounds = array<i64: 72, 8>}, {pipeline_mode = #tpu.pipeline_mode<synchronous>, transform_indices = @transform_2, window_bounds = array<i64: 3, 8>}, {transform_indices = @transform_3, window_bounds = array<i64: 1, 16, 16, 8>}]} {
    %c0_i32 = arith.constant 0 : i32
    %0 = arith.cmpi eq, %arg0, %c0_i32 : i32
    %c0_i32_0 = arith.constant 0 : i32
    %1 = arith.cmpi eq, %arg1, %c0_i32_0 : i32
    %2 = arith.andi %0, %1 : i1
    %c0_i32_1 = arith.constant 0 : i32
    %3 = arith.cmpi eq, %arg2, %c0_i32_1 : i32
    %4 = arith.andi %2, %3 : i1
    %5 = arith.extui %4 : i1 to i32
    %c0_i32_2 = arith.constant 0 : i32
    %6 = arith.cmpi ne, %5, %c0_i32_2 : i32
    scf.if %6 {
      %cst_24 = arith.constant 0.000000e+00 : f32
      %52 = vector.broadcast %cst_24 : f32 to vector<1x8xf32>
      %c0_25 = arith.constant 0 : index
      %c0_26 = arith.constant 0 : index
      %53 = vector.load %arg8[%c0_25, %c0_26] : memref<1x8xf32, #tpu.memory_space<vmem>>, vector<1x8xf32>
      tpu.vector_store %arg8[%c0_25, %c0_26], %52 {strides = array<i32>} : memref<1x8xf32, #tpu.memory_space<vmem>>, vector<1x8xf32>,
      %cst_27 = arith.constant 0.000000e+00 : f32
      %54 = vector.broadcast %cst_27 : f32 to vector<1x8xf32>
      %c0_28 = arith.constant 0 : index
      %c0_29 = arith.constant 0 : index
      %55 = vector.load %arg9[%c0_28, %c0_29] : memref<1x8xf32, #tpu.memory_space<vmem>>, vector<1x8xf32>
      tpu.vector_store %arg9[%c0_28, %c0_29], %54 {strides = array<i32>} : memref<1x8xf32, #tpu.memory_space<vmem>>, vector<1x8xf32>,
    } else {
    }
    %c0_i32_3 = arith.constant 0 : i32
    %7 = arith.cmpi eq, %arg2, %c0_i32_3 : i32
    %8 = arith.extui %7 : i1 to i32
    %c0_i32_4 = arith.constant 0 : i32
    %9 = arith.cmpi ne, %8, %c0_i32_4 : i32
    scf.if %9 {
      %cst_24 = arith.constant 0.000000e+00 : bf16
      %52 = vector.broadcast %cst_24 : bf16 to vector<18x18x8xbf16>
      %c0_25 = arith.constant 0 : index
      %c0_26 = arith.constant 0 : index
      %c0_27 = arith.constant 0 : index
      %53 = vector.load %arg7[%c0_25, %c0_26, %c0_27] : memref<18x18x8xbf16, #tpu.memory_space<vmem>>, vector<18x18x8xbf16>
      tpu.vector_store %arg7[%c0_25, %c0_26, %c0_27], %52 {strides = array<i32>} : memref<18x18x8xbf16, #tpu.memory_space<vmem>>, vector<18x18x8xbf16>,
      %c0_28 = arith.constant 0 : index
      %c0_29 = arith.constant 0 : index
      %c0_30 = arith.constant 0 : index
      %c0_31 = arith.constant 0 : index
      %54 = vector.load %arg3[%c0_28, %c0_29, %c0_30, %c0_31] : memref<1x16x16x8xbf16, #tpu.memory_space<vmem>>, vector<1x16x16x8xbf16>
      %55 = vector.shape_cast %54 : vector<1x16x16x8xbf16> to vector<16x16x8xbf16>
      %c1 = arith.constant 1 : index
      %c1_32 = arith.constant 1 : index
      %c0_33 = arith.constant 0 : index
      %56 = vector.load %arg7[%c1, %c1_32, %c0_33] : memref<18x18x8xbf16, #tpu.memory_space<vmem>>, vector<16x16x8xbf16>
      tpu.vector_store %arg7[%c1, %c1_32, %c0_33], %55 {strides = array<i32>} : memref<18x18x8xbf16, #tpu.memory_space<vmem>>, vector<16x16x8xbf16>,
    } else {
    }
    %c16_i32 = arith.constant 16 : i32
    %10 = arith.muli %arg2, %c16_i32 : i32
    %11 = tpu.assume_multiple %10, 16 : i32
    %c0_i32_5 = arith.constant 0 : i32
    %12 = arith.addi %11, %c0_i32_5 : i32
    %13 = arith.index_cast %12 : i32 to index
    %c0 = arith.constant 0 : index
    %c0_6 = arith.constant 0 : index
    %14 = vector.load %arg7[%13, %c0, %c0_6] : memref<18x18x8xbf16, #tpu.memory_space<vmem>>, vector<16x18x8xbf16>
    %15 = vector.extract_strided_slice %14 {offsets = [0, 0, 0], sizes = [16, 16, 8], strides = [1, 1, 1]} : vector<16x18x8xbf16> to vector<16x16x8xbf16>
    %16 = vector.extract_strided_slice %14 {offsets = [0, 1, 0], sizes = [16, 16, 8], strides = [1, 1, 1]} : vector<16x18x8xbf16> to vector<16x16x8xbf16>
    %17 = vector.extract_strided_slice %14 {offsets = [0, 2, 0], sizes = [16, 16, 8], strides = [1, 1, 1]} : vector<16x18x8xbf16> to vector<16x16x8xbf16>
    %c1_i32 = arith.constant 1 : i32
    %18 = arith.addi %11, %c1_i32 : i32
    %19 = arith.index_cast %18 : i32 to index
    %c0_7 = arith.constant 0 : index
    %c0_8 = arith.constant 0 : index
    %20 = vector.load %arg7[%19, %c0_7, %c0_8] : memref<18x18x8xbf16, #tpu.memory_space<vmem>>, vector<16x18x8xbf16>
    %21 = vector.extract_strided_slice %20 {offsets = [0, 0, 0], sizes = [16, 16, 8], strides = [1, 1, 1]} : vector<16x18x8xbf16> to vector<16x16x8xbf16>
    %22 = vector.extract_strided_slice %20 {offsets = [0, 1, 0], sizes = [16, 16, 8], strides = [1, 1, 1]} : vector<16x18x8xbf16> to vector<16x16x8xbf16>
    %23 = vector.extract_strided_slice %20 {offsets = [0, 2, 0], sizes = [16, 16, 8], strides = [1, 1, 1]} : vector<16x18x8xbf16> to vector<16x16x8xbf16>
    %c2_i32 = arith.constant 2 : i32
    %24 = arith.addi %11, %c2_i32 : i32
    %25 = arith.index_cast %24 : i32 to index
    %c0_9 = arith.constant 0 : index
    %c0_10 = arith.constant 0 : index
    %26 = vector.load %arg7[%25, %c0_9, %c0_10] : memref<18x18x8xbf16, #tpu.memory_space<vmem>>, vector<16x18x8xbf16>
    %27 = vector.extract_strided_slice %26 {offsets = [0, 0, 0], sizes = [16, 16, 8], strides = [1, 1, 1]} : vector<16x18x8xbf16> to vector<16x16x8xbf16>
    %28 = vector.extract_strided_slice %26 {offsets = [0, 1, 0], sizes = [16, 16, 8], strides = [1, 1, 1]} : vector<16x18x8xbf16> to vector<16x16x8xbf16>
    %29 = vector.extract_strided_slice %26 {offsets = [0, 2, 0], sizes = [16, 16, 8], strides = [1, 1, 1]} : vector<16x18x8xbf16> to vector<16x16x8xbf16>
    %30 = tpu.concatenate %15, %16, %17, %21, %22, %23, %27, %28, %29 in 2 : vector<16x16x8xbf16>, vector<16x16x8xbf16>, vector<16x16x8xbf16>, vector<16x16x8xbf16>, vector<16x16x8xbf16>, vector<16x16x8xbf16>, vector<16x16x8xbf16>, vector<16x16x8xbf16>, vector<16x16x8xbf16> -> vector<16x16x72xbf16>
    %31 = vector.shape_cast %30 : vector<16x16x72xbf16> to vector<256x72xbf16>
    %c0_11 = arith.constant 0 : index
    %c0_12 = arith.constant 0 : index
    %32 = vector.load %arg4[%c0_11, %c0_12] : memref<72x8xbf16, #tpu.memory_space<vmem>>, vector<72x8xbf16>
    %cst = arith.constant dense<0.000000e+00> : vector<256x8xf32>
    %33 = tpu.matmul %31, %32, %cst {dimension_numbers = #tpu.dot_dimension_numbers<[1], [0], [0], [1], [0, 0, 1, 1], [], []>} : vector<256x72xbf16>, vector<72x8xbf16>, vector<256x8xf32> -> vector<256x8xf32>
    %c0_13 = arith.constant 0 : index
    %c0_14 = arith.constant 0 : index
    %34 = vector.load %arg5[%c0_13, %c0_14] : memref<3x8xf32, #tpu.memory_space<vmem>>, vector<1x8xf32>
    %35 = vector.broadcast %34 : vector<1x8xf32> to vector<256x8xf32>
    %36 = arith.addf %33, %35 : vector<256x8xf32>
    %cst_15 = arith.constant 0.000000e+00 : f32
    %37 = vector.broadcast %cst_15 : f32 to vector<256x8xf32>
    %38 = arith.maximumf %36, %37 : vector<256x8xf32>
    %c0_i32_16 = arith.constant 0 : i32
    %39 = arith.cmpi eq, %arg0, %c0_i32_16 : i32
    %40 = arith.extui %39 : i1 to i32
    %c0_i32_17 = arith.constant 0 : i32
    %41 = arith.cmpi ne, %40, %c0_i32_17 : i32
    scf.if %41 {
      %c0_24 = arith.constant 0 : index
      %c0_25 = arith.constant 0 : index
      %52 = vector.load %arg8[%c0_24, %c0_25] : memref<1x8xf32, #tpu.memory_space<vmem>>, vector<1x8xf32>
      %cst_26 = arith.constant dense<0.000000e+00> : vector<8xf32>
      %53 = vector.multi_reduction <add>, %38, %cst_26 [0] : vector<256x8xf32> to vector<8xf32>
      %54 = vector.shape_cast %53 : vector<8xf32> to vector<1x8xf32>
      %55 = arith.addf %52, %54 : vector<1x8xf32>
      %c0_27 = arith.constant 0 : index
      %c0_28 = arith.constant 0 : index
      %56 = vector.load %arg8[%c0_27, %c0_28] : memref<1x8xf32, #tpu.memory_space<vmem>>, vector<1x8xf32>
      tpu.vector_store %arg8[%c0_27, %c0_28], %55 {strides = array<i32>} : memref<1x8xf32, #tpu.memory_space<vmem>>, vector<1x8xf32>,
      %c0_29 = arith.constant 0 : index
      %c0_30 = arith.constant 0 : index
      %57 = vector.load %arg9[%c0_29, %c0_30] : memref<1x8xf32, #tpu.memory_space<vmem>>, vector<1x8xf32>
      %58 = arith.mulf %38, %38 : vector<256x8xf32>
      %cst_31 = arith.constant dense<0.000000e+00> : vector<8xf32>
      %59 = vector.multi_reduction <add>, %58, %cst_31 [0] : vector<256x8xf32> to vector<8xf32>
      %60 = vector.shape_cast %59 : vector<8xf32> to vector<1x8xf32>
      %61 = arith.addf %57, %60 : vector<1x8xf32>
      %c0_32 = arith.constant 0 : index
      %c0_33 = arith.constant 0 : index
      %62 = vector.load %arg9[%c0_32, %c0_33] : memref<1x8xf32, #tpu.memory_space<vmem>>, vector<1x8xf32>
      tpu.vector_store %arg9[%c0_32, %c0_33], %61 {strides = array<i32>} : memref<1x8xf32, #tpu.memory_space<vmem>>, vector<1x8xf32>,
    } else {
    }
    %c1_i32_18 = arith.constant 1 : i32
    %42 = arith.cmpi eq, %arg0, %c1_i32_18 : i32
    %c0_i32_19 = arith.constant 0 : i32
    %43 = arith.cmpi eq, %arg1, %c0_i32_19 : i32
    %44 = arith.andi %42, %43 : i1
    %c0_i32_20 = arith.constant 0 : i32
    %45 = arith.cmpi eq, %arg2, %c0_i32_20 : i32
    %46 = arith.andi %44, %45 : i1
    %47 = arith.extui %46 : i1 to i32
    %c0_i32_21 = arith.constant 0 : i32
    %48 = arith.cmpi ne, %47, %c0_i32_21 : i32
    scf.if %48 {
      %c0_24 = arith.constant 0 : index
      %c0_25 = arith.constant 0 : index
      %52 = vector.load %arg8[%c0_24, %c0_25] : memref<1x8xf32, #tpu.memory_space<vmem>>, vector<1x8xf32>
      %cst_26 = arith.constant 0.001953125 : f32
      %53 = vector.broadcast %cst_26 : f32 to vector<1x8xf32>
      %54 = arith.mulf %52, %53 : vector<1x8xf32>
      %c0_27 = arith.constant 0 : index
      %c0_28 = arith.constant 0 : index
      %55 = vector.load %arg9[%c0_27, %c0_28] : memref<1x8xf32, #tpu.memory_space<vmem>>, vector<1x8xf32>
      %cst_29 = arith.constant 0.001953125 : f32
      %56 = vector.broadcast %cst_29 : f32 to vector<1x8xf32>
      %57 = arith.mulf %55, %56 : vector<1x8xf32>
      %58 = arith.mulf %54, %54 : vector<1x8xf32>
      %59 = arith.subf %57, %58 : vector<1x8xf32>
      %cst_30 = arith.constant 0.000000e+00 : f32
      %60 = vector.broadcast %cst_30 : f32 to vector<1x8xf32>
      %61 = arith.maximumf %59, %60 : vector<1x8xf32>
      %c1 = arith.constant 1 : index
      %c0_31 = arith.constant 0 : index
      %62 = vector.load %arg5[%c1, %c0_31] : memref<3x8xf32, #tpu.memory_space<vmem>>, vector<1x8xf32>
      %cst_32 = arith.constant 9.99999974E-6 : f32
      %63 = vector.broadcast %cst_32 : f32 to vector<1x8xf32>
      %64 = arith.addf %61, %63 : vector<1x8xf32>
      %65 = math.rsqrt %64 : vector<1x8xf32>
      %66 = arith.mulf %62, %65 : vector<1x8xf32>
      %c0_33 = arith.constant 0 : index
      %c0_34 = arith.constant 0 : index
      %67 = vector.load %arg10[%c0_33, %c0_34] : memref<2x8xf32, #tpu.memory_space<vmem>>, vector<1x8xf32>
      tpu.vector_store %arg10[%c0_33, %c0_34], %66 {strides = array<i32>} : memref<2x8xf32, #tpu.memory_space<vmem>>, vector<1x8xf32>,
      %c2 = arith.constant 2 : index
      %c0_35 = arith.constant 0 : index
      %68 = vector.load %arg5[%c2, %c0_35] : memref<3x8xf32, #tpu.memory_space<vmem>>, vector<1x8xf32>
      %69 = arith.mulf %66, %54 : vector<1x8xf32>
      %70 = arith.subf %68, %69 : vector<1x8xf32>
      %c1_36 = arith.constant 1 : index
      %c0_37 = arith.constant 0 : index
      %71 = vector.load %arg10[%c1_36, %c0_37] : memref<2x8xf32, #tpu.memory_space<vmem>>, vector<1x8xf32>
      tpu.vector_store %arg10[%c1_36, %c0_37], %70 {strides = array<i32>} : memref<2x8xf32, #tpu.memory_space<vmem>>, vector<1x8xf32>,
    } else {
    }
    %c1_i32_22 = arith.constant 1 : i32
    %49 = arith.cmpi eq, %arg0, %c1_i32_22 : i32
    %50 = arith.extui %49 : i1 to i32
    %c0_i32_23 = arith.constant 0 : i32
    %51 = arith.cmpi ne, %50, %c0_i32_23 : i32
    scf.if %51 {
      %c0_24 = arith.constant 0 : index
      %c0_25 = arith.constant 0 : index
      %52 = vector.load %arg10[%c0_24, %c0_25] : memref<2x8xf32, #tpu.memory_space<vmem>>, vector<1x8xf32>
      %53 = vector.broadcast %52 : vector<1x8xf32> to vector<256x8xf32>
      %54 = arith.mulf %38, %53 : vector<256x8xf32>
      %c1 = arith.constant 1 : index
      %c0_26 = arith.constant 0 : index
      %55 = vector.load %arg10[%c1, %c0_26] : memref<2x8xf32, #tpu.memory_space<vmem>>, vector<1x8xf32>
      %56 = vector.broadcast %55 : vector<1x8xf32> to vector<256x8xf32>
      %57 = arith.addf %54, %56 : vector<256x8xf32>
      %58 = vector.shape_cast %57 : vector<256x8xf32> to vector<16x16x8xf32>
      %c0_27 = arith.constant 0 : index
      %c0_28 = arith.constant 0 : index
      %c0_29 = arith.constant 0 : index
      %c0_30 = arith.constant 0 : index
      %59 = vector.load %arg6[%c0_27, %c0_28, %c0_29, %c0_30] : memref<1x16x16x8xf32, #tpu.memory_space<vmem>>, vector<1x16x16x8xf32>
      %60 = vector.shape_cast %59 : vector<1x16x16x8xf32> to vector<16x16x8xf32>
      %61 = vector.shape_cast %58 : vector<16x16x8xf32> to vector<1x16x16x8xf32>
      tpu.vector_store %arg6[%c0_27, %c0_28, %c0_29, %c0_30], %61 {strides = array<i32>} : memref<1x16x16x8xf32, #tpu.memory_space<vmem>>, vector<1x16x16x8xf32>,
    } else {
    }
    return
  }
  func.func @transform_0(%arg0: i32, %arg1: i32, %arg2: i32) -> (i32, i32, i32, i32) {
    %c0_i32 = arith.constant 0 : i32
    %c0_i32_0 = arith.constant 0 : i32
    %c0_i32_1 = arith.constant 0 : i32
    %c0_i32_2 = arith.constant 0 : i32
    return %arg1, %c0_i32, %c0_i32_0, %c0_i32_1 : i32, i32, i32, i32
  }
  func.func @transform_1(%arg0: i32, %arg1: i32, %arg2: i32) -> (i32, i32) {
    %c0_i32 = arith.constant 0 : i32
    %c0_i32_0 = arith.constant 0 : i32
    %c0_i32_1 = arith.constant 0 : i32
    return %c0_i32, %c0_i32_0 : i32, i32
  }
  func.func @transform_2(%arg0: i32, %arg1: i32, %arg2: i32) -> (i32, i32) {
    %c0_i32 = arith.constant 0 : i32
    %c0_i32_0 = arith.constant 0 : i32
    %c0_i32_1 = arith.constant 0 : i32
    return %c0_i32, %c0_i32_0 : i32, i32
  }
  func.func @transform_3(%arg0: i32, %arg1: i32, %arg2: i32) -> (i32, i32, i32, i32) {
    %0 = arith.muli %arg0, %arg1 : i32
    %1 = arith.muli %arg0, %arg2 : i32
    %c0_i32 = arith.constant 0 : i32
    %c0_i32_0 = arith.constant 0 : i32
    %c0_i32_1 = arith.constant 0 : i32
    return %0, %1, %c0_i32, %c0_i32_0 : i32, i32, i32, i32
  }
}

</mosaic_0001>

<llo_original>
// kernel: convolution_block.3
$region0: #{convolution_block.3}
  #allocation0 [shape = 'u32[]', space=smem, size = 0x4, offset = 0x4, fixed_abs, tag = 'smem constant byte address 0x4 - core index']
  #allocation1 [shape = 'u32[144,128]{1,0:T(1,128)}', space=vmem, size = 0x12000, scoped, tag = 'internal scratch']
  #allocation2 [shape = 'bf16[18,18,8]{2,1,0:T(8,128)(2,1)}', space=vmem, size = 0x1b000, scoped, tag = 'scratch operand']
  #allocation3 [shape = 'f32[1,8]{1,0:T(1,128)}', space=vmem, size = 0x200, scoped, tag = 'scratch operand']
  #allocation4 [shape = 'f32[1,8]{1,0:T(1,128)}', space=vmem, size = 0x200, scoped, tag = 'scratch operand']
  #allocation5 [shape = 'f32[2,8]{1,0:T(2,128)}', space=vmem, size = 0x400, scoped, tag = 'scratch operand']
  %s0 = inlined_call_operand.vmem [shape: bf16[2,16,16,8], index: 0, kind: input, shape index: {}]
  %s1 = inlined_call_operand.vmem [shape: bf16[72,8], index: 1, kind: input, shape index: {}]
  %s2 = inlined_call_operand.vmem [shape: f32[3,8], index: 2, kind: input, shape index: {}]
  %s3 = inlined_call_operand.vmem [shape: f32[2,16,16,8], index: 3, kind: output, shape index: {}]
  %s4 = sld [smem:[#allocation0]]
  $region65: #{convolution_block.3} parent=0
    _
  %s6 = ssub.s32 1, %s4
  %s7 = scalar_select 0, %s6, %s4
  loop: start=0, step=1, limit=6
  $region2: #{convolution_block.3} parent=0 // loop_pre_header
    _
  $region3: #{convolution_block.3} parent=0 // loop_header
    %s9 = sphi 0, %s13
    %p10 = scmp.ge.s32.totalorder %s9, 6
    %s16 = sphi 0, %s35
    %s17 = sphi 0, %s31
    %s18 = sphi 0, %s27
    %s19 = sphi 0, %s16
    %s20 = sphi 0, %s17
    %s21 = sphi 0, %s18
    %s22 = sphi 0, %s19
    %s23 = sphi 0, %s20
    %s24 = sphi 0, %s21
    %s38 = sphi 0, %s40
    %s41 = sphi 0, %s38
    %s42 = sphi 0, %s41
    %s58 = sphi 0, %s42
    %s62 = sphi 0, %s62
    %s64 = sphi 0, %s62
    %s65 = sphi 0, %s64
    %s79 = sphi 0, %s65
    %s83 = sphi 0, %s83
    %s85 = sphi 0, %s83
    %s86 = sphi 0, %s85
    %s100 = sphi 0, %s86
    %s112 = sphi 0, %s114
    %s115 = sphi 0, %s112
    %s116 = sphi 0, %s115
    %s132 = sphi 0, %s116
  $region4: #{convolution_block.3} parent=0 // loop_header_branch
    %12 = sbr.rel (%p10) target = $region8
  $region5: #{convolution_block.3} parent=0 // loop_body
    %s14 = ssub.s32 %s9, 1
    %s15 = ssub.s32 %s9, 2
    %s25 = sadd.s32 1, %s18
    %p26 = scmp.ge.s32.totalorder %s25, 1
    %s27 = scalar_select %p26, 0, %s25
    %s28 = sadd.s32 1, %s17
    %s29 = scalar_select %p26, %s28, %s17
    %p30 = scmp.ge.s32.totalorder %s29, 2
    %s31 = scalar_select %p30, 0, %s29
    %s32 = sadd.s32 1, %s16
    %s33 = scalar_select %p30, %s32, %s16
    %p34 = scmp.ge.s32.totalorder %s33, 2
    %s35 = scalar_select %p34, 0, %s33
    %s36 = ssub.s32 %s17, %s31
    %p37 = scmp.eq.s32.totalorder %s36, 0
    %s39 = sadd.s32 %s38, 1
    %s40 = scalar_select %p37, %s38, %s39
    %p43 = pneg %p37
    %p44 = scmp.eq.s32.totalorder %s9, 3
    %p45 = por %p43, %p44
    %p46 = scmp.ne.s32.totalorder %s38, %s41
    %p47 = scmp.eq.s32.totalorder %s9, 0
    %p48 = por %p46, %p47
    %p49 = scmp.ne.s32.totalorder %s38, %s41
    %p50 = scmp.eq.s32.totalorder %s14, 3
    %p51 = por %p49, %p50
    %p52 = scmp.ne.s32.totalorder %s41, %s42
    %p53 = scmp.eq.s32.totalorder %s14, 0
    %p54 = por %p52, %p53
    %p55 = scmp.ne.s32.totalorder %s41, %s42
    %p56 = scmp.eq.s32.totalorder %s15, 3
    %p57 = por %p55, %p56
    %p59 = scmp.ne.s32.totalorder %s42, %s58
    %p60 = scmp.eq.s32.totalorder %s15, 0
    %p61 = por %p59, %p60
    %s63 = sadd.s32 %s62, 1
    %p66 = scmp.eq.s32.totalorder %s9, 3
    %p67 = scmp.ne.s32.totalorder %s62, %s64
    %p68 = scmp.eq.s32.totalorder %s9, 0
    %p69 = por %p67, %p68
    %p70 = scmp.ne.s32.totalorder %s62, %s64
    %p71 = scmp.eq.s32.totalorder %s14, 3
    %p72 = por %p70, %p71
    %p73 = scmp.ne.s32.totalorder %s64, %s65
    %p74 = scmp.eq.s32.totalorder %s14, 0
    %p75 = por %p73, %p74
    %p76 = scmp.ne.s32.totalorder %s64, %s65
    %p77 = scmp.eq.s32.totalorder %s15, 3
    %p78 = por %p76, %p77
    %p80 = scmp.ne.s32.totalorder %s65, %s79
    %p81 = scmp.eq.s32.totalorder %s15, 0
    %p82 = por %p80, %p81
    %s84 = sadd.s32 %s83, 1
    %p87 = scmp.eq.s32.totalorder %s9, 3
    %p88 = scmp.ne.s32.totalorder %s83, %s85
    %p89 = scmp.eq.s32.totalorder %s9, 0
    %p90 = por %p88, %p89
    %p91 = scmp.ne.s32.totalorder %s83, %s85
    %p92 = scmp.eq.s32.totalorder %s14, 3
    %p93 = por %p91, %p92
    %p94 = scmp.ne.s32.totalorder %s85, %s86
    %p95 = scmp.eq.s32.totalorder %s14, 0
    %p96 = por %p94, %p95
    %p97 = scmp.ne.s32.totalorder %s85, %s86
    %p98 = scmp.eq.s32.totalorder %s15, 3
    %p99 = por %p97, %p98
    %p101 = scmp.ne.s32.totalorder %s86, %s100
    %p102 = scmp.eq.s32.totalorder %s15, 0
    %p103 = por %p101, %p102
    %s104 = smul.u32 %s16, %s17
    %s105 = smul.u32 %s16, %s18
    %s106 = smul.u32 %s35, %s31
    %s107 = smul.u32 %s35, %s27
    %s108 = ssub.s32 %s104, %s106
    %s109 = ssub.s32 %s105, %s107
    %s110 = sor.u32 %s108, %s109
    %p111 = scmp.eq.s32.totalorder %s110, 0
    %s113 = sadd.s32 %s112, 1
    %s114 = scalar_select %p111, %s112, %s113
    %p117 = pneg %p111
    %p118 = scmp.eq.s32.totalorder %s9, 3
    %p119 = por %p117, %p118
    %p120 = scmp.ne.s32.totalorder %s112, %s115
    %p121 = scmp.eq.s32.totalorder %s9, 0
    %p122 = por %p120, %p121
    %p123 = scmp.ne.s32.totalorder %s112, %s115
    %p124 = scmp.eq.s32.totalorder %s14, 3
    %p125 = por %p123, %p124
    %p126 = scmp.ne.s32.totalorder %s115, %s116
    %p127 = scmp.eq.s32.totalorder %s14, 0
    %p128 = por %p126, %p127
    %p129 = scmp.ne.s32.totalorder %s115, %s116
    %p130 = scmp.eq.s32.totalorder %s15, 3
    %p131 = por %p129, %p130
    %p133 = scmp.ne.s32.totalorder %s116, %s132
    %p134 = scmp.eq.s32.totalorder %s15, 0
    %p135 = por %p133, %p134
    %p136 = scmp.le.s32.totalorder 1, %s9
    %p137 = scmp.lt.s32.totalorder %s9, 5
    %p138 = pnand %p136, %p137
    %p139 = pneg %p138
    // Predicated region
    $region9: #{convolution_block.3} parent=5 // pred_check
      _
    $region10: #{convolution_block.3} parent=5 // pred_check_branch
      %141 = sbr.rel (%p138) target = $region12
    $region11: #{convolution_block.3} parent=5 // pred_region
      %s142 = ssub.s32 %s9, 1
      // Predicated region
      $region13: #{convolution_block.3} parent=11 // pred_check
        %p143 = pneg %p75
      $region14: #{convolution_block.3} parent=11 // pred_check_branch
        %145 = sbr.rel (%p143) target = $region16
      $region15: #{convolution_block.3} parent=11 // pred_region
        _
      $region16: #{convolution_block.3} parent=11 // pred_fallthru
        _
      // Predicated region
      $region17: #{convolution_block.3} parent=11 // pred_check
        %p146 = pneg %p96
      $region18: #{convolution_block.3} parent=11 // pred_check_branch
        %148 = sbr.rel (%p146) target = $region20
      $region19: #{convolution_block.3} parent=11 // pred_region
        _
      $region20: #{convolution_block.3} parent=11 // pred_fallthru
        _
    $region12: #{convolution_block.3} parent=5 // pred_fallthru
      _
    %p149 = scmp.lt.s32.totalorder %s9, 4
    // Predicated region
    $region21: #{convolution_block.3} parent=5 // pred_check
      %p150 = pneg %p149
    $region22: #{convolution_block.3} parent=5 // pred_check_branch
      %152 = sbr.rel (%p150) target = $region24
    $region23: #{convolution_block.3} parent=5 // pred_region
      // Predicated region
      $region25: #{convolution_block.3} parent=23 // pred_check
        %p153 = pneg %p48
      $region26: #{convolution_block.3} parent=23 // pred_check_branch
        %155 = sbr.rel (%p153) target = $region28
      $region27: #{convolution_block.3} parent=23 // pred_region
        %p156 = scmp.lt.s32.totalorder %s17, 1
        %s157 = scalar_select %p156, %s17, 1
        %s158 = smul.addr %s157, 32
        %s159 = smul.addr %s158, 4
        %s160 = scalar_lea.vmem %s0, %s159
      $region28: #{convolution_block.3} parent=23 // pred_fallthru
        _
    $region24: #{convolution_block.3} parent=5 // pred_fallthru
      _
    %p161 = scmp.le.s32.totalorder 1, %s9
    %p162 = scmp.lt.s32.totalorder %s9, 5
    %p163 = pnand %p161, %p162
    %p164 = pneg %p163
    // Predicated region
    $region29: #{convolution_block.3} parent=5 // pred_check
      _
    $region30: #{convolution_block.3} parent=5 // pred_check_branch
      %166 = sbr.rel (%p163) target = $region32
    $region31: #{convolution_block.3} parent=5 // pred_region
      %s167 = ssub.s32 %s9, 1
      %p168 = scmp.lt.s32.totalorder %s20, 1
      %s169 = scalar_select %p168, %s20, 1
      %s170 = smul.addr %s169, 32
      %s171 = smul.addr %s170, 4
      %s172 = scalar_lea.vmem %s0, %s171
      %p173 = pneg %p54
      %p174 = pneg %p51
      %p175 = pneg %p75
      %p176 = pneg %p72
      %p177 = pneg %p96
      %p178 = pneg %p93
      %p179 = pneg %p128
      %p180 = pneg %p125
      %s181 = smul.u32 %s19, %s20
      %s182 = smul.u32 %s19, %s21
      %s183 = smul.u32 16, %s182
      %p184 = scmp.lt.s32.totalorder %s181, 1
      %s185 = scalar_select %p184, %s181, 1
      %p186 = scmp.lt.s32.totalorder %s183, 15
      %s187 = scalar_select %p186, %s183, 15
      %s188 = smul.addr %s187, 2
      %s189 = smul.addr %s185, 32
      %s190 = sadd.s32 %s188, %s189
      %s191 = smul.addr %s190, 8
      %s192 = scalar_lea.vmem %s3, %s191
      %p193 = scmp.lt.s32.totalorder %s20, 1
      %s194 = scalar_select %p193, %s20, 1
      %s195 = smul.addr %s194, 32
      %s196 = smul.addr %s195, 4
      %s197 = scalar_lea.vmem %s0, %s196
      %s198 = smul.u32 %s19, %s20
      %s199 = smul.u32 %s19, %s21
      %s200 = smul.u32 16, %s199
      %p201 = scmp.lt.s32.totalorder %s198, 1
      %s202 = scalar_select %p201, %s198, 1
      %p203 = scmp.lt.s32.totalorder %s200, 15
      %s204 = scalar_select %p203, %s200, 15
      %s205 = smul.addr %s204, 2
      %s206 = smul.addr %s202, 32
      %s207 = sadd.s32 %s205, %s206
      %s208 = smul.addr %s207, 8
      %s209 = scalar_lea.vmem %s3, %s208
      %s210 = smul.u32 %s19, %s20
      %s211 = smul.u32 %s19, %s21
      %s212 = smul.u32 16, %s211
      %p214 = scmp.eq.s32.totalorder %s19, 0
      %p215 = scmp.eq.s32.totalorder %s20, 0
      %p216 = pnand %p214, %p215
      %p217 = pneg %p216
      %p218 = scmp.eq.s32.totalorder %s21, 0
      %p219 = pnand %p217, %p218
      %p220 = pneg %p219
      // Predicated region
      $region33: #{convolution_block.3} parent=31 // pred_check
        _
      $region34: #{convolution_block.3} parent=31 // pred_check_branch
        %222 = sbr.rel (%p219) target = $region36
      $region35: #{convolution_block.3} parent=31 // pred_region
        %vm223 = vcmask 57344
        %224 = vst.msk [vmem:[#allocation3] sm:$0x1] %vm223, 0.0
        %225 = vst.msk [vmem:[#allocation4] sm:$0x1] %vm223, 0.0
      $region36: #{convolution_block.3} parent=31 // pred_fallthru
        _
      // Predicated region
      $region37: #{convolution_block.3} parent=31 // pred_check
        %p226 = pneg %p218
      $region38: #{convolution_block.3} parent=31 // pred_check_branch
        %228 = sbr.rel (%p226) target = $region40
      $region39: #{convolution_block.3} parent=31 // pred_region
        %vm229 = vcmask 60416
        %230 = vst.msk [vmem:[#allocation2] sm:$0xf] %vm229, 0
        %231 = vst.msk [vmem:[#allocation2 + $0x4] sm:$0xf] %vm229, 0
        %vm232 = vcmask 57344
        %233 = vst.msk [vmem:[#allocation2 + $0x8] sm:$0x1] %vm232, 0
        %234 = vst.msk [vmem:[#allocation2 + $0xc] sm:$0xf] %vm229, 0
        %235 = vst.msk [vmem:[#allocation2 + $0x10] sm:$0xf] %vm229, 0
        %236 = vst.msk [vmem:[#allocation2 + $0x14] sm:$0x1] %vm232, 0
        %237 = vst.msk [vmem:[#allocation2 + $0x18] sm:$0xf] %vm229, 0
        %238 = vst.msk [vmem:[#allocation2 + $0x1c] sm:$0xf] %vm229, 0
        %239 = vst.msk [vmem:[#allocation2 + $0x20] sm:$0x1] %vm232, 0
        %240 = vst.msk [vmem:[#allocation2 + $0x24] sm:$0xf] %vm229, 0
        %241 = vst.msk [vmem:[#allocation2 + $0x28] sm:$0xf] %vm229, 0
        %242 = vst.msk [vmem:[#allocation2 + $0x2c] sm:$0x1] %vm232, 0
        %243 = vst.msk [vmem:[#allocation2 + $0x30] sm:$0xf] %vm229, 0
        %244 = vst.msk [vmem:[#allocation2 + $0x34] sm:$0xf] %vm229, 0
        %245 = vst.msk [vmem:[#allocation2 + $0x38] sm:$0x1] %vm232, 0
        %246 = vst.msk [vmem:[#allocation2 + $0x3c] sm:$0xf] %vm229, 0
        %247 = vst.msk [vmem:[#allocation2 + $0x40] sm:$0xf] %vm229, 0
        %248 = vst.msk [vmem:[#allocation2 + $0x44] sm:$0x1] %vm232, 0
        %249 = vst.msk [vmem:[#allocation2 + $0x48] sm:$0xf] %vm229, 0
        %250 = vst.msk [vmem:[#allocation2 + $0x4c] sm:$0xf] %vm229, 0
        %251 = vst.msk [vmem:[#allocation2 + $0x50] sm:$0x1] %vm232, 0
        %252 = vst.msk [vmem:[#allocation2 + $0x54] sm:$0xf] %vm229, 0
        %253 = vst.msk [vmem:[#allocation2 + $0x58] sm:$0xf] %vm229, 0
        %254 = vst.msk [vmem:[#allocation2 + $0x5c] sm:$0x1] %vm232, 0
        %255 = vst.msk [vmem:[#allocation2 + $0x60] sm:$0xf] %vm229, 0
        %256 = vst.msk [vmem:[#allocation2 + $0x64] sm:$0xf] %vm229, 0
        %257 = vst.msk [vmem:[#allocation2 + $0x68] sm:$0x1] %vm232, 0
        %258 = vst.msk [vmem:[#allocation2 + $0x6c] sm:$0xf] %vm229, 0
        %259 = vst.msk [vmem:[#allocation2 + $0x70] sm:$0xf] %vm229, 0
        %260 = vst.msk [vmem:[#allocation2 + $0x74] sm:$0x1] %vm232, 0
        %261 = vst.msk [vmem:[#allocation2 + $0x78] sm:$0xf] %vm229, 0
        %262 = vst.msk [vmem:[#allocation2 + $0x7c] sm:$0xf] %vm229, 0
        %263 = vst.msk [vmem:[#allocation2 + $0x80] sm:$0x1] %vm232, 0
        %264 = vst.msk [vmem:[#allocation2 + $0x84] sm:$0xf] %vm229, 0
        %265 = vst.msk [vmem:[#allocation2 + $0x88] sm:$0xf] %vm229, 0
        %266 = vst.msk [vmem:[#allocation2 + $0x8c] sm:$0x1] %vm232, 0
        %267 = vst.msk [vmem:[#allocation2 + $0x90] sm:$0xf] %vm229, 0
        %268 = vst.msk [vmem:[#allocation2 + $0x94] sm:$0xf] %vm229, 0
        %269 = vst.msk [vmem:[#allocation2 + $0x98] sm:$0x1] %vm232, 0
        %270 = vst.msk [vmem:[#allocation2 + $0x9c] sm:$0xf] %vm229, 0
        %271 = vst.msk [vmem:[#allocation2 + $0xa0] sm:$0xf] %vm229, 0
        %272 = vst.msk [vmem:[#allocation2 + $0xa4] sm:$0x1] %vm232, 0
        %273 = vst.msk [vmem:[#allocation2 + $0xa8] sm:$0xf] %vm229, 0
        %274 = vst.msk [vmem:[#allocation2 + $0xac] sm:$0xf] %vm229, 0
        %275 = vst.msk [vmem:[#allocation2 + $0xb0] sm:$0x1] %vm232, 0
        %276 = vst.msk [vmem:[#allocation2 + $0xb4] sm:$0xf] %vm229, 0
        %277 = vst.msk [vmem:[#allocation2 + $0xb8] sm:$0xf] %vm229, 0
        %278 = vst.msk [vmem:[#allocation2 + $0xbc] sm:$0x1] %vm232, 0
        %279 = vst.msk [vmem:[#allocation2 + $0xc0] sm:$0xf] %vm229, 0
        %280 = vst.msk [vmem:[#allocation2 + $0xc4] sm:$0xf] %vm229, 0
        %281 = vst.msk [vmem:[#allocation2 + $0xc8] sm:$0x1] %vm232, 0
        %282 = vst.msk [vmem:[#allocation2 + $0xcc] sm:$0xf] %vm229, 0
        %283 = vst.msk [vmem:[#allocation2 + $0xd0] sm:$0xf] %vm229, 0
        %284 = vst.msk [vmem:[#allocation2 + $0xd4] sm:$0x1] %vm232, 0
        %v285 = vld [vmem:[%s197] sm:$0xf]
        %v286 = vld [vmem:[%s197 + $0x4] sm:$0xf]
        %v287 = vld [vmem:[%s197 + $0x8] sm:$0xf]
        %v288 = vld [vmem:[%s197 + $0xc] sm:$0xf]
        %v289 = vld [vmem:[%s197 + $0x10] sm:$0xf]
        %v290 = vld [vmem:[%s197 + $0x14] sm:$0xf]
        %v291 = vld [vmem:[%s197 + $0x18] sm:$0xf]
        %v292 = vld [vmem:[%s197 + $0x1c] sm:$0xf]
        %v293 = vld [vmem:[%s197 + $0x20] sm:$0xf]
        %v294 = vld [vmem:[%s197 + $0x24] sm:$0xf]
        %v295 = vld [vmem:[%s197 + $0x28] sm:$0xf]
        %v296 = vld [vmem:[%s197 + $0x2c] sm:$0xf]
        %v297 = vld [vmem:[%s197 + $0x30] sm:$0xf]
        %v298 = vld [vmem:[%s197 + $0x34] sm:$0xf]
        %v299 = vld [vmem:[%s197 + $0x38] sm:$0xf]
        %v300 = vld [vmem:[%s197 + $0x3c] sm:$0xf]
        %v301 = vld [vmem:[%s197 + $0x40] sm:$0xf]
        %v302 = vld [vmem:[%s197 + $0x44] sm:$0xf]
        %v303 = vld [vmem:[%s197 + $0x48] sm:$0xf]
        %v304 = vld [vmem:[%s197 + $0x4c] sm:$0xf]
        %v305 = vld [vmem:[%s197 + $0x50] sm:$0xf]
        %v306 = vld [vmem:[%s197 + $0x54] sm:$0xf]
        %v307 = vld [vmem:[%s197 + $0x58] sm:$0xf]
        %v308 = vld [vmem:[%s197 + $0x5c] sm:$0xf]
        %v309 = vld [vmem:[%s197 + $0x60] sm:$0xf]
        %v310 = vld [vmem:[%s197 + $0x64] sm:$0xf]
        %v311 = vld [vmem:[%s197 + $0x68] sm:$0xf]
        %v312 = vld [vmem:[%s197 + $0x6c] sm:$0xf]
        %v313 = vld [vmem:[%s197 + $0x70] sm:$0xf]
        %v314 = vld [vmem:[%s197 + $0x74] sm:$0xf]
        %v315 = vld [vmem:[%s197 + $0x78] sm:$0xf]
        %v316 = vld [vmem:[%s197 + $0x7c] sm:$0xf]
        %vm317 = vsmask.f32 256
        %vm318 = vsmask.f32 4368
        %vm319 = vmor %vm317, %vm318
        %v321 = vshrl.u32 %v285, 16
        %v323 = vrot.slane %v321, 7
        %v324 = vshll.u32 %v285, 16
        %v326 = vor.u32 %v323, %v324
        %v327 = vrot.slane %v323, 4
        %v329 = vshrl.u32 %v286, 16
        %v331 = vrot.slane %v329, 7
        %v332 = vshll.u32 %v286, 16
        %v334 = vor.u32 %v331, %v332
        %v335 = vsel %vm319, %v327, %v334
        %v336 = vrot.slane %v331, 4
        %v338 = vshrl.u32 %v287, 16
        %v340 = vrot.slane %v338, 7
        %v341 = vshll.u32 %v287, 16
        %v343 = vor.u32 %v340, %v341
        %v344 = vrot.slane %v340, 4
        %v346 = vshrl.u32 %v288, 16
        %v348 = vrot.slane %v346, 7
        %v349 = vshll.u32 %v288, 16
        %v351 = vor.u32 %v348, %v349
        %v352 = vsel %vm319, %v344, %v351
        %v353 = vrot.slane %v348, 4
        %v355 = vshrl.u32 %v289, 16
        %v357 = vrot.slane %v355, 7
        %v358 = vshll.u32 %v289, 16
        %v360 = vor.u32 %v357, %v358
        %v361 = vrot.slane %v357, 4
        %v363 = vshrl.u32 %v290, 16
        %v365 = vrot.slane %v363, 7
        %v366 = vshll.u32 %v290, 16
        %v368 = vor.u32 %v365, %v366
        %v369 = vsel %vm319, %v361, %v368
        %v370 = vrot.slane %v365, 4
        %v372 = vshrl.u32 %v291, 16
        %v374 = vrot.slane %v372, 7
        %v375 = vshll.u32 %v291, 16
        %v377 = vor.u32 %v374, %v375
        %v378 = vrot.slane %v374, 4
        %v380 = vshrl.u32 %v292, 16
        %v382 = vrot.slane %v380, 7
        %v383 = vshll.u32 %v292, 16
        %v385 = vor.u32 %v382, %v383
        %v386 = vsel %vm319, %v378, %v385
        %v387 = vrot.slane %v382, 4
        %v389 = vshrl.u32 %v293, 16
        %v391 = vrot.slane %v389, 7
        %v392 = vshll.u32 %v293, 16
        %v394 = vor.u32 %v391, %v392
        %v395 = vrot.slane %v391, 4
        %v397 = vshrl.u32 %v294, 16
        %v399 = vrot.slane %v397, 7
        %v400 = vshll.u32 %v294, 16
        %v402 = vor.u32 %v399, %v400
        %v403 = vsel %vm319, %v395, %v402
        %v404 = vrot.slane %v399, 4
        %v406 = vshrl.u32 %v295, 16
        %v408 = vrot.slane %v406, 7
        %v409 = vshll.u32 %v295, 16
        %v411 = vor.u32 %v408, %v409
        %v412 = vrot.slane %v408, 4
        %v414 = vshrl.u32 %v296, 16
        %v416 = vrot.slane %v414, 7
        %v417 = vshll.u32 %v296, 16
        %v419 = vor.u32 %v416, %v417
        %v420 = vsel %vm319, %v412, %v419
        %v421 = vrot.slane %v416, 4
        %v423 = vshrl.u32 %v297, 16
        %v425 = vrot.slane %v423, 7
        %v426 = vshll.u32 %v297, 16
        %v428 = vor.u32 %v425, %v426
        %v429 = vrot.slane %v425, 4
        %v431 = vshrl.u32 %v298, 16
        %v433 = vrot.slane %v431, 7
        %v434 = vshll.u32 %v298, 16
        %v436 = vor.u32 %v433, %v434
        %v437 = vsel %vm319, %v429, %v436
        %v438 = vrot.slane %v433, 4
        %v440 = vshrl.u32 %v299, 16
        %v442 = vrot.slane %v440, 7
        %v443 = vshll.u32 %v299, 16
        %v445 = vor.u32 %v442, %v443
        %v446 = vrot.slane %v442, 4
        %v448 = vshrl.u32 %v300, 16
        %v450 = vrot.slane %v448, 7
        %v451 = vshll.u32 %v300, 16
        %v453 = vor.u32 %v450, %v451
        %v454 = vsel %vm319, %v446, %v453
        %v455 = vrot.slane %v450, 4
        %v457 = vshrl.u32 %v301, 16
        %v459 = vrot.slane %v457, 7
        %v460 = vshll.u32 %v301, 16
        %v462 = vor.u32 %v459, %v460
        %v463 = vrot.slane %v459, 4
        %v465 = vshrl.u32 %v302, 16
        %v467 = vrot.slane %v465, 7
        %v468 = vshll.u32 %v302, 16
        %v470 = vor.u32 %v467, %v468
        %v471 = vsel %vm319, %v463, %v470
        %v472 = vrot.slane %v467, 4
        %v474 = vshrl.u32 %v303, 16
        %v476 = vrot.slane %v474, 7
        %v477 = vshll.u32 %v303, 16
        %v479 = vor.u32 %v476, %v477
        %v480 = vrot.slane %v476, 4
        %v482 = vshrl.u32 %v304, 16
        %v484 = vrot.slane %v482, 7
        %v485 = vshll.u32 %v304, 16
        %v487 = vor.u32 %v484, %v485
        %v488 = vsel %vm319, %v480, %v487
        %v489 = vrot.slane %v484, 4
        %v491 = vshrl.u32 %v305, 16
        %v493 = vrot.slane %v491, 7
        %v494 = vshll.u32 %v305, 16
        %v496 = vor.u32 %v493, %v494
        %v497 = vrot.slane %v493, 4
        %v499 = vshrl.u32 %v306, 16
        %v501 = vrot.slane %v499, 7
        %v502 = vshll.u32 %v306, 16
        %v504 = vor.u32 %v501, %v502
        %v505 = vsel %vm319, %v497, %v504
        %v506 = vrot.slane %v501, 4
        %v508 = vshrl.u32 %v307, 16
        %v510 = vrot.slane %v508, 7
        %v511 = vshll.u32 %v307, 16
        %v513 = vor.u32 %v510, %v511
        %v514 = vrot.slane %v510, 4
        %v516 = vshrl.u32 %v308, 16
        %v518 = vrot.slane %v516, 7
        %v519 = vshll.u32 %v308, 16
        %v521 = vor.u32 %v518, %v519
        %v522 = vsel %vm319, %v514, %v521
        %v523 = vrot.slane %v518, 4
        %v525 = vshrl.u32 %v309, 16
        %v527 = vrot.slane %v525, 7
        %v528 = vshll.u32 %v309, 16
        %v530 = vor.u32 %v527, %v528
        %v531 = vrot.slane %v527, 4
        %v533 = vshrl.u32 %v310, 16
        %v535 = vrot.slane %v533, 7
        %v536 = vshll.u32 %v310, 16
        %v538 = vor.u32 %v535, %v536
        %v539 = vsel %vm319, %v531, %v538
        %v540 = vrot.slane %v535, 4
        %v542 = vshrl.u32 %v311, 16
        %v544 = vrot.slane %v542, 7
        %v545 = vshll.u32 %v311, 16
        %v547 = vor.u32 %v544, %v545
        %v548 = vrot.slane %v544, 4
        %v550 = vshrl.u32 %v312, 16
        %v552 = vrot.slane %v550, 7
        %v553 = vshll.u32 %v312, 16
        %v555 = vor.u32 %v552, %v553
        %v556 = vsel %vm319, %v548, %v555
        %v557 = vrot.slane %v552, 4
        %v559 = vshrl.u32 %v313, 16
        %v561 = vrot.slane %v559, 7
        %v562 = vshll.u32 %v313, 16
        %v564 = vor.u32 %v561, %v562
        %v565 = vrot.slane %v561, 4
        %v567 = vshrl.u32 %v314, 16
        %v569 = vrot.slane %v567, 7
        %v570 = vshll.u32 %v314, 16
        %v572 = vor.u32 %v569, %v570
        %v573 = vsel %vm319, %v565, %v572
        %v574 = vrot.slane %v569, 4
        %v576 = vshrl.u32 %v315, 16
        %v578 = vrot.slane %v576, 7
        %v579 = vshll.u32 %v315, 16
        %v581 = vor.u32 %v578, %v579
        %v582 = vrot.slane %v578, 4
        %v584 = vshrl.u32 %v316, 16
        %v586 = vrot.slane %v584, 7
        %v587 = vshll.u32 %v316, 16
        %v589 = vor.u32 %v586, %v587
        %v590 = vsel %vm319, %v582, %v589
        %v591 = vrot.slane %v586, 4
        %s640 = scalar_lea.vmem [#allocation2], 12
        %vm641 = vcmask 60416
        %vm642 = vsmask.f32 7938
        %vm643 = vmand %vm641, %vm642
        %v644 = vld [vmem:[%s640] sm:$0xf]
        %v645 = vsel %vm643, %v326, %v644
        %646 = vst [vmem:[%s640] sm:$0xf] %v645
        %647 = vst.msk [vmem:[%s640 + $0x4] sm:$0xf] %vm229, %v335
        %vm648 = vcmask 57344
        %vm649 = vmand %vm648, %vm317
        %v650 = vld [vmem:[%s640 + $0x8] sm:$0x1]
        %v651 = vsel %vm649, %v336, %v650
        %652 = vst [vmem:[%s640 + $0x8] sm:$0x1] %v651
        %v653 = vld [vmem:[%s640 + $0xc] sm:$0xf]
        %v654 = vsel %vm643, %v343, %v653
        %655 = vst [vmem:[%s640 + $0xc] sm:$0xf] %v654
        %656 = vst.msk [vmem:[%s640 + $0x10] sm:$0xf] %vm229, %v352
        %v657 = vld [vmem:[%s640 + $0x14] sm:$0x1]
        %v658 = vsel %vm649, %v353, %v657
        %659 = vst [vmem:[%s640 + $0x14] sm:$0x1] %v658
        %v660 = vld [vmem:[%s640 + $0x18] sm:$0xf]
        %v661 = vsel %vm643, %v360, %v660
        %662 = vst [vmem:[%s640 + $0x18] sm:$0xf] %v661
        %663 = vst.msk [vmem:[%s640 + $0x1c] sm:$0xf] %vm229, %v369
        %v664 = vld [vmem:[%s640 + $0x20] sm:$0x1]
        %v665 = vsel %vm649, %v370, %v664
        %666 = vst [vmem:[%s640 + $0x20] sm:$0x1] %v665
        %v667 = vld [vmem:[%s640 + $0x24] sm:$0xf]
        %v668 = vsel %vm643, %v377, %v667
        %669 = vst [vmem:[%s640 + $0x24] sm:$0xf] %v668
        %670 = vst.msk [vmem:[%s640 + $0x28] sm:$0xf] %vm229, %v386
        %v671 = vld [vmem:[%s640 + $0x2c] sm:$0x1]
        %v672 = vsel %vm649, %v387, %v671
        %673 = vst [vmem:[%s640 + $0x2c] sm:$0x1] %v672
        %v674 = vld [vmem:[%s640 + $0x30] sm:$0xf]
        %v675 = vsel %vm643, %v394, %v674
        %676 = vst [vmem:[%s640 + $0x30] sm:$0xf] %v675
        %677 = vst.msk [vmem:[%s640 + $0x34] sm:$0xf] %vm229, %v403
        %v678 = vld [vmem:[%s640 + $0x38] sm:$0x1]
        %v679 = vsel %vm649, %v404, %v678
        %680 = vst [vmem:[%s640 + $0x38] sm:$0x1] %v679
        %v681 = vld [vmem:[%s640 + $0x3c] sm:$0xf]
        %v682 = vsel %vm643, %v411, %v681
        %683 = vst [vmem:[%s640 + $0x3c] sm:$0xf] %v682
        %684 = vst.msk [vmem:[%s640 + $0x40] sm:$0xf] %vm229, %v420
        %v685 = vld [vmem:[%s640 + $0x44] sm:$0x1]
        %v686 = vsel %vm649, %v421, %v685
        %687 = vst [vmem:[%s640 + $0x44] sm:$0x1] %v686
        %v688 = vld [vmem:[%s640 + $0x48] sm:$0xf]
        %v689 = vsel %vm643, %v428, %v688
        %690 = vst [vmem:[%s640 + $0x48] sm:$0xf] %v689
        %691 = vst.msk [vmem:[%s640 + $0x4c] sm:$0xf] %vm229, %v437
        %v692 = vld [vmem:[%s640 + $0x50] sm:$0x1]
        %v693 = vsel %vm649, %v438, %v692
        %694 = vst [vmem:[%s640 + $0x50] sm:$0x1] %v693
        %v695 = vld [vmem:[%s640 + $0x54] sm:$0xf]
        %v696 = vsel %vm643, %v445, %v695
        %697 = vst [vmem:[%s640 + $0x54] sm:$0xf] %v696
        %698 = vst.msk [vmem:[%s640 + $0x58] sm:$0xf] %vm229, %v454
        %v699 = vld [vmem:[%s640 + $0x5c] sm:$0x1]
        %v700 = vsel %vm649, %v455, %v699
        %701 = vst [vmem:[%s640 + $0x5c] sm:$0x1] %v700
        %v702 = vld [vmem:[%s640 + $0x60] sm:$0xf]
        %v703 = vsel %vm643, %v462, %v702
        %704 = vst [vmem:[%s640 + $0x60] sm:$0xf] %v703
        %705 = vst.msk [vmem:[%s640 + $0x64] sm:$0xf] %vm229, %v471
        %v706 = vld [vmem:[%s640 + $0x68] sm:$0x1]
        %v707 = vsel %vm649, %v472, %v706
        %708 = vst [vmem:[%s640 + $0x68] sm:$0x1] %v707
        %v709 = vld [vmem:[%s640 + $0x6c] sm:$0xf]
        %v710 = vsel %vm643, %v479, %v709
        %711 = vst [vmem:[%s640 + $0x6c] sm:$0xf] %v710
        %712 = vst.msk [vmem:[%s640 + $0x70] sm:$0xf] %vm229, %v488
        %v713 = vld [vmem:[%s640 + $0x74] sm:$0x1]
        %v714 = vsel %vm649, %v489, %v713
        %715 = vst [vmem:[%s640 + $0x74] sm:$0x1] %v714
        %v716 = vld [vmem:[%s640 + $0x78] sm:$0xf]
        %v717 = vsel %vm643, %v496, %v716
        %718 = vst [vmem:[%s640 + $0x78] sm:$0xf] %v717
        %719 = vst.msk [vmem:[%s640 + $0x7c] sm:$0xf] %vm229, %v505
        %v720 = vld [vmem:[%s640 + $0x80] sm:$0x1]
        %v721 = vsel %vm649, %v506, %v720
        %722 = vst [vmem:[%s640 + $0x80] sm:$0x1] %v721
        %v723 = vld [vmem:[%s640 + $0x84] sm:$0xf]
        %v724 = vsel %vm643, %v513, %v723
        %725 = vst [vmem:[%s640 + $0x84] sm:$0xf] %v724
        %726 = vst.msk [vmem:[%s640 + $0x88] sm:$0xf] %vm229, %v522
        %v727 = vld [vmem:[%s640 + $0x8c] sm:$0x1]
        %v728 = vsel %vm649, %v523, %v727
        %729 = vst [vmem:[%s640 + $0x8c] sm:$0x1] %v728
        %v730 = vld [vmem:[%s640 + $0x90] sm:$0xf]
        %v731 = vsel %vm643, %v530, %v730
        %732 = vst [vmem:[%s640 + $0x90] sm:$0xf] %v731
        %733 = vst.msk [vmem:[%s640 + $0x94] sm:$0xf] %vm229, %v539
        %v734 = vld [vmem:[%s640 + $0x98] sm:$0x1]
        %v735 = vsel %vm649, %v540, %v734
        %736 = vst [vmem:[%s640 + $0x98] sm:$0x1] %v735
        %v737 = vld [vmem:[%s640 + $0x9c] sm:$0xf]
        %v738 = vsel %vm643, %v547, %v737
        %739 = vst [vmem:[%s640 + $0x9c] sm:$0xf] %v738
        %740 = vst.msk [vmem:[%s640 + $0xa0] sm:$0xf] %vm229, %v556
        %v741 = vld [vmem:[%s640 + $0xa4] sm:$0x1]
        %v742 = vsel %vm649, %v557, %v741
        %743 = vst [vmem:[%s640 + $0xa4] sm:$0x1] %v742
        %v744 = vld [vmem:[%s640 + $0xa8] sm:$0xf]
        %v745 = vsel %vm643, %v564, %v744
        %746 = vst [vmem:[%s640 + $0xa8] sm:$0xf] %v745
        %747 = vst.msk [vmem:[%s640 + $0xac] sm:$0xf] %vm229, %v573
        %v748 = vld [vmem:[%s640 + $0xb0] sm:$0x1]
        %v749 = vsel %vm649, %v574, %v748
        %750 = vst [vmem:[%s640 + $0xb0] sm:$0x1] %v749
        %v751 = vld [vmem:[%s640 + $0xb4] sm:$0xf]
        %v752 = vsel %vm643, %v581, %v751
        %753 = vst [vmem:[%s640 + $0xb4] sm:$0xf] %v752
        %754 = vst.msk [vmem:[%s640 + $0xb8] sm:$0xf] %vm229, %v590
        %v755 = vld [vmem:[%s640 + $0xbc] sm:$0x1]
        %v756 = vsel %vm649, %v591, %v755
        %757 = vst [vmem:[%s640 + $0xbc] sm:$0x1] %v756
      $region40: #{convolution_block.3} parent=31 // pred_fallthru
        _
      %s758 = smul.u32 %s21, 16
      %s759 = smul.u32 %s758, 3
      %s760 = smul.addr %s759, 4
      %s761 = scalar_lea.vmem [#allocation2], %s760
      %v762 = vld [vmem:[%s761] sm:$0xf]
      %v763 = vld [vmem:[%s761 + $0x4] sm:$0xf]
      %v764 = vld [vmem:[%s761 + $0x8] sm:$0x1]
      %v765 = vld [vmem:[%s761 + $0xc] sm:$0xf]
      %v766 = vld [vmem:[%s761 + $0x10] sm:$0xf]
      %v767 = vld [vmem:[%s761 + $0x14] sm:$0x1]
      %v768 = vld [vmem:[%s761 + $0x18] sm:$0xf]
      %v769 = vld [vmem:[%s761 + $0x1c] sm:$0xf]
      %v770 = vld [vmem:[%s761 + $0x20] sm:$0x1]
      %v771 = vld [vmem:[%s761 + $0x24] sm:$0xf]
      %v772 = vld [vmem:[%s761 + $0x28] sm:$0xf]
      %v773 = vld [vmem:[%s761 + $0x2c] sm:$0x1]
      %v774 = vld [vmem:[%s761 + $0x30] sm:$0xf]
      %v775 = vld [vmem:[%s761 + $0x34] sm:$0xf]
      %v776 = vld [vmem:[%s761 + $0x38] sm:$0x1]
      %v777 = vld [vmem:[%s761 + $0x3c] sm:$0xf]
      %v778 = vld [vmem:[%s761 + $0x40] sm:$0xf]
      %v779 = vld [vmem:[%s761 + $0x44] sm:$0x1]
      %v780 = vld [vmem:[%s761 + $0x48] sm:$0xf]
      %v781 = vld [vmem:[%s761 + $0x4c] sm:$0xf]
      %v782 = vld [vmem:[%s761 + $0x50] sm:$0x1]
      %v783 = vld [vmem:[%s761 + $0x54] sm:$0xf]
      %v784 = vld [vmem:[%s761 + $0x58] sm:$0xf]
      %v785 = vld [vmem:[%s761 + $0x5c] sm:$0x1]
      %v786 = vld [vmem:[%s761 + $0x60] sm:$0xf]
      %v787 = vld [vmem:[%s761 + $0x64] sm:$0xf]
      %v788 = vld [vmem:[%s761 + $0x68] sm:$0x1]
      %v789 = vld [vmem:[%s761 + $0x6c] sm:$0xf]
      %v790 = vld [vmem:[%s761 + $0x70] sm:$0xf]
      %v791 = vld [vmem:[%s761 + $0x74] sm:$0x1]
      %v792 = vld [vmem:[%s761 + $0x78] sm:$0xf]
      %v793 = vld [vmem:[%s761 + $0x7c] sm:$0xf]
      %v794 = vld [vmem:[%s761 + $0x80] sm:$0x1]
      %v795 = vld [vmem:[%s761 + $0x84] sm:$0xf]
      %v796 = vld [vmem:[%s761 + $0x88] sm:$0xf]
      %v797 = vld [vmem:[%s761 + $0x8c] sm:$0x1]
      %v798 = vld [vmem:[%s761 + $0x90] sm:$0xf]
      %v799 = vld [vmem:[%s761 + $0x94] sm:$0xf]
      %v800 = vld [vmem:[%s761 + $0x98] sm:$0x1]
      %v801 = vld [vmem:[%s761 + $0x9c] sm:$0xf]
      %v802 = vld [vmem:[%s761 + $0xa0] sm:$0xf]
      %v803 = vld [vmem:[%s761 + $0xa4] sm:$0x1]
      %v804 = vld [vmem:[%s761 + $0xa8] sm:$0xf]
      %v805 = vld [vmem:[%s761 + $0xac] sm:$0xf]
      %v806 = vld [vmem:[%s761 + $0xb0] sm:$0x1]
      %v807 = vld [vmem:[%s761 + $0xb4] sm:$0xf]
      %v808 = vld [vmem:[%s761 + $0xb8] sm:$0xf]
      %v809 = vld [vmem:[%s761 + $0xbc] sm:$0x1]
      %s810 = sadd.s32 %s758, 1
      %s811 = smul.u32 %s810, 3
      %s812 = smul.addr %s811, 4
      %s813 = scalar_lea.vmem [#allocation2], %s812
      %v814 = vld [vmem:[%s813] sm:$0xf]
      %v815 = vld [vmem:[%s813 + $0x4] sm:$0xf]
      %v816 = vld [vmem:[%s813 + $0x8] sm:$0x1]
      %v817 = vld [vmem:[%s813 + $0xc] sm:$0xf]
      %v818 = vld [vmem:[%s813 + $0x10] sm:$0xf]
      %v819 = vld [vmem:[%s813 + $0x14] sm:$0x1]
      %v820 = vld [vmem:[%s813 + $0x18] sm:$0xf]
      %v821 = vld [vmem:[%s813 + $0x1c] sm:$0xf]
      %v822 = vld [vmem:[%s813 + $0x20] sm:$0x1]
      %v823 = vld [vmem:[%s813 + $0x24] sm:$0xf]
      %v824 = vld [vmem:[%s813 + $0x28] sm:$0xf]
      %v825 = vld [vmem:[%s813 + $0x2c] sm:$0x1]
      %v826 = vld [vmem:[%s813 + $0x30] sm:$0xf]
      %v827 = vld [vmem:[%s813 + $0x34] sm:$0xf]
      %v828 = vld [vmem:[%s813 + $0x38] sm:$0x1]
      %v829 = vld [vmem:[%s813 + $0x3c] sm:$0xf]
      %v830 = vld [vmem:[%s813 + $0x40] sm:$0xf]
      %v831 = vld [vmem:[%s813 + $0x44] sm:$0x1]
      %v832 = vld [vmem:[%s813 + $0x48] sm:$0xf]
      %v833 = vld [vmem:[%s813 + $0x4c] sm:$0xf]
      %v834 = vld [vmem:[%s813 + $0x50] sm:$0x1]
      %v835 = vld [vmem:[%s813 + $0x54] sm:$0xf]
      %v836 = vld [vmem:[%s813 + $0x58] sm:$0xf]
      %v837 = vld [vmem:[%s813 + $0x5c] sm:$0x1]
      %v838 = vld [vmem:[%s813 + $0x60] sm:$0xf]
      %v839 = vld [vmem:[%s813 + $0x64] sm:$0xf]
      %v840 = vld [vmem:[%s813 + $0x68] sm:$0x1]
      %v841 = vld [vmem:[%s813 + $0x6c] sm:$0xf]
      %v842 = vld [vmem:[%s813 + $0x70] sm:$0xf]
      %v843 = vld [vmem:[%s813 + $0x74] sm:$0x1]
      %v844 = vld [vmem:[%s813 + $0x78] sm:$0xf]
      %v845 = vld [vmem:[%s813 + $0x7c] sm:$0xf]
      %v846 = vld [vmem:[%s813 + $0x80] sm:$0x1]
      %v847 = vld [vmem:[%s813 + $0x84] sm:$0xf]
      %v848 = vld [vmem:[%s813 + $0x88] sm:$0xf]
      %v849 = vld [vmem:[%s813 + $0x8c] sm:$0x1]
      %v850 = vld [vmem:[%s813 + $0x90] sm:$0xf]
      %v851 = vld [vmem:[%s813 + $0x94] sm:$0xf]
      %v852 = vld [vmem:[%s813 + $0x98] sm:$0x1]
      %v853 = vld [vmem:[%s813 + $0x9c] sm:$0xf]
      %v854 = vld [vmem:[%s813 + $0xa0] sm:$0xf]
      %v855 = vld [vmem:[%s813 + $0xa4] sm:$0x1]
      %v856 = vld [vmem:[%s813 + $0xa8] sm:$0xf]
      %v857 = vld [vmem:[%s813 + $0xac] sm:$0xf]
      %v858 = vld [vmem:[%s813 + $0xb0] sm:$0x1]
      %v859 = vld [vmem:[%s813 + $0xb4] sm:$0xf]
      %v860 = vld [vmem:[%s813 + $0xb8] sm:$0xf]
      %v861 = vld [vmem:[%s813 + $0xbc] sm:$0x1]
      %s862 = sadd.s32 %s758, 2
      %s863 = smul.u32 %s862, 3
      %s864 = smul.addr %s863, 4
      %s865 = scalar_lea.vmem [#allocation2], %s864
      %v866 = vld [vmem:[%s865] sm:$0xf]
      %v867 = vld [vmem:[%s865 + $0x4] sm:$0xf]
      %v868 = vld [vmem:[%s865 + $0x8] sm:$0x1]
      %v869 = vld [vmem:[%s865 + $0xc] sm:$0xf]
      %v870 = vld [vmem:[%s865 + $0x10] sm:$0xf]
      %v871 = vld [vmem:[%s865 + $0x14] sm:$0x1]
      %v872 = vld [vmem:[%s865 + $0x18] sm:$0xf]
      %v873 = vld [vmem:[%s865 + $0x1c] sm:$0xf]
      %v874 = vld [vmem:[%s865 + $0x20] sm:$0x1]
      %v875 = vld [vmem:[%s865 + $0x24] sm:$0xf]
      %v876 = vld [vmem:[%s865 + $0x28] sm:$0xf]
      %v877 = vld [vmem:[%s865 + $0x2c] sm:$0x1]
      %v878 = vld [vmem:[%s865 + $0x30] sm:$0xf]
      %v879 = vld [vmem:[%s865 + $0x34] sm:$0xf]
      %v880 = vld [vmem:[%s865 + $0x38] sm:$0x1]
      %v881 = vld [vmem:[%s865 + $0x3c] sm:$0xf]
      %v882 = vld [vmem:[%s865 + $0x40] sm:$0xf]
      %v883 = vld [vmem:[%s865 + $0x44] sm:$0x1]
      %v884 = vld [vmem:[%s865 + $0x48] sm:$0xf]
      %v885 = vld [vmem:[%s865 + $0x4c] sm:$0xf]
      %v886 = vld [vmem:[%s865 + $0x50] sm:$0x1]
      %v887 = vld [vmem:[%s865 + $0x54] sm:$0xf]
      %v888 = vld [vmem:[%s865 + $0x58] sm:$0xf]
      %v889 = vld [vmem:[%s865 + $0x5c] sm:$0x1]
      %v890 = vld [vmem:[%s865 + $0x60] sm:$0xf]
      %v891 = vld [vmem:[%s865 + $0x64] sm:$0xf]
      %v892 = vld [vmem:[%s865 + $0x68] sm:$0x1]
      %v893 = vld [vmem:[%s865 + $0x6c] sm:$0xf]
      %v894 = vld [vmem:[%s865 + $0x70] sm:$0xf]
      %v895 = vld [vmem:[%s865 + $0x74] sm:$0x1]
      %v896 = vld [vmem:[%s865 + $0x78] sm:$0xf]
      %v897 = vld [vmem:[%s865 + $0x7c] sm:$0xf]
      %v898 = vld [vmem:[%s865 + $0x80] sm:$0x1]
      %v899 = vld [vmem:[%s865 + $0x84] sm:$0xf]
      %v900 = vld [vmem:[%s865 + $0x88] sm:$0xf]
      %v901 = vld [vmem:[%s865 + $0x8c] sm:$0x1]
      %v902 = vld [vmem:[%s865 + $0x90] sm:$0xf]
      %v903 = vld [vmem:[%s865 + $0x94] sm:$0xf]
      %v904 = vld [vmem:[%s865 + $0x98] sm:$0x1]
      %v905 = vld [vmem:[%s865 + $0x9c] sm:$0xf]
      %v906 = vld [vmem:[%s865 + $0xa0] sm:$0xf]
      %v907 = vld [vmem:[%s865 + $0xa4] sm:$0x1]
      %v908 = vld [vmem:[%s865 + $0xa8] sm:$0xf]
      %v909 = vld [vmem:[%s865 + $0xac] sm:$0xf]
      %v910 = vld [vmem:[%s865 + $0xb0] sm:$0x1]
      %v911 = vld [vmem:[%s865 + $0xb4] sm:$0xf]
      %v912 = vld [vmem:[%s865 + $0xb8] sm:$0xf]
      %v913 = vld [vmem:[%s865 + $0xbc] sm:$0x1]
      %v946 = vunpack.c.l.b16 %v762
      %v947 = vunpack.c.l.b16 %v763
      %v948 = vunpack.c.l.b16 %v765
      %v949 = vunpack.c.l.b16 %v766
      %v950 = vunpack.c.l.b16 %v768
      %v951 = vunpack.c.l.b16 %v769
      %v952 = vunpack.c.l.b16 %v771
      %v953 = vunpack.c.l.b16 %v772
      %v954 = vunpack.c.l.b16 %v774
      %v955 = vunpack.c.l.b16 %v775
      %v956 = vunpack.c.l.b16 %v777
      %v957 = vunpack.c.l.b16 %v778
      %v958 = vunpack.c.l.b16 %v780
      %v959 = vunpack.c.l.b16 %v781
      %v960 = vunpack.c.l.b16 %v783
      %v961 = vunpack.c.l.b16 %v784
      %v962 = vunpack.c.l.b16 %v786
      %v963 = vunpack.c.l.b16 %v787
      %v964 = vunpack.c.l.b16 %v789
      %v965 = vunpack.c.l.b16 %v790
      %v966 = vunpack.c.l.b16 %v792
      %v967 = vunpack.c.l.b16 %v793
      %v968 = vunpack.c.l.b16 %v795
      %v969 = vunpack.c.l.b16 %v796
      %v970 = vunpack.c.l.b16 %v798
      %v971 = vunpack.c.l.b16 %v799
      %v972 = vunpack.c.l.b16 %v801
      %v973 = vunpack.c.l.b16 %v802
      %v974 = vunpack.c.l.b16 %v804
      %v975 = vunpack.c.l.b16 %v805
      %v976 = vunpack.c.l.b16 %v807
      %v977 = vunpack.c.l.b16 %v808
      %v978 = vpack.c.b16 %v947, %v946
      %v979 = vpack.c.b16 %v949, %v948
      %v980 = vpack.c.b16 %v951, %v950
      %v981 = vpack.c.b16 %v953, %v952
      %v982 = vpack.c.b16 %v955, %v954
      %v983 = vpack.c.b16 %v957, %v956
      %v984 = vpack.c.b16 %v959, %v958
      %v985 = vpack.c.b16 %v961, %v960
      %v986 = vpack.c.b16 %v963, %v962
      %v987 = vpack.c.b16 %v965, %v964
      %v988 = vpack.c.b16 %v967, %v966
      %v989 = vpack.c.b16 %v969, %v968
      %v990 = vpack.c.b16 %v971, %v970
      %v991 = vpack.c.b16 %v973, %v972
      %v992 = vpack.c.b16 %v975, %v974
      %v993 = vpack.c.b16 %v977, %v976
      %v1010 = vunpack.c.l.b16 %v764
      %v1011 = vunpack.c.l.b16 %v767
      %v1012 = vunpack.c.l.b16 %v770
      %v1013 = vunpack.c.l.b16 %v773
      %v1014 = vunpack.c.l.b16 %v776
      %v1015 = vunpack.c.l.b16 %v779
      %v1016 = vunpack.c.l.b16 %v782
      %v1017 = vunpack.c.l.b16 %v785
      %v1018 = vunpack.c.l.b16 %v788
      %v1019 = vunpack.c.l.b16 %v791
      %v1020 = vunpack.c.l.b16 %v794
      %v1021 = vunpack.c.l.b16 %v797
      %v1022 = vunpack.c.l.b16 %v800
      %v1023 = vunpack.c.l.b16 %v803
      %v1024 = vunpack.c.l.b16 %v806
      %v1025 = vunpack.c.l.b16 %v809
      %v1026 = vpack.c.b16 %v1010, %v1010
      %v1027 = vpack.c.b16 %v1011, %v1011
      %v1028 = vpack.c.b16 %v1012, %v1012
      %v1029 = vpack.c.b16 %v1013, %v1013
      %v1030 = vpack.c.b16 %v1014, %v1014
      %v1031 = vpack.c.b16 %v1015, %v1015
      %v1032 = vpack.c.b16 %v1016, %v1016
      %v1033 = vpack.c.b16 %v1017, %v1017
      %v1034 = vpack.c.b16 %v1018, %v1018
      %v1035 = vpack.c.b16 %v1019, %v1019
      %v1036 = vpack.c.b16 %v1020, %v1020
      %v1037 = vpack.c.b16 %v1021, %v1021
      %v1038 = vpack.c.b16 %v1022, %v1022
      %v1039 = vpack.c.b16 %v1023, %v1023
      %v1040 = vpack.c.b16 %v1024, %v1024
      %v1041 = vpack.c.b16 %v1025, %v1025
      %vm1042 = vsmask.f32 7424
      %v1044 = vshrl.u32 %v978, 16
      %v1046 = vshll.u32 %v978, 16
      %v1048 = vrot.slane %v1046, 1
      %v1049 = vor.u32 %v1044, %v1048
      %v1051 = vshll.u32 %v1026, 16
      %v1053 = vrot.slane %v1051, 1
      %v1054 = vsel %vm1042, %v1049, %v1053
      %v1056 = vshrl.u32 %v979, 16
      %v1058 = vshll.u32 %v979, 16
      %v1060 = vrot.slane %v1058, 1
      %v1061 = vor.u32 %v1056, %v1060
      %v1063 = vshll.u32 %v1027, 16
      %v1065 = vrot.slane %v1063, 1
      %v1066 = vsel %vm1042, %v1061, %v1065
      %v1068 = vshrl.u32 %v980, 16
      %v1070 = vshll.u32 %v980, 16
      %v1072 = vrot.slane %v1070, 1
      %v1073 = vor.u32 %v1068, %v1072
      %v1075 = vshll.u32 %v1028, 16
      %v1077 = vrot.slane %v1075, 1
      %v1078 = vsel %vm1042, %v1073, %v1077
      %v1080 = vshrl.u32 %v981, 16
      %v1082 = vshll.u32 %v981, 16
      %v1084 = vrot.slane %v1082, 1
      %v1085 = vor.u32 %v1080, %v1084
      %v1087 = vshll.u32 %v1029, 16
      %v1089 = vrot.slane %v1087, 1
      %v1090 = vsel %vm1042, %v1085, %v1089
      %v1092 = vshrl.u32 %v982, 16
      %v1094 = vshll.u32 %v982, 16
      %v1096 = vrot.slane %v1094, 1
      %v1097 = vor.u32 %v1092, %v1096
      %v1099 = vshll.u32 %v1030, 16
      %v1101 = vrot.slane %v1099, 1
      %v1102 = vsel %vm1042, %v1097, %v1101
      %v1104 = vshrl.u32 %v983, 16
      %v1106 = vshll.u32 %v983, 16
      %v1108 = vrot.slane %v1106, 1
      %v1109 = vor.u32 %v1104, %v1108
      %v1111 = vshll.u32 %v1031, 16
      %v1113 = vrot.slane %v1111, 1
      %v1114 = vsel %vm1042, %v1109, %v1113
      %v1116 = vshrl.u32 %v984, 16
      %v1118 = vshll.u32 %v984, 16
      %v1120 = vrot.slane %v1118, 1
      %v1121 = vor.u32 %v1116, %v1120
      %v1123 = vshll.u32 %v1032, 16
      %v1125 = vrot.slane %v1123, 1
      %v1126 = vsel %vm1042, %v1121, %v1125
      %v1128 = vshrl.u32 %v985, 16
      %v1130 = vshll.u32 %v985, 16
      %v1132 = vrot.slane %v1130, 1
      %v1133 = vor.u32 %v1128, %v1132
      %v1135 = vshll.u32 %v1033, 16
      %v1137 = vrot.slane %v1135, 1
      %v1138 = vsel %vm1042, %v1133, %v1137
      %v1140 = vshrl.u32 %v986, 16
      %v1142 = vshll.u32 %v986, 16
      %v1144 = vrot.slane %v1142, 1
      %v1145 = vor.u32 %v1140, %v1144
      %v1147 = vshll.u32 %v1034, 16
      %v1149 = vrot.slane %v1147, 1
      %v1150 = vsel %vm1042, %v1145, %v1149
      %v1152 = vshrl.u32 %v987, 16
      %v1154 = vshll.u32 %v987, 16
      %v1156 = vrot.slane %v1154, 1
      %v1157 = vor.u32 %v1152, %v1156
      %v1159 = vshll.u32 %v1035, 16
      %v1161 = vrot.slane %v1159, 1
      %v1162 = vsel %vm1042, %v1157, %v1161
      %v1164 = vshrl.u32 %v988, 16
      %v1166 = vshll.u32 %v988, 16
      %v1168 = vrot.slane %v1166, 1
      %v1169 = vor.u32 %v1164, %v1168
      %v1171 = vshll.u32 %v1036, 16
      %v1173 = vrot.slane %v1171, 1
      %v1174 = vsel %vm1042, %v1169, %v1173
      %v1176 = vshrl.u32 %v989, 16
      %v1178 = vshll.u32 %v989, 16
      %v1180 = vrot.slane %v1178, 1
      %v1181 = vor.u32 %v1176, %v1180
      %v1183 = vshll.u32 %v1037, 16
      %v1185 = vrot.slane %v1183, 1
      %v1186 = vsel %vm1042, %v1181, %v1185
      %v1188 = vshrl.u32 %v990, 16
      %v1190 = vshll.u32 %v990, 16
      %v1192 = vrot.slane %v1190, 1
      %v1193 = vor.u32 %v1188, %v1192
      %v1195 = vshll.u32 %v1038, 16
      %v1197 = vrot.slane %v1195, 1
      %v1198 = vsel %vm1042, %v1193, %v1197
      %v1200 = vshrl.u32 %v991, 16
      %v1202 = vshll.u32 %v991, 16
      %v1204 = vrot.slane %v1202, 1
      %v1205 = vor.u32 %v1200, %v1204
      %v1207 = vshll.u32 %v1039, 16
      %v1209 = vrot.slane %v1207, 1
      %v1210 = vsel %vm1042, %v1205, %v1209
      %v1212 = vshrl.u32 %v992, 16
      %v1214 = vshll.u32 %v992, 16
      %v1216 = vrot.slane %v1214, 1
      %v1217 = vor.u32 %v1212, %v1216
      %v1219 = vshll.u32 %v1040, 16
      %v1221 = vrot.slane %v1219, 1
      %v1222 = vsel %vm1042, %v1217, %v1221
      %v1224 = vshrl.u32 %v993, 16
      %v1226 = vshll.u32 %v993, 16
      %v1228 = vrot.slane %v1226, 1
      %v1229 = vor.u32 %v1224, %v1228
      %v1231 = vshll.u32 %v1041, 16
      %v1233 = vrot.slane %v1231, 1
      %v1234 = vsel %vm1042, %v1229, %v1233
      %1235 = vrot.lane.b32.xlu0 %v1054, 8
      %v1236 = vpop.permute.xlu0 %1235
      %1237 = vrot.lane.b32.xlu0 %v1066, 8
      %v1238 = vpop.permute.xlu0 %1237
      %1239 = vrot.lane.b32.xlu0 %v1078, 8
      %v1240 = vpop.permute.xlu0 %1239
      %1241 = vrot.lane.b32.xlu0 %v1090, 8
      %v1242 = vpop.permute.xlu0 %1241
      %1243 = vrot.lane.b32.xlu0 %v1102, 8
      %v1244 = vpop.permute.xlu0 %1243
      %1245 = vrot.lane.b32.xlu0 %v1114, 8
      %v1246 = vpop.permute.xlu0 %1245
      %1247 = vrot.lane.b32.xlu0 %v1126, 8
      %v1248 = vpop.permute.xlu0 %1247
      %1249 = vrot.lane.b32.xlu0 %v1138, 8
      %v1250 = vpop.permute.xlu0 %1249
      %1251 = vrot.lane.b32.xlu0 %v1150, 8
      %v1252 = vpop.permute.xlu0 %1251
      %1253 = vrot.lane.b32.xlu0 %v1162, 8
      %v1254 = vpop.permute.xlu0 %1253
      %1255 = vrot.lane.b32.xlu0 %v1174, 8
      %v1256 = vpop.permute.xlu0 %1255
      %1257 = vrot.lane.b32.xlu0 %v1186, 8
      %v1258 = vpop.permute.xlu0 %1257
      %1259 = vrot.lane.b32.xlu0 %v1198, 8
      %v1260 = vpop.permute.xlu0 %1259
      %1261 = vrot.lane.b32.xlu0 %v1210, 8
      %v1262 = vpop.permute.xlu0 %1261
      %1263 = vrot.lane.b32.xlu0 %v1222, 8
      %v1264 = vpop.permute.xlu0 %1263
      %1265 = vrot.lane.b32.xlu0 %v1234, 8
      %v1266 = vpop.permute.xlu0 %1265
      %vm1267 = vcmask 1046528
      %v1268 = vrot.slane %v978, 1
      %v1269 = vrot.slane %v1026, 1
      %v1270 = vsel %vm1267, %v1268, %v1269
      %v1271 = vrot.slane %v979, 1
      %v1272 = vrot.slane %v1027, 1
      %v1273 = vsel %vm1267, %v1271, %v1272
      %v1274 = vrot.slane %v980, 1
      %v1275 = vrot.slane %v1028, 1
      %v1276 = vsel %vm1267, %v1274, %v1275
      %v1277 = vrot.slane %v981, 1
      %v1278 = vrot.slane %v1029, 1
      %v1279 = vsel %vm1267, %v1277, %v1278
      %v1280 = vrot.slane %v982, 1
      %v1281 = vrot.slane %v1030, 1
      %v1282 = vsel %vm1267, %v1280, %v1281
      %v1283 = vrot.slane %v983, 1
      %v1284 = vrot.slane %v1031, 1
      %v1285 = vsel %vm1267, %v1283, %v1284
      %v1286 = vrot.slane %v984, 1
      %v1287 = vrot.slane %v1032, 1
      %v1288 = vsel %vm1267, %v1286, %v1287
      %v1289 = vrot.slane %v985, 1
      %v1290 = vrot.slane %v1033, 1
      %v1291 = vsel %vm1267, %v1289, %v1290
      %v1292 = vrot.slane %v986, 1
      %v1293 = vrot.slane %v1034, 1
      %v1294 = vsel %vm1267, %v1292, %v1293
      %v1295 = vrot.slane %v987, 1
      %v1296 = vrot.slane %v1035, 1
      %v1297 = vsel %vm1267, %v1295, %v1296
      %v1298 = vrot.slane %v988, 1
      %v1299 = vrot.slane %v1036, 1
      %v1300 = vsel %vm1267, %v1298, %v1299
      %v1301 = vrot.slane %v989, 1
      %v1302 = vrot.slane %v1037, 1
      %v1303 = vsel %vm1267, %v1301, %v1302
      %v1304 = vrot.slane %v990, 1
      %v1305 = vrot.slane %v1038, 1
      %v1306 = vsel %vm1267, %v1304, %v1305
      %v1307 = vrot.slane %v991, 1
      %v1308 = vrot.slane %v1039, 1
      %v1309 = vsel %vm1267, %v1307, %v1308
      %v1310 = vrot.slane %v992, 1
      %v1311 = vrot.slane %v1040, 1
      %v1312 = vsel %vm1267, %v1310, %v1311
      %v1313 = vrot.slane %v993, 1
      %v1314 = vrot.slane %v1041, 1
      %v1315 = vsel %vm1267, %v1313, %v1314
      %1316 = vrot.lane.b32.xlu0 %v1270, 16
      %v1317 = vpop.permute.xlu0 %1316
      %1318 = vrot.lane.b32.xlu0 %v1273, 16
      %v1319 = vpop.permute.xlu0 %1318
      %1320 = vrot.lane.b32.xlu0 %v1276, 16
      %v1321 = vpop.permute.xlu0 %1320
      %1322 = vrot.lane.b32.xlu0 %v1279, 16
      %v1323 = vpop.permute.xlu0 %1322
      %1324 = vrot.lane.b32.xlu0 %v1282, 16
      %v1325 = vpop.permute.xlu0 %1324
      %1326 = vrot.lane.b32.xlu0 %v1285, 16
      %v1327 = vpop.permute.xlu0 %1326
      %1328 = vrot.lane.b32.xlu0 %v1288, 16
      %v1329 = vpop.permute.xlu0 %1328
      %1330 = vrot.lane.b32.xlu0 %v1291, 16
      %v1331 = vpop.permute.xlu0 %1330
      %1332 = vrot.lane.b32.xlu0 %v1294, 16
      %v1333 = vpop.permute.xlu0 %1332
      %1334 = vrot.lane.b32.xlu0 %v1297, 16
      %v1335 = vpop.permute.xlu0 %1334
      %1336 = vrot.lane.b32.xlu0 %v1300, 16
      %v1337 = vpop.permute.xlu0 %1336
      %1338 = vrot.lane.b32.xlu0 %v1303, 16
      %v1339 = vpop.permute.xlu0 %1338
      %1340 = vrot.lane.b32.xlu0 %v1306, 16
      %v1341 = vpop.permute.xlu0 %1340
      %1342 = vrot.lane.b32.xlu0 %v1309, 16
      %v1343 = vpop.permute.xlu0 %1342
      %1344 = vrot.lane.b32.xlu0 %v1312, 16
      %v1345 = vpop.permute.xlu0 %1344
      %1346 = vrot.lane.b32.xlu0 %v1315, 16
      %v1347 = vpop.permute.xlu0 %1346
      %v1380 = vunpack.c.l.b16 %v814
      %v1381 = vunpack.c.l.b16 %v815
      %v1382 = vunpack.c.l.b16 %v817
      %v1383 = vunpack.c.l.b16 %v818
      %v1384 = vunpack.c.l.b16 %v820
      %v1385 = vunpack.c.l.b16 %v821
      %v1386 = vunpack.c.l.b16 %v823
      %v1387 = vunpack.c.l.b16 %v824
      %v1388 = vunpack.c.l.b16 %v826
      %v1389 = vunpack.c.l.b16 %v827
      %v1390 = vunpack.c.l.b16 %v829
      %v1391 = vunpack.c.l.b16 %v830
      %v1392 = vunpack.c.l.b16 %v832
      %v1393 = vunpack.c.l.b16 %v833
      %v1394 = vunpack.c.l.b16 %v835
      %v1395 = vunpack.c.l.b16 %v836
      %v1396 = vunpack.c.l.b16 %v838
      %v1397 = vunpack.c.l.b16 %v839
      %v1398 = vunpack.c.l.b16 %v841
      %v1399 = vunpack.c.l.b16 %v842
      %v1400 = vunpack.c.l.b16 %v844
      %v1401 = vunpack.c.l.b16 %v845
      %v1402 = vunpack.c.l.b16 %v847
      %v1403 = vunpack.c.l.b16 %v848
      %v1404 = vunpack.c.l.b16 %v850
      %v1405 = vunpack.c.l.b16 %v851
      %v1406 = vunpack.c.l.b16 %v853
      %v1407 = vunpack.c.l.b16 %v854
      %v1408 = vunpack.c.l.b16 %v856
      %v1409 = vunpack.c.l.b16 %v857
      %v1410 = vunpack.c.l.b16 %v859
      %v1411 = vunpack.c.l.b16 %v860
      %v1412 = vpack.c.b16 %v1381, %v1380
      %v1413 = vpack.c.b16 %v1383, %v1382
      %v1414 = vpack.c.b16 %v1385, %v1384
      %v1415 = vpack.c.b16 %v1387, %v1386
      %v1416 = vpack.c.b16 %v1389, %v1388
      %v1417 = vpack.c.b16 %v1391, %v1390
      %v1418 = vpack.c.b16 %v1393, %v1392
      %v1419 = vpack.c.b16 %v1395, %v1394
      %v1420 = vpack.c.b16 %v1397, %v1396
      %v1421 = vpack.c.b16 %v1399, %v1398
      %v1422 = vpack.c.b16 %v1401, %v1400
      %v1423 = vpack.c.b16 %v1403, %v1402
      %v1424 = vpack.c.b16 %v1405, %v1404
      %v1425 = vpack.c.b16 %v1407, %v1406
      %v1426 = vpack.c.b16 %v1409, %v1408
      %v1427 = vpack.c.b16 %v1411, %v1410
      %1428 = vrot.lane.b32.xlu0 %v1412, 24
      %v1429 = vpop.permute.xlu0 %1428
      %1430 = vrot.lane.b32.xlu0 %v1413, 24
      %v1431 = vpop.permute.xlu0 %1430
      %1432 = vrot.lane.b32.xlu0 %v1414, 24
      %v1433 = vpop.permute.xlu0 %1432
      %1434 = vrot.lane.b32.xlu0 %v1415, 24
      %v1435 = vpop.permute.xlu0 %1434
      %1436 = vrot.lane.b32.xlu0 %v1416, 24
      %v1437 = vpop.permute.xlu0 %1436
      %1438 = vrot.lane.b32.xlu0 %v1417, 24
      %v1439 = vpop.permute.xlu0 %1438
      %1440 = vrot.lane.b32.xlu0 %v1418, 24
      %v1441 = vpop.permute.xlu0 %1440
      %1442 = vrot.lane.b32.xlu0 %v1419, 24
      %v1443 = vpop.permute.xlu0 %1442
      %1444 = vrot.lane.b32.xlu0 %v1420, 24
      %v1445 = vpop.permute.xlu0 %1444
      %1446 = vrot.lane.b32.xlu0 %v1421, 24
      %v1447 = vpop.permute.xlu0 %1446
      %1448 = vrot.lane.b32.xlu0 %v1422, 24
      %v1449 = vpop.permute.xlu0 %1448
      %1450 = vrot.lane.b32.xlu0 %v1423, 24
      %v1451 = vpop.permute.xlu0 %1450
      %1452 = vrot.lane.b32.xlu0 %v1424, 24
      %v1453 = vpop.permute.xlu0 %1452
      %1454 = vrot.lane.b32.xlu0 %v1425, 24
      %v1455 = vpop.permute.xlu0 %1454
      %1456 = vrot.lane.b32.xlu0 %v1426, 24
      %v1457 = vpop.permute.xlu0 %1456
      %1458 = vrot.lane.b32.xlu0 %v1427, 24
      %v1459 = vpop.permute.xlu0 %1458
      %v1476 = vunpack.c.l.b16 %v816
      %v1477 = vunpack.c.l.b16 %v819
      %v1478 = vunpack.c.l.b16 %v822
      %v1479 = vunpack.c.l.b16 %v825
      %v1480 = vunpack.c.l.b16 %v828
      %v1481 = vunpack.c.l.b16 %v831
      %v1482 = vunpack.c.l.b16 %v834
      %v1483 = vunpack.c.l.b16 %v837
      %v1484 = vunpack.c.l.b16 %v840
      %v1485 = vunpack.c.l.b16 %v843
      %v1486 = vunpack.c.l.b16 %v846
      %v1487 = vunpack.c.l.b16 %v849
      %v1488 = vunpack.c.l.b16 %v852
      %v1489 = vunpack.c.l.b16 %v855
      %v1490 = vunpack.c.l.b16 %v858
      %v1491 = vunpack.c.l.b16 %v861
      %v1492 = vpack.c.b16 %v1476, %v1476
      %v1493 = vpack.c.b16 %v1477, %v1477
      %v1494 = vpack.c.b16 %v1478, %v1478
      %v1495 = vpack.c.b16 %v1479, %v1479
      %v1496 = vpack.c.b16 %v1480, %v1480
      %v1497 = vpack.c.b16 %v1481, %v1481
      %v1498 = vpack.c.b16 %v1482, %v1482
      %v1499 = vpack.c.b16 %v1483, %v1483
      %v1500 = vpack.c.b16 %v1484, %v1484
      %v1501 = vpack.c.b16 %v1485, %v1485
      %v1502 = vpack.c.b16 %v1486, %v1486
      %v1503 = vpack.c.b16 %v1487, %v1487
      %v1504 = vpack.c.b16 %v1488, %v1488
      %v1505 = vpack.c.b16 %v1489, %v1489
      %v1506 = vpack.c.b16 %v1490, %v1490
      %v1507 = vpack.c.b16 %v1491, %v1491
      %v1509 = vshrl.u32 %v1412, 16
      %v1511 = vshll.u32 %v1412, 16
      %v1513 = vrot.slane %v1511, 1
      %v1514 = vor.u32 %v1509, %v1513
      %v1516 = vshll.u32 %v1492, 16
      %v1518 = vrot.slane %v1516, 1
      %v1519 = vsel %vm1042, %v1514, %v1518
      %v1521 = vshrl.u32 %v1413, 16
      %v1523 = vshll.u32 %v1413, 16
      %v1525 = vrot.slane %v1523, 1
      %v1526 = vor.u32 %v1521, %v1525
      %v1528 = vshll.u32 %v1493, 16
      %v1530 = vrot.slane %v1528, 1
      %v1531 = vsel %vm1042, %v1526, %v1530
      %v1533 = vshrl.u32 %v1414, 16
      %v1535 = vshll.u32 %v1414, 16
      %v1537 = vrot.slane %v1535, 1
      %v1538 = vor.u32 %v1533, %v1537
      %v1540 = vshll.u32 %v1494, 16
      %v1542 = vrot.slane %v1540, 1
      %v1543 = vsel %vm1042, %v1538, %v1542
      %v1545 = vshrl.u32 %v1415, 16
      %v1547 = vshll.u32 %v1415, 16
      %v1549 = vrot.slane %v1547, 1
      %v1550 = vor.u32 %v1545, %v1549
      %v1552 = vshll.u32 %v1495, 16
      %v1554 = vrot.slane %v1552, 1
      %v1555 = vsel %vm1042, %v1550, %v1554
      %v1557 = vshrl.u32 %v1416, 16
      %v1559 = vshll.u32 %v1416, 16
      %v1561 = vrot.slane %v1559, 1
      %v1562 = vor.u32 %v1557, %v1561
      %v1564 = vshll.u32 %v1496, 16
      %v1566 = vrot.slane %v1564, 1
      %v1567 = vsel %vm1042, %v1562, %v1566
      %v1569 = vshrl.u32 %v1417, 16
      %v1571 = vshll.u32 %v1417, 16
      %v1573 = vrot.slane %v1571, 1
      %v1574 = vor.u32 %v1569, %v1573
      %v1576 = vshll.u32 %v1497, 16
      %v1578 = vrot.slane %v1576, 1
      %v1579 = vsel %vm1042, %v1574, %v1578
      %v1581 = vshrl.u32 %v1418, 16
      %v1583 = vshll.u32 %v1418, 16
      %v1585 = vrot.slane %v1583, 1
      %v1586 = vor.u32 %v1581, %v1585
      %v1588 = vshll.u32 %v1498, 16
      %v1590 = vrot.slane %v1588, 1
      %v1591 = vsel %vm1042, %v1586, %v1590
      %v1593 = vshrl.u32 %v1419, 16
      %v1595 = vshll.u32 %v1419, 16
      %v1597 = vrot.slane %v1595, 1
      %v1598 = vor.u32 %v1593, %v1597
      %v1600 = vshll.u32 %v1499, 16
      %v1602 = vrot.slane %v1600, 1
      %v1603 = vsel %vm1042, %v1598, %v1602
      %v1605 = vshrl.u32 %v1420, 16
      %v1607 = vshll.u32 %v1420, 16
      %v1609 = vrot.slane %v1607, 1
      %v1610 = vor.u32 %v1605, %v1609
      %v1612 = vshll.u32 %v1500, 16
      %v1614 = vrot.slane %v1612, 1
      %v1615 = vsel %vm1042, %v1610, %v1614
      %v1617 = vshrl.u32 %v1421, 16
      %v1619 = vshll.u32 %v1421, 16
      %v1621 = vrot.slane %v1619, 1
      %v1622 = vor.u32 %v1617, %v1621
      %v1624 = vshll.u32 %v1501, 16
      %v1626 = vrot.slane %v1624, 1
      %v1627 = vsel %vm1042, %v1622, %v1626
      %v1629 = vshrl.u32 %v1422, 16
      %v1631 = vshll.u32 %v1422, 16
      %v1633 = vrot.slane %v1631, 1
      %v1634 = vor.u32 %v1629, %v1633
      %v1636 = vshll.u32 %v1502, 16
      %v1638 = vrot.slane %v1636, 1
      %v1639 = vsel %vm1042, %v1634, %v1638
      %v1641 = vshrl.u32 %v1423, 16
      %v1643 = vshll.u32 %v1423, 16
      %v1645 = vrot.slane %v1643, 1
      %v1646 = vor.u32 %v1641, %v1645
      %v1648 = vshll.u32 %v1503, 16
      %v1650 = vrot.slane %v1648, 1
      %v1651 = vsel %vm1042, %v1646, %v1650
      %v1653 = vshrl.u32 %v1424, 16
      %v1655 = vshll.u32 %v1424, 16
      %v1657 = vrot.slane %v1655, 1
      %v1658 = vor.u32 %v1653, %v1657
      %v1660 = vshll.u32 %v1504, 16
      %v1662 = vrot.slane %v1660, 1
      %v1663 = vsel %vm1042, %v1658, %v1662
      %v1665 = vshrl.u32 %v1425, 16
      %v1667 = vshll.u32 %v1425, 16
      %v1669 = vrot.slane %v1667, 1
      %v1670 = vor.u32 %v1665, %v1669
      %v1672 = vshll.u32 %v1505, 16
      %v1674 = vrot.slane %v1672, 1
      %v1675 = vsel %vm1042, %v1670, %v1674
      %v1677 = vshrl.u32 %v1426, 16
      %v1679 = vshll.u32 %v1426, 16
      %v1681 = vrot.slane %v1679, 1
      %v1682 = vor.u32 %v1677, %v1681
      %v1684 = vshll.u32 %v1506, 16
      %v1686 = vrot.slane %v1684, 1
      %v1687 = vsel %vm1042, %v1682, %v1686
      %v1689 = vshrl.u32 %v1427, 16
      %v1691 = vshll.u32 %v1427, 16
      %v1693 = vrot.slane %v1691, 1
      %v1694 = vor.u32 %v1689, %v1693
      %v1696 = vshll.u32 %v1507, 16
      %v1698 = vrot.slane %v1696, 1
      %v1699 = vsel %vm1042, %v1694, %v1698
      %1700 = vrot.lane.b32.xlu0 %v1519, 32
      %v1701 = vpop.permute.xlu0 %1700
      %1702 = vrot.lane.b32.xlu0 %v1531, 32
      %v1703 = vpop.permute.xlu0 %1702
      %1704 = vrot.lane.b32.xlu0 %v1543, 32
      %v1705 = vpop.permute.xlu0 %1704
      %1706 = vrot.lane.b32.xlu0 %v1555, 32
      %v1707 = vpop.permute.xlu0 %1706
      %1708 = vrot.lane.b32.xlu0 %v1567, 32
      %v1709 = vpop.permute.xlu0 %1708
      %1710 = vrot.lane.b32.xlu0 %v1579, 32
      %v1711 = vpop.permute.xlu0 %1710
      %1712 = vrot.lane.b32.xlu0 %v1591, 32
      %v1713 = vpop.permute.xlu0 %1712
      %1714 = vrot.lane.b32.xlu0 %v1603, 32
      %v1715 = vpop.permute.xlu0 %1714
      %1716 = vrot.lane.b32.xlu0 %v1615, 32
      %v1717 = vpop.permute.xlu0 %1716
      %1718 = vrot.lane.b32.xlu0 %v1627, 32
      %v1719 = vpop.permute.xlu0 %1718
      %1720 = vrot.lane.b32.xlu0 %v1639, 32
      %v1721 = vpop.permute.xlu0 %1720
      %1722 = vrot.lane.b32.xlu0 %v1651, 32
      %v1723 = vpop.permute.xlu0 %1722
      %1724 = vrot.lane.b32.xlu0 %v1663, 32
      %v1725 = vpop.permute.xlu0 %1724
      %1726 = vrot.lane.b32.xlu0 %v1675, 32
      %v1727 = vpop.permute.xlu0 %1726
      %1728 = vrot.lane.b32.xlu0 %v1687, 32
      %v1729 = vpop.permute.xlu0 %1728
      %1730 = vrot.lane.b32.xlu0 %v1699, 32
      %v1731 = vpop.permute.xlu0 %1730
      %v1732 = vrot.slane %v1412, 1
      %v1733 = vrot.slane %v1492, 1
      %v1734 = vsel %vm1267, %v1732, %v1733
      %v1735 = vrot.slane %v1413, 1
      %v1736 = vrot.slane %v1493, 1
      %v1737 = vsel %vm1267, %v1735, %v1736
      %v1738 = vrot.slane %v1414, 1
      %v1739 = vrot.slane %v1494, 1
      %v1740 = vsel %vm1267, %v1738, %v1739
      %v1741 = vrot.slane %v1415, 1
      %v1742 = vrot.slane %v1495, 1
      %v1743 = vsel %vm1267, %v1741, %v1742
      %v1744 = vrot.slane %v1416, 1
      %v1745 = vrot.slane %v1496, 1
      %v1746 = vsel %vm1267, %v1744, %v1745
      %v1747 = vrot.slane %v1417, 1
      %v1748 = vrot.slane %v1497, 1
      %v1749 = vsel %vm1267, %v1747, %v1748
      %v1750 = vrot.slane %v1418, 1
      %v1751 = vrot.slane %v1498, 1
      %v1752 = vsel %vm1267, %v1750, %v1751
      %v1753 = vrot.slane %v1419, 1
      %v1754 = vrot.slane %v1499, 1
      %v1755 = vsel %vm1267, %v1753, %v1754
      %v1756 = vrot.slane %v1420, 1
      %v1757 = vrot.slane %v1500, 1
      %v1758 = vsel %vm1267, %v1756, %v1757
      %v1759 = vrot.slane %v1421, 1
      %v1760 = vrot.slane %v1501, 1
      %v1761 = vsel %vm1267, %v1759, %v1760
      %v1762 = vrot.slane %v1422, 1
      %v1763 = vrot.slane %v1502, 1
      %v1764 = vsel %vm1267, %v1762, %v1763
      %v1765 = vrot.slane %v1423, 1
      %v1766 = vrot.slane %v1503, 1
      %v1767 = vsel %vm1267, %v1765, %v1766
      %v1768 = vrot.slane %v1424, 1
      %v1769 = vrot.slane %v1504, 1
      %v1770 = vsel %vm1267, %v1768, %v1769
      %v1771 = vrot.slane %v1425, 1
      %v1772 = vrot.slane %v1505, 1
      %v1773 = vsel %vm1267, %v1771, %v1772
      %v1774 = vrot.slane %v1426, 1
      %v1775 = vrot.slane %v1506, 1
      %v1776 = vsel %vm1267, %v1774, %v1775
      %v1777 = vrot.slane %v1427, 1
      %v1778 = vrot.slane %v1507, 1
      %v1779 = vsel %vm1267, %v1777, %v1778
      %1780 = vrot.lane.b32.xlu0 %v1734, 40
      %v1781 = vpop.permute.xlu0 %1780
      %1782 = vrot.lane.b32.xlu0 %v1737, 40
      %v1783 = vpop.permute.xlu0 %1782
      %1784 = vrot.lane.b32.xlu0 %v1740, 40
      %v1785 = vpop.permute.xlu0 %1784
      %1786 = vrot.lane.b32.xlu0 %v1743, 40
      %v1787 = vpop.permute.xlu0 %1786
      %1788 = vrot.lane.b32.xlu0 %v1746, 40
      %v1789 = vpop.permute.xlu0 %1788
      %1790 = vrot.lane.b32.xlu0 %v1749, 40
      %v1791 = vpop.permute.xlu0 %1790
      %1792 = vrot.lane.b32.xlu0 %v1752, 40
      %v1793 = vpop.permute.xlu0 %1792
      %1794 = vrot.lane.b32.xlu0 %v1755, 40
      %v1795 = vpop.permute.xlu0 %1794
      %1796 = vrot.lane.b32.xlu0 %v1758, 40
      %v1797 = vpop.permute.xlu0 %1796
      %1798 = vrot.lane.b32.xlu0 %v1761, 40
      %v1799 = vpop.permute.xlu0 %1798
      %1800 = vrot.lane.b32.xlu0 %v1764, 40
      %v1801 = vpop.permute.xlu0 %1800
      %1802 = vrot.lane.b32.xlu0 %v1767, 40
      %v1803 = vpop.permute.xlu0 %1802
      %1804 = vrot.lane.b32.xlu0 %v1770, 40
      %v1805 = vpop.permute.xlu0 %1804
      %1806 = vrot.lane.b32.xlu0 %v1773, 40
      %v1807 = vpop.permute.xlu0 %1806
      %1808 = vrot.lane.b32.xlu0 %v1776, 40
      %v1809 = vpop.permute.xlu0 %1808
      %1810 = vrot.lane.b32.xlu0 %v1779, 40
      %v1811 = vpop.permute.xlu0 %1810
      %v1844 = vunpack.c.l.b16 %v866
      %v1845 = vunpack.c.l.b16 %v867
      %v1846 = vunpack.c.l.b16 %v869
      %v1847 = vunpack.c.l.b16 %v870
      %v1848 = vunpack.c.l.b16 %v872
      %v1849 = vunpack.c.l.b16 %v873
      %v1850 = vunpack.c.l.b16 %v875
      %v1851 = vunpack.c.l.b16 %v876
      %v1852 = vunpack.c.l.b16 %v878
      %v1853 = vunpack.c.l.b16 %v879
      %v1854 = vunpack.c.l.b16 %v881
      %v1855 = vunpack.c.l.b16 %v882
      %v1856 = vunpack.c.l.b16 %v884
      %v1857 = vunpack.c.l.b16 %v885
      %v1858 = vunpack.c.l.b16 %v887
      %v1859 = vunpack.c.l.b16 %v888
      %v1860 = vunpack.c.l.b16 %v890
      %v1861 = vunpack.c.l.b16 %v891
      %v1862 = vunpack.c.l.b16 %v893
      %v1863 = vunpack.c.l.b16 %v894
      %v1864 = vunpack.c.l.b16 %v896
      %v1865 = vunpack.c.l.b16 %v897
      %v1866 = vunpack.c.l.b16 %v899
      %v1867 = vunpack.c.l.b16 %v900
      %v1868 = vunpack.c.l.b16 %v902
      %v1869 = vunpack.c.l.b16 %v903
      %v1870 = vunpack.c.l.b16 %v905
      %v1871 = vunpack.c.l.b16 %v906
      %v1872 = vunpack.c.l.b16 %v908
      %v1873 = vunpack.c.l.b16 %v909
      %v1874 = vunpack.c.l.b16 %v911
      %v1875 = vunpack.c.l.b16 %v912
      %v1876 = vpack.c.b16 %v1845, %v1844
      %v1877 = vpack.c.b16 %v1847, %v1846
      %v1878 = vpack.c.b16 %v1849, %v1848
      %v1879 = vpack.c.b16 %v1851, %v1850
      %v1880 = vpack.c.b16 %v1853, %v1852
      %v1881 = vpack.c.b16 %v1855, %v1854
      %v1882 = vpack.c.b16 %v1857, %v1856
      %v1883 = vpack.c.b16 %v1859, %v1858
      %v1884 = vpack.c.b16 %v1861, %v1860
      %v1885 = vpack.c.b16 %v1863, %v1862
      %v1886 = vpack.c.b16 %v1865, %v1864
      %v1887 = vpack.c.b16 %v1867, %v1866
      %v1888 = vpack.c.b16 %v1869, %v1868
      %v1889 = vpack.c.b16 %v1871, %v1870
      %v1890 = vpack.c.b16 %v1873, %v1872
      %v1891 = vpack.c.b16 %v1875, %v1874
      %1892 = vrot.lane.b32.xlu0 %v1876, 48
      %v1893 = vpop.permute.xlu0 %1892
      %1894 = vrot.lane.b32.xlu0 %v1877, 48
      %v1895 = vpop.permute.xlu0 %1894
      %1896 = vrot.lane.b32.xlu0 %v1878, 48
      %v1897 = vpop.permute.xlu0 %1896
      %1898 = vrot.lane.b32.xlu0 %v1879, 48
      %v1899 = vpop.permute.xlu0 %1898
      %1900 = vrot.lane.b32.xlu0 %v1880, 48
      %v1901 = vpop.permute.xlu0 %1900
      %1902 = vrot.lane.b32.xlu0 %v1881, 48
      %v1903 = vpop.permute.xlu0 %1902
      %1904 = vrot.lane.b32.xlu0 %v1882, 48
      %v1905 = vpop.permute.xlu0 %1904
      %1906 = vrot.lane.b32.xlu0 %v1883, 48
      %v1907 = vpop.permute.xlu0 %1906
      %1908 = vrot.lane.b32.xlu0 %v1884, 48
      %v1909 = vpop.permute.xlu0 %1908
      %1910 = vrot.lane.b32.xlu0 %v1885, 48
      %v1911 = vpop.permute.xlu0 %1910
      %1912 = vrot.lane.b32.xlu0 %v1886, 48
      %v1913 = vpop.permute.xlu0 %1912
      %1914 = vrot.lane.b32.xlu0 %v1887, 48
      %v1915 = vpop.permute.xlu0 %1914
      %1916 = vrot.lane.b32.xlu0 %v1888, 48
      %v1917 = vpop.permute.xlu0 %1916
      %1918 = vrot.lane.b32.xlu0 %v1889, 48
      %v1919 = vpop.permute.xlu0 %1918
      %1920 = vrot.lane.b32.xlu0 %v1890, 48
      %v1921 = vpop.permute.xlu0 %1920
      %1922 = vrot.lane.b32.xlu0 %v1891, 48
      %v1923 = vpop.permute.xlu0 %1922
      %v1940 = vunpack.c.l.b16 %v868
      %v1941 = vunpack.c.l.b16 %v871
      %v1942 = vunpack.c.l.b16 %v874
      %v1943 = vunpack.c.l.b16 %v877
      %v1944 = vunpack.c.l.b16 %v880
      %v1945 = vunpack.c.l.b16 %v883
      %v1946 = vunpack.c.l.b16 %v886
      %v1947 = vunpack.c.l.b16 %v889
      %v1948 = vunpack.c.l.b16 %v892
      %v1949 = vunpack.c.l.b16 %v895
      %v1950 = vunpack.c.l.b16 %v898
      %v1951 = vunpack.c.l.b16 %v901
      %v1952 = vunpack.c.l.b16 %v904
      %v1953 = vunpack.c.l.b16 %v907
      %v1954 = vunpack.c.l.b16 %v910
      %v1955 = vunpack.c.l.b16 %v913
      %v1956 = vpack.c.b16 %v1940, %v1940
      %v1957 = vpack.c.b16 %v1941, %v1941
      %v1958 = vpack.c.b16 %v1942, %v1942
      %v1959 = vpack.c.b16 %v1943, %v1943
      %v1960 = vpack.c.b16 %v1944, %v1944
      %v1961 = vpack.c.b16 %v1945, %v1945
      %v1962 = vpack.c.b16 %v1946, %v1946
      %v1963 = vpack.c.b16 %v1947, %v1947
      %v1964 = vpack.c.b16 %v1948, %v1948
      %v1965 = vpack.c.b16 %v1949, %v1949
      %v1966 = vpack.c.b16 %v1950, %v1950
      %v1967 = vpack.c.b16 %v1951, %v1951
      %v1968 = vpack.c.b16 %v1952, %v1952
      %v1969 = vpack.c.b16 %v1953, %v1953
      %v1970 = vpack.c.b16 %v1954, %v1954
      %v1971 = vpack.c.b16 %v1955, %v1955
      %v1973 = vshrl.u32 %v1876, 16
      %v1975 = vshll.u32 %v1876, 16
      %v1977 = vrot.slane %v1975, 1
      %v1978 = vor.u32 %v1973, %v1977
      %v1980 = vshll.u32 %v1956, 16
      %v1982 = vrot.slane %v1980, 1
      %v1983 = vsel %vm1042, %v1978, %v1982
      %v1985 = vshrl.u32 %v1877, 16
      %v1987 = vshll.u32 %v1877, 16
      %v1989 = vrot.slane %v1987, 1
      %v1990 = vor.u32 %v1985, %v1989
      %v1992 = vshll.u32 %v1957, 16
      %v1994 = vrot.slane %v1992, 1
      %v1995 = vsel %vm1042, %v1990, %v1994
      %v1997 = vshrl.u32 %v1878, 16
      %v1999 = vshll.u32 %v1878, 16
      %v2001 = vrot.slane %v1999, 1
      %v2002 = vor.u32 %v1997, %v2001
      %v2004 = vshll.u32 %v1958, 16
      %v2006 = vrot.slane %v2004, 1
      %v2007 = vsel %vm1042, %v2002, %v2006
      %v2009 = vshrl.u32 %v1879, 16
      %v2011 = vshll.u32 %v1879, 16
      %v2013 = vrot.slane %v2011, 1
      %v2014 = vor.u32 %v2009, %v2013
      %v2016 = vshll.u32 %v1959, 16
      %v2018 = vrot.slane %v2016, 1
      %v2019 = vsel %vm1042, %v2014, %v2018
      %v2021 = vshrl.u32 %v1880, 16
      %v2023 = vshll.u32 %v1880, 16
      %v2025 = vrot.slane %v2023, 1
      %v2026 = vor.u32 %v2021, %v2025
      %v2028 = vshll.u32 %v1960, 16
      %v2030 = vrot.slane %v2028, 1
      %v2031 = vsel %vm1042, %v2026, %v2030
      %v2033 = vshrl.u32 %v1881, 16
      %v2035 = vshll.u32 %v1881, 16
      %v2037 = vrot.slane %v2035, 1
      %v2038 = vor.u32 %v2033, %v2037
      %v2040 = vshll.u32 %v1961, 16
      %v2042 = vrot.slane %v2040, 1
      %v2043 = vsel %vm1042, %v2038, %v2042
      %v2045 = vshrl.u32 %v1882, 16
      %v2047 = vshll.u32 %v1882, 16
      %v2049 = vrot.slane %v2047, 1
      %v2050 = vor.u32 %v2045, %v2049
      %v2052 = vshll.u32 %v1962, 16
      %v2054 = vrot.slane %v2052, 1
      %v2055 = vsel %vm1042, %v2050, %v2054
      %v2057 = vshrl.u32 %v1883, 16
      %v2059 = vshll.u32 %v1883, 16
      %v2061 = vrot.slane %v2059, 1
      %v2062 = vor.u32 %v2057, %v2061
      %v2064 = vshll.u32 %v1963, 16
      %v2066 = vrot.slane %v2064, 1
      %v2067 = vsel %vm1042, %v2062, %v2066
      %v2069 = vshrl.u32 %v1884, 16
      %v2071 = vshll.u32 %v1884, 16
      %v2073 = vrot.slane %v2071, 1
      %v2074 = vor.u32 %v2069, %v2073
      %v2076 = vshll.u32 %v1964, 16
      %v2078 = vrot.slane %v2076, 1
      %v2079 = vsel %vm1042, %v2074, %v2078
      %v2081 = vshrl.u32 %v1885, 16
      %v2083 = vshll.u32 %v1885, 16
      %v2085 = vrot.slane %v2083, 1
      %v2086 = vor.u32 %v2081, %v2085
      %v2088 = vshll.u32 %v1965, 16
      %v2090 = vrot.slane %v2088, 1
      %v2091 = vsel %vm1042, %v2086, %v2090
      %v2093 = vshrl.u32 %v1886, 16
      %v2095 = vshll.u32 %v1886, 16
      %v2097 = vrot.slane %v2095, 1
      %v2098 = vor.u32 %v2093, %v2097
      %v2100 = vshll.u32 %v1966, 16
      %v2102 = vrot.slane %v2100, 1
      %v2103 = vsel %vm1042, %v2098, %v2102
      %v2105 = vshrl.u32 %v1887, 16
      %v2107 = vshll.u32 %v1887, 16
      %v2109 = vrot.slane %v2107, 1
      %v2110 = vor.u32 %v2105, %v2109
      %v2112 = vshll.u32 %v1967, 16
      %v2114 = vrot.slane %v2112, 1
      %v2115 = vsel %vm1042, %v2110, %v2114
      %v2117 = vshrl.u32 %v1888, 16
      %v2119 = vshll.u32 %v1888, 16
      %v2121 = vrot.slane %v2119, 1
      %v2122 = vor.u32 %v2117, %v2121
      %v2124 = vshll.u32 %v1968, 16
      %v2126 = vrot.slane %v2124, 1
      %v2127 = vsel %vm1042, %v2122, %v2126
      %v2129 = vshrl.u32 %v1889, 16
      %v2131 = vshll.u32 %v1889, 16
      %v2133 = vrot.slane %v2131, 1
      %v2134 = vor.u32 %v2129, %v2133
      %v2136 = vshll.u32 %v1969, 16
      %v2138 = vrot.slane %v2136, 1
      %v2139 = vsel %vm1042, %v2134, %v2138
      %v2141 = vshrl.u32 %v1890, 16
      %v2143 = vshll.u32 %v1890, 16
      %v2145 = vrot.slane %v2143, 1
      %v2146 = vor.u32 %v2141, %v2145
      %v2148 = vshll.u32 %v1970, 16
      %v2150 = vrot.slane %v2148, 1
      %v2151 = vsel %vm1042, %v2146, %v2150
      %v2153 = vshrl.u32 %v1891, 16
      %v2155 = vshll.u32 %v1891, 16
      %v2157 = vrot.slane %v2155, 1
      %v2158 = vor.u32 %v2153, %v2157
      %v2160 = vshll.u32 %v1971, 16
      %v2162 = vrot.slane %v2160, 1
      %v2163 = vsel %vm1042, %v2158, %v2162
      %2164 = vrot.lane.b32.xlu0 %v1983, 56
      %v2165 = vpop.permute.xlu0 %2164
      %2166 = vrot.lane.b32.xlu0 %v1995, 56
      %v2167 = vpop.permute.xlu0 %2166
      %2168 = vrot.lane.b32.xlu0 %v2007, 56
      %v2169 = vpop.permute.xlu0 %2168
      %2170 = vrot.lane.b32.xlu0 %v2019, 56
      %v2171 = vpop.permute.xlu0 %2170
      %2172 = vrot.lane.b32.xlu0 %v2031, 56
      %v2173 = vpop.permute.xlu0 %2172
      %2174 = vrot.lane.b32.xlu0 %v2043, 56
      %v2175 = vpop.permute.xlu0 %2174
      %2176 = vrot.lane.b32.xlu0 %v2055, 56
      %v2177 = vpop.permute.xlu0 %2176
      %2178 = vrot.lane.b32.xlu0 %v2067, 56
      %v2179 = vpop.permute.xlu0 %2178
      %2180 = vrot.lane.b32.xlu0 %v2079, 56
      %v2181 = vpop.permute.xlu0 %2180
      %2182 = vrot.lane.b32.xlu0 %v2091, 56
      %v2183 = vpop.permute.xlu0 %2182
      %2184 = vrot.lane.b32.xlu0 %v2103, 56
      %v2185 = vpop.permute.xlu0 %2184
      %2186 = vrot.lane.b32.xlu0 %v2115, 56
      %v2187 = vpop.permute.xlu0 %2186
      %2188 = vrot.lane.b32.xlu0 %v2127, 56
      %v2189 = vpop.permute.xlu0 %2188
      %2190 = vrot.lane.b32.xlu0 %v2139, 56
      %v2191 = vpop.permute.xlu0 %2190
      %2192 = vrot.lane.b32.xlu0 %v2151, 56
      %v2193 = vpop.permute.xlu0 %2192
      %2194 = vrot.lane.b32.xlu0 %v2163, 56
      %v2195 = vpop.permute.xlu0 %2194
      %v2196 = vrot.slane %v1876, 1
      %v2197 = vrot.slane %v1956, 1
      %v2198 = vsel %vm1267, %v2196, %v2197
      %v2199 = vrot.slane %v1877, 1
      %v2200 = vrot.slane %v1957, 1
      %v2201 = vsel %vm1267, %v2199, %v2200
      %v2202 = vrot.slane %v1878, 1
      %v2203 = vrot.slane %v1958, 1
      %v2204 = vsel %vm1267, %v2202, %v2203
      %v2205 = vrot.slane %v1879, 1
      %v2206 = vrot.slane %v1959, 1
      %v2207 = vsel %vm1267, %v2205, %v2206
      %v2208 = vrot.slane %v1880, 1
      %v2209 = vrot.slane %v1960, 1
      %v2210 = vsel %vm1267, %v2208, %v2209
      %v2211 = vrot.slane %v1881, 1
      %v2212 = vrot.slane %v1961, 1
      %v2213 = vsel %vm1267, %v2211, %v2212
      %v2214 = vrot.slane %v1882, 1
      %v2215 = vrot.slane %v1962, 1
      %v2216 = vsel %vm1267, %v2214, %v2215
      %v2217 = vrot.slane %v1883, 1
      %v2218 = vrot.slane %v1963, 1
      %v2219 = vsel %vm1267, %v2217, %v2218
      %v2220 = vrot.slane %v1884, 1
      %v2221 = vrot.slane %v1964, 1
      %v2222 = vsel %vm1267, %v2220, %v2221
      %v2223 = vrot.slane %v1885, 1
      %v2224 = vrot.slane %v1965, 1
      %v2225 = vsel %vm1267, %v2223, %v2224
      %v2226 = vrot.slane %v1886, 1
      %v2227 = vrot.slane %v1966, 1
      %v2228 = vsel %vm1267, %v2226, %v2227
      %v2229 = vrot.slane %v1887, 1
      %v2230 = vrot.slane %v1967, 1
      %v2231 = vsel %vm1267, %v2229, %v2230
      %v2232 = vrot.slane %v1888, 1
      %v2233 = vrot.slane %v1968, 1
      %v2234 = vsel %vm1267, %v2232, %v2233
      %v2235 = vrot.slane %v1889, 1
      %v2236 = vrot.slane %v1969, 1
      %v2237 = vsel %vm1267, %v2235, %v2236
      %v2238 = vrot.slane %v1890, 1
      %v2239 = vrot.slane %v1970, 1
      %v2240 = vsel %vm1267, %v2238, %v2239
      %v2241 = vrot.slane %v1891, 1
      %v2242 = vrot.slane %v1971, 1
      %v2243 = vsel %vm1267, %v2241, %v2242
      %2244 = vrot.lane.b32.xlu0 %v2198, 64
      %v2245 = vpop.permute.xlu0 %2244
      %2246 = vrot.lane.b32.xlu0 %v2201, 64
      %v2247 = vpop.permute.xlu0 %2246
      %2248 = vrot.lane.b32.xlu0 %v2204, 64
      %v2249 = vpop.permute.xlu0 %2248
      %2250 = vrot.lane.b32.xlu0 %v2207, 64
      %v2251 = vpop.permute.xlu0 %2250
      %2252 = vrot.lane.b32.xlu0 %v2210, 64
      %v2253 = vpop.permute.xlu0 %2252
      %2254 = vrot.lane.b32.xlu0 %v2213, 64
      %v2255 = vpop.permute.xlu0 %2254
      %2256 = vrot.lane.b32.xlu0 %v2216, 64
      %v2257 = vpop.permute.xlu0 %2256
      %2258 = vrot.lane.b32.xlu0 %v2219, 64
      %v2259 = vpop.permute.xlu0 %2258
      %2260 = vrot.lane.b32.xlu0 %v2222, 64
      %v2261 = vpop.permute.xlu0 %2260
      %2262 = vrot.lane.b32.xlu0 %v2225, 64
      %v2263 = vpop.permute.xlu0 %2262
      %2264 = vrot.lane.b32.xlu0 %v2228, 64
      %v2265 = vpop.permute.xlu0 %2264
      %2266 = vrot.lane.b32.xlu0 %v2231, 64
      %v2267 = vpop.permute.xlu0 %2266
      %2268 = vrot.lane.b32.xlu0 %v2234, 64
      %v2269 = vpop.permute.xlu0 %2268
      %2270 = vrot.lane.b32.xlu0 %v2237, 64
      %v2271 = vpop.permute.xlu0 %2270
      %2272 = vrot.lane.b32.xlu0 %v2240, 64
      %v2273 = vpop.permute.xlu0 %2272
      %2274 = vrot.lane.b32.xlu0 %v2243, 64
      %v2275 = vpop.permute.xlu0 %2274
      %vm2276 = vcmask 64512
      %v2278 = vsel %vm2276, %v978, %v1236
      %v2280 = vsel %vm2276, %v979, %v1238
      %v2282 = vsel %vm2276, %v980, %v1240
      %v2284 = vsel %vm2276, %v981, %v1242
      %v2286 = vsel %vm2276, %v982, %v1244
      %v2288 = vsel %vm2276, %v983, %v1246
      %v2290 = vsel %vm2276, %v984, %v1248
      %v2292 = vsel %vm2276, %v985, %v1250
      %v2294 = vsel %vm2276, %v986, %v1252
      %v2296 = vsel %vm2276, %v987, %v1254
      %v2298 = vsel %vm2276, %v988, %v1256
      %v2300 = vsel %vm2276, %v989, %v1258
      %v2302 = vsel %vm2276, %v990, %v1260
      %v2304 = vsel %vm2276, %v991, %v1262
      %v2306 = vsel %vm2276, %v992, %v1264
      %v2308 = vsel %vm2276, %v993, %v1266
      %vm2309 = vcmask 130048
      %v2311 = vsel %vm2309, %v2278, %v1317
      %v2313 = vsel %vm2309, %v2280, %v1319
      %v2315 = vsel %vm2309, %v2282, %v1321
      %v2317 = vsel %vm2309, %v2284, %v1323
      %v2319 = vsel %vm2309, %v2286, %v1325
      %v2321 = vsel %vm2309, %v2288, %v1327
      %v2323 = vsel %vm2309, %v2290, %v1329
      %v2325 = vsel %vm2309, %v2292, %v1331
      %v2327 = vsel %vm2309, %v2294, %v1333
      %v2329 = vsel %vm2309, %v2296, %v1335
      %v2331 = vsel %vm2309, %v2298, %v1337
      %v2333 = vsel %vm2309, %v2300, %v1339
      %v2335 = vsel %vm2309, %v2302, %v1341
      %v2337 = vsel %vm2309, %v2304, %v1343
      %v2339 = vsel %vm2309, %v2306, %v1345
      %v2341 = vsel %vm2309, %v2308, %v1347
      %vm2342 = vcmask 195584
      %v2344 = vsel %vm2342, %v2311, %v1429
      %v2346 = vsel %vm2342, %v2313, %v1431
      %v2348 = vsel %vm2342, %v2315, %v1433
      %v2350 = vsel %vm2342, %v2317, %v1435
      %v2352 = vsel %vm2342, %v2319, %v1437
      %v2354 = vsel %vm2342, %v2321, %v1439
      %v2356 = vsel %vm2342, %v2323, %v1441
      %v2358 = vsel %vm2342, %v2325, %v1443
      %v2360 = vsel %vm2342, %v2327, %v1445
      %v2362 = vsel %vm2342, %v2329, %v1447
      %v2364 = vsel %vm2342, %v2331, %v1449
      %v2366 = vsel %vm2342, %v2333, %v1451
      %v2368 = vsel %vm2342, %v2335, %v1453
      %v2370 = vsel %vm2342, %v2337, %v1455
      %v2372 = vsel %vm2342, %v2339, %v1457
      %v2374 = vsel %vm2342, %v2341, %v1459
      %vm2375 = vcmask 261120
      %v2377 = vsel %vm2375, %v2344, %v1701
      %v2379 = vsel %vm2375, %v2346, %v1703
      %v2381 = vsel %vm2375, %v2348, %v1705
      %v2383 = vsel %vm2375, %v2350, %v1707
      %v2385 = vsel %vm2375, %v2352, %v1709
      %v2387 = vsel %vm2375, %v2354, %v1711
      %v2389 = vsel %vm2375, %v2356, %v1713
      %v2391 = vsel %vm2375, %v2358, %v1715
      %v2393 = vsel %vm2375, %v2360, %v1717
      %v2395 = vsel %vm2375, %v2362, %v1719
      %v2397 = vsel %vm2375, %v2364, %v1721
      %v2399 = vsel %vm2375, %v2366, %v1723
      %v2401 = vsel %vm2375, %v2368, %v1725
      %v2403 = vsel %vm2375, %v2370, %v1727
      %v2405 = vsel %vm2375, %v2372, %v1729
      %v2407 = vsel %vm2375, %v2374, %v1731
      %vm2408 = vcmask 326656
      %v2410 = vsel %vm2408, %v2377, %v1781
      %v2412 = vsel %vm2408, %v2379, %v1783
      %v2414 = vsel %vm2408, %v2381, %v1785
      %v2416 = vsel %vm2408, %v2383, %v1787
      %v2418 = vsel %vm2408, %v2385, %v1789
      %v2420 = vsel %vm2408, %v2387, %v1791
      %v2422 = vsel %vm2408, %v2389, %v1793
      %v2424 = vsel %vm2408, %v2391, %v1795
      %v2426 = vsel %vm2408, %v2393, %v1797
      %v2428 = vsel %vm2408, %v2395, %v1799
      %v2430 = vsel %vm2408, %v2397, %v1801
      %v2432 = vsel %vm2408, %v2399, %v1803
      %v2434 = vsel %vm2408, %v2401, %v1805
      %v2436 = vsel %vm2408, %v2403, %v1807
      %v2438 = vsel %vm2408, %v2405, %v1809
      %v2440 = vsel %vm2408, %v2407, %v1811
      %vm2441 = vcmask 392192
      %v2443 = vsel %vm2441, %v2410, %v1893
      %v2445 = vsel %vm2441, %v2412, %v1895
      %v2447 = vsel %vm2441, %v2414, %v1897
      %v2449 = vsel %vm2441, %v2416, %v1899
      %v2451 = vsel %vm2441, %v2418, %v1901
      %v2453 = vsel %vm2441, %v2420, %v1903
      %v2455 = vsel %vm2441, %v2422, %v1905
      %v2457 = vsel %vm2441, %v2424, %v1907
      %v2459 = vsel %vm2441, %v2426, %v1909
      %v2461 = vsel %vm2441, %v2428, %v1911
      %v2463 = vsel %vm2441, %v2430, %v1913
      %v2465 = vsel %vm2441, %v2432, %v1915
      %v2467 = vsel %vm2441, %v2434, %v1917
      %v2469 = vsel %vm2441, %v2436, %v1919
      %v2471 = vsel %vm2441, %v2438, %v1921
      %v2473 = vsel %vm2441, %v2440, %v1923
      %vm2474 = vcmask 457728
      %v2476 = vsel %vm2474, %v2443, %v2165
      %v2478 = vsel %vm2474, %v2445, %v2167
      %v2480 = vsel %vm2474, %v2447, %v2169
      %v2482 = vsel %vm2474, %v2449, %v2171
      %v2484 = vsel %vm2474, %v2451, %v2173
      %v2486 = vsel %vm2474, %v2453, %v2175
      %v2488 = vsel %vm2474, %v2455, %v2177
      %v2490 = vsel %vm2474, %v2457, %v2179
      %v2492 = vsel %vm2474, %v2459, %v2181
      %v2494 = vsel %vm2474, %v2461, %v2183
      %v2496 = vsel %vm2474, %v2463, %v2185
      %v2498 = vsel %vm2474, %v2465, %v2187
      %v2500 = vsel %vm2474, %v2467, %v2189
      %v2502 = vsel %vm2474, %v2469, %v2191
      %v2504 = vsel %vm2474, %v2471, %v2193
      %v2506 = vsel %vm2474, %v2473, %v2195
      %vm2507 = vcmask 523264
      %v2509 = vsel %vm2507, %v2476, %v2245
      %v2511 = vsel %vm2507, %v2478, %v2247
      %v2513 = vsel %vm2507, %v2480, %v2249
      %v2515 = vsel %vm2507, %v2482, %v2251
      %v2517 = vsel %vm2507, %v2484, %v2253
      %v2519 = vsel %vm2507, %v2486, %v2255
      %v2521 = vsel %vm2507, %v2488, %v2257
      %v2523 = vsel %vm2507, %v2490, %v2259
      %v2525 = vsel %vm2507, %v2492, %v2261
      %v2527 = vsel %vm2507, %v2494, %v2263
      %v2529 = vsel %vm2507, %v2496, %v2265
      %v2531 = vsel %vm2507, %v2498, %v2267
      %v2533 = vsel %vm2507, %v2500, %v2269
      %v2535 = vsel %vm2507, %v2502, %v2271
      %v2537 = vsel %vm2507, %v2504, %v2273
      %v2539 = vsel %vm2507, %v2506, %v2275
      %v2540 = vld [vmem:[%s1] sm:$0xf]
      %v2541 = vld [vmem:[%s1 + $0x4] sm:$0xf]
      %v2542 = vld [vmem:[%s1 + $0x8] sm:$0xf]
      %v2543 = vld [vmem:[%s1 + $0xc] sm:$0xf]
      %v2544 = vld [vmem:[%s1 + $0x10] sm:$0xf]
      %v2545 = vld [vmem:[%s1 + $0x14] sm:$0xf]
      %v2546 = vld [vmem:[%s1 + $0x18] sm:$0xf]
      %v2547 = vld [vmem:[%s1 + $0x1c] sm:$0xf]
      %v2548 = vld [vmem:[%s1 + $0x20] sm:$0xf]
      %v2549 = vld [vmem:[%s2] sm:$0x1]
      %v2550 = vlaneseq
      %v2551 = vshrl.u32 %v2550, 7
      %v2552 = vsub.s32 0, %v2551
      %v2553 = vrot.slane %v2549, %v2552
      %v2563 = vunpack.c.l.b16 %v2540
      %v2564 = vunpack.c.l.b16 %v2541
      %v2565 = vunpack.c.l.b16 %v2542
      %v2566 = vunpack.c.l.b16 %v2543
      %v2567 = vunpack.c.l.b16 %v2544
      %v2568 = vunpack.c.l.b16 %v2545
      %v2569 = vunpack.c.l.b16 %v2546
      %v2570 = vunpack.c.l.b16 %v2547
      %v2571 = vunpack.c.l.b16 %v2548
      %v2572 = vpack.c.b16 %v2564, %v2563
      %v2573 = vpack.c.b16 %v2566, %v2565
      %v2574 = vpack.c.b16 %v2568, %v2567
      %v2575 = vpack.c.b16 %v2570, %v2569
      %v2576 = vpack.c.b16 %v2571, %v2571
      %vm2581 = vcmask 588800
      %v2582 = vsel %vm2581, %v2509, 0
      %v2584 = vsel %vm2581, %v2511, 0
      %v2586 = vsel %vm2581, %v2513, 0
      %v2588 = vsel %vm2581, %v2515, 0
      %v2590 = vsel %vm2581, %v2517, 0
      %v2592 = vsel %vm2581, %v2519, 0
      %v2594 = vsel %vm2581, %v2521, 0
      %v2596 = vsel %vm2581, %v2523, 0
      %v2598 = vsel %vm2581, %v2525, 0
      %v2600 = vsel %vm2581, %v2527, 0
      %v2602 = vsel %vm2581, %v2529, 0
      %v2604 = vsel %vm2581, %v2531, 0
      %v2606 = vsel %vm2581, %v2533, 0
      %v2608 = vsel %vm2581, %v2535, 0
      %v2610 = vsel %vm2581, %v2537, 0
      %v2612 = vsel %vm2581, %v2539, 0
      %vm2614 = vcmask 1043456
      %v2616 = vsel %vm2614, %v2576, 0
      %2618 = vmatprep.subr.bf16.mxu0 0
      %2619 = vmatpush1.bf16.msra.mxu0 %v2572
      %2620 = vmatprep.subr.bf16.mxu0 0
      %2621 = vmatpush1.bf16.msra.mxu0 %v2573
      %2622 = vmatprep.subr.bf16.mxu0 0
      %2623 = vmatpush1.bf16.msra.mxu0 %v2574
      %2624 = vmatprep.subr.bf16.mxu0 0
      %2625 = vmatpush1.bf16.msra.mxu0 %v2575
      %2626 = vmatprep.subr.bf16.mxu0 0
      %2627 = vmatpush1.bf16.msra.mxu0 %v2616
      %2628 = vmatprep.subr.bf16.mxu0 0
      %2629 = vmatpush1.bf16.msra.mxu0 0
      %2630 = vmatprep.subr.bf16.mxu0 0
      %2631 = vmatpush1.bf16.msra.mxu0 0
      %2632 = vmatprep.subr.bf16.mxu0 0
      %2633 = vmatpush1.bf16.msra.mxu0 0
      %2634 = vmatprep.subr.bf16.mxu0 0
      %2635 = vmatpush1.bf16.msra.mxu0 0
      %2636 = vmatprep.subr.bf16.mxu0 0
      %2637 = vmatpush1.bf16.msra.mxu0 0
      %2638 = vmatprep.subr.bf16.mxu0 0
      %2639 = vmatpush1.bf16.msra.mxu0 0
      %2640 = vmatprep.subr.bf16.mxu0 0
      %2641 = vmatpush1.bf16.msra.mxu0 0
      %2642 = vmatprep.subr.bf16.mxu0 0
      %2643 = vmatpush1.bf16.msra.mxu0 0
      %2644 = vmatprep.subr.bf16.mxu0 0
      %2645 = vmatpush1.bf16.msra.mxu0 0
      %2646 = vmatprep.subr.bf16.mxu0 0
      %2647 = vmatpush1.bf16.msra.mxu0 0
      %2648 = vmatprep.subr.bf16.mxu0 0
      %2649 = vmatpush1.bf16.msra.mxu0 0
      %2650 = vmatprep.mubr.bf16.mxu0 0
      %2651 = vmatmul.mubr.bf16.gmra.mrb[0].mxu0 %v2582
      %v2652 = vpop.f32.mrb[0].mxu0
      %v2653 = vadd.f32 %v2553, %v2652
      %v2654 = vpop.f32.mrb[0].mxu0
      %v2655 = vpop.f32.mrb[0].mxu0
      %v2656 = vadd.f32 %v2553, %v2655
      %v2657 = vpop.f32.mrb[0].mxu0
      %2658 = vmatprep.mubr.bf16.mxu0 0
      %2659 = vmatmul.mubr.bf16.gmra.mrb[0].mxu0 %v2584
      %v2660 = vpop.f32.mrb[0].mxu0
      %v2661 = vadd.f32 %v2553, %v2660
      %v2662 = vpop.f32.mrb[0].mxu0
      %v2663 = vpop.f32.mrb[0].mxu0
      %v2664 = vadd.f32 %v2553, %v2663
      %v2665 = vpop.f32.mrb[0].mxu0
      %2666 = vmatprep.mubr.bf16.mxu0 0
      %2667 = vmatmul.mubr.bf16.gmra.mrb[0].mxu0 %v2586
      %v2668 = vpop.f32.mrb[0].mxu0
      %v2669 = vadd.f32 %v2553, %v2668
      %v2670 = vpop.f32.mrb[0].mxu0
      %v2671 = vpop.f32.mrb[0].mxu0
      %v2672 = vadd.f32 %v2553, %v2671
      %v2673 = vpop.f32.mrb[0].mxu0
      %2674 = vmatprep.mubr.bf16.mxu0 0
      %2675 = vmatmul.mubr.bf16.gmra.mrb[0].mxu0 %v2588
      %v2676 = vpop.f32.mrb[0].mxu0
      %v2677 = vadd.f32 %v2553, %v2676
      %v2678 = vpop.f32.mrb[0].mxu0
      %v2679 = vpop.f32.mrb[0].mxu0
      %v2680 = vadd.f32 %v2553, %v2679
      %v2681 = vpop.f32.mrb[0].mxu0
      %2682 = vmatprep.mubr.bf16.mxu0 0
      %2683 = vmatmul.mubr.bf16.gmra.mrb[0].mxu0 %v2590
      %v2684 = vpop.f32.mrb[0].mxu0
      %v2685 = vadd.f32 %v2553, %v2684
      %v2686 = vpop.f32.mrb[0].mxu0
      %v2687 = vpop.f32.mrb[0].mxu0
      %v2688 = vadd.f32 %v2553, %v2687
      %v2689 = vpop.f32.mrb[0].mxu0
      %2690 = vmatprep.mubr.bf16.mxu0 0
      %2691 = vmatmul.mubr.bf16.gmra.mrb[0].mxu0 %v2592
      %v2692 = vpop.f32.mrb[0].mxu0
      %v2693 = vadd.f32 %v2553, %v2692
      %v2694 = vpop.f32.mrb[0].mxu0
      %v2695 = vpop.f32.mrb[0].mxu0
      %v2696 = vadd.f32 %v2553, %v2695
      %v2697 = vpop.f32.mrb[0].mxu0
      %2698 = vmatprep.mubr.bf16.mxu0 0
      %2699 = vmatmul.mubr.bf16.gmra.mrb[0].mxu0 %v2594
      %v2700 = vpop.f32.mrb[0].mxu0
      %v2701 = vadd.f32 %v2553, %v2700
      %v2702 = vpop.f32.mrb[0].mxu0
      %v2703 = vpop.f32.mrb[0].mxu0
      %v2704 = vadd.f32 %v2553, %v2703
      %v2705 = vpop.f32.mrb[0].mxu0
      %2706 = vmatprep.mubr.bf16.mxu0 0
      %2707 = vmatmul.mubr.bf16.gmra.mrb[0].mxu0 %v2596
      %v2708 = vpop.f32.mrb[0].mxu0
      %v2709 = vadd.f32 %v2553, %v2708
      %v2710 = vpop.f32.mrb[0].mxu0
      %v2711 = vpop.f32.mrb[0].mxu0
      %v2712 = vadd.f32 %v2553, %v2711
      %v2713 = vpop.f32.mrb[0].mxu0
      %2714 = vmatprep.mubr.bf16.mxu0 0
      %2715 = vmatmul.mubr.bf16.gmra.mrb[0].mxu0 %v2598
      %v2716 = vpop.f32.mrb[0].mxu0
      %v2717 = vadd.f32 %v2553, %v2716
      %v2718 = vpop.f32.mrb[0].mxu0
      %v2719 = vpop.f32.mrb[0].mxu0
      %v2720 = vadd.f32 %v2553, %v2719
      %v2721 = vpop.f32.mrb[0].mxu0
      %2722 = vmatprep.mubr.bf16.mxu0 0
      %2723 = vmatmul.mubr.bf16.gmra.mrb[0].mxu0 %v2600
      %v2724 = vpop.f32.mrb[0].mxu0
      %v2725 = vadd.f32 %v2553, %v2724
      %v2726 = vpop.f32.mrb[0].mxu0
      %v2727 = vpop.f32.mrb[0].mxu0
      %v2728 = vadd.f32 %v2553, %v2727
      %v2729 = vpop.f32.mrb[0].mxu0
      %2730 = vmatprep.mubr.bf16.mxu0 0
      %2731 = vmatmul.mubr.bf16.gmra.mrb[0].mxu0 %v2602
      %v2732 = vpop.f32.mrb[0].mxu0
      %v2733 = vadd.f32 %v2553, %v2732
      %v2734 = vpop.f32.mrb[0].mxu0
      %v2735 = vpop.f32.mrb[0].mxu0
      %v2736 = vadd.f32 %v2553, %v2735
      %v2737 = vpop.f32.mrb[0].mxu0
      %2738 = vmatprep.mubr.bf16.mxu0 0
      %2739 = vmatmul.mubr.bf16.gmra.mrb[0].mxu0 %v2604
      %v2740 = vpop.f32.mrb[0].mxu0
      %v2741 = vadd.f32 %v2553, %v2740
      %v2742 = vpop.f32.mrb[0].mxu0
      %v2743 = vpop.f32.mrb[0].mxu0
      %v2744 = vadd.f32 %v2553, %v2743
      %v2745 = vpop.f32.mrb[0].mxu0
      %2746 = vmatprep.mubr.bf16.mxu0 0
      %2747 = vmatmul.mubr.bf16.gmra.mrb[0].mxu0 %v2606
      %v2748 = vpop.f32.mrb[0].mxu0
      %v2749 = vadd.f32 %v2553, %v2748
      %v2750 = vpop.f32.mrb[0].mxu0
      %v2751 = vpop.f32.mrb[0].mxu0
      %v2752 = vadd.f32 %v2553, %v2751
      %v2753 = vpop.f32.mrb[0].mxu0
      %2754 = vmatprep.mubr.bf16.mxu0 0
      %2755 = vmatmul.mubr.bf16.gmra.mrb[0].mxu0 %v2608
      %v2756 = vpop.f32.mrb[0].mxu0
      %v2757 = vadd.f32 %v2553, %v2756
      %v2758 = vpop.f32.mrb[0].mxu0
      %v2759 = vpop.f32.mrb[0].mxu0
      %v2760 = vadd.f32 %v2553, %v2759
      %v2761 = vpop.f32.mrb[0].mxu0
      %2762 = vmatprep.mubr.bf16.mxu0 0
      %2763 = vmatmul.mubr.bf16.gmra.mrb[0].mxu0 %v2610
      %v2764 = vpop.f32.mrb[0].mxu0
      %v2765 = vadd.f32 %v2553, %v2764
      %v2766 = vpop.f32.mrb[0].mxu0
      %v2767 = vpop.f32.mrb[0].mxu0
      %v2768 = vadd.f32 %v2553, %v2767
      %v2769 = vpop.f32.mrb[0].mxu0
      %2770 = vmatprep.mubr.bf16.mxu0 0
      %2771 = vmatmul.mubr.bf16.gmra.mrb[0].mxu0 %v2612
      %v2772 = vpop.f32.mrb[0].mxu0
      %v2773 = vadd.f32 %v2553, %v2772
      %v2774 = vpop.f32.mrb[0].mxu0
      %v2775 = vpop.f32.mrb[0].mxu0
      %v2776 = vadd.f32 %v2553, %v2775
      %v2777 = vpop.f32.mrb[0].mxu0
      %2778 = vdwg.mxu0
      %v2779 = vmax.f32 %v2653, 0.0
      %v2780 = vmax.f32 %v2656, 0.0
      %v2781 = vmax.f32 %v2661, 0.0
      %v2782 = vmax.f32 %v2664, 0.0
      %v2783 = vmax.f32 %v2669, 0.0
      %v2784 = vmax.f32 %v2672, 0.0
      %v2785 = vmax.f32 %v2677, 0.0
      %v2786 = vmax.f32 %v2680, 0.0
      %v2787 = vmax.f32 %v2685, 0.0
      %v2788 = vmax.f32 %v2688, 0.0
      %v2789 = vmax.f32 %v2693, 0.0
      %v2790 = vmax.f32 %v2696, 0.0
      %v2791 = vmax.f32 %v2701, 0.0
      %v2792 = vmax.f32 %v2704, 0.0
      %v2793 = vmax.f32 %v2709, 0.0
      %v2794 = vmax.f32 %v2712, 0.0
      %v2795 = vmax.f32 %v2717, 0.0
      %v2796 = vmax.f32 %v2720, 0.0
      %v2797 = vmax.f32 %v2725, 0.0
      %v2798 = vmax.f32 %v2728, 0.0
      %v2799 = vmax.f32 %v2733, 0.0
      %v2800 = vmax.f32 %v2736, 0.0
      %v2801 = vmax.f32 %v2741, 0.0
      %v2802 = vmax.f32 %v2744, 0.0
      %v2803 = vmax.f32 %v2749, 0.0
      %v2804 = vmax.f32 %v2752, 0.0
      %v2805 = vmax.f32 %v2757, 0.0
      %v2806 = vmax.f32 %v2760, 0.0
      %v2807 = vmax.f32 %v2765, 0.0
      %v2808 = vmax.f32 %v2768, 0.0
      %v2809 = vmax.f32 %v2773, 0.0
      %v2810 = vmax.f32 %v2776, 0.0
      // Predicated region
      $region41: #{convolution_block.3} parent=31 // pred_check
        %p2811 = pneg %p214
      $region42: #{convolution_block.3} parent=31 // pred_check_branch
        %2813 = sbr.rel (%p2811) target = $region44
      $region43: #{convolution_block.3} parent=31 // pred_region
        %v2814 = vld [vmem:[#allocation3] sm:$0x1]
        %v2815 = vsel %vm2276, %v2779, 0.0
        %v2816 = vsel %vm2276, %v2780, 0.0
        %v2817 = vadd.f32 %v2815, %v2816
        %v2818 = vsel %vm2276, %v2781, 0.0
        %v2819 = vadd.f32 %v2817, %v2818
        %v2820 = vsel %vm2276, %v2782, 0.0
        %v2821 = vadd.f32 %v2819, %v2820
        %v2822 = vsel %vm2276, %v2783, 0.0
        %v2823 = vadd.f32 %v2821, %v2822
        %v2824 = vsel %vm2276, %v2784, 0.0
        %v2825 = vadd.f32 %v2823, %v2824
        %v2826 = vsel %vm2276, %v2785, 0.0
        %v2827 = vadd.f32 %v2825, %v2826
        %v2828 = vsel %vm2276, %v2786, 0.0
        %v2829 = vadd.f32 %v2827, %v2828
        %v2830 = vsel %vm2276, %v2787, 0.0
        %v2831 = vadd.f32 %v2829, %v2830
        %v2832 = vsel %vm2276, %v2788, 0.0
        %v2833 = vadd.f32 %v2831, %v2832
        %v2834 = vsel %vm2276, %v2789, 0.0
        %v2835 = vadd.f32 %v2833, %v2834
        %v2836 = vsel %vm2276, %v2790, 0.0
        %v2837 = vadd.f32 %v2835, %v2836
        %v2838 = vsel %vm2276, %v2791, 0.0
        %v2839 = vadd.f32 %v2837, %v2838
        %v2840 = vsel %vm2276, %v2792, 0.0
        %v2841 = vadd.f32 %v2839, %v2840
        %v2842 = vsel %vm2276, %v2793, 0.0
        %v2843 = vadd.f32 %v2841, %v2842
        %v2844 = vsel %vm2276, %v2794, 0.0
        %v2845 = vadd.f32 %v2843, %v2844
        %v2846 = vsel %vm2276, %v2795, 0.0
        %v2847 = vadd.f32 %v2845, %v2846
        %v2848 = vsel %vm2276, %v2796, 0.0
        %v2849 = vadd.f32 %v2847, %v2848
        %v2850 = vsel %vm2276, %v2797, 0.0
        %v2851 = vadd.f32 %v2849, %v2850
        %v2852 = vsel %vm2276, %v2798, 0.0
        %v2853 = vadd.f32 %v2851, %v2852
        %v2854 = vsel %vm2276, %v2799, 0.0
        %v2855 = vadd.f32 %v2853, %v2854
        %v2856 = vsel %vm2276, %v2800, 0.0
        %v2857 = vadd.f32 %v2855, %v2856
        %v2858 = vsel %vm2276, %v2801, 0.0
        %v2859 = vadd.f32 %v2857, %v2858
        %v2860 = vsel %vm2276, %v2802, 0.0
        %v2861 = vadd.f32 %v2859, %v2860
        %v2862 = vsel %vm2276, %v2803, 0.0
        %v2863 = vadd.f32 %v2861, %v2862
        %v2864 = vsel %vm2276, %v2804, 0.0
        %v2865 = vadd.f32 %v2863, %v2864
        %v2866 = vsel %vm2276, %v2805, 0.0
        %v2867 = vadd.f32 %v2865, %v2866
        %v2868 = vsel %vm2276, %v2806, 0.0
        %v2869 = vadd.f32 %v2867, %v2868
        %v2870 = vsel %vm2276, %v2807, 0.0
        %v2871 = vadd.f32 %v2869, %v2870
        %v2872 = vsel %vm2276, %v2808, 0.0
        %v2873 = vadd.f32 %v2871, %v2872
        %v2874 = vsel %vm2276, %v2809, 0.0
        %v2875 = vadd.f32 %v2873, %v2874
        %v2876 = vsel %vm2276, %v2810, 0.0
        %v2877 = vadd.f32 %v2875, %v2876
        %v2878 = vrot.slane %v2877, 4
        %v2879 = vadd.f32 %v2877, %v2878
        %v2880 = vrot.slane %v2879, 2
        %v2881 = vadd.f32 %v2879, %v2880
        %v2882 = vrot.slane %v2881, 1
        %v2883 = vadd.f32 %v2881, %v2882
        %v2884 = vadd.f32 %v2814, %v2883
        %vm2885 = vcmask 57344
        %2886 = vst.msk [vmem:[#allocation3] sm:$0x1] %vm2885, %v2884
        %v2887 = vld [vmem:[#allocation4] sm:$0x1]
        %v2888 = vmul.f32 %v2779, %v2779
        %v2889 = vmul.f32 %v2780, %v2780
        %v2890 = vmul.f32 %v2781, %v2781
        %v2891 = vmul.f32 %v2782, %v2782
        %v2892 = vmul.f32 %v2783, %v2783
        %v2893 = vmul.f32 %v2784, %v2784
        %v2894 = vmul.f32 %v2785, %v2785
        %v2895 = vmul.f32 %v2786, %v2786
        %v2896 = vmul.f32 %v2787, %v2787
        %v2897 = vmul.f32 %v2788, %v2788
        %v2898 = vmul.f32 %v2789, %v2789
        %v2899 = vmul.f32 %v2790, %v2790
        %v2900 = vmul.f32 %v2791, %v2791
        %v2901 = vmul.f32 %v2792, %v2792
        %v2902 = vmul.f32 %v2793, %v2793
        %v2903 = vmul.f32 %v2794, %v2794
        %v2904 = vmul.f32 %v2795, %v2795
        %v2905 = vmul.f32 %v2796, %v2796
        %v2906 = vmul.f32 %v2797, %v2797
        %v2907 = vmul.f32 %v2798, %v2798
        %v2908 = vmul.f32 %v2799, %v2799
        %v2909 = vmul.f32 %v2800, %v2800
        %v2910 = vmul.f32 %v2801, %v2801
        %v2911 = vmul.f32 %v2802, %v2802
        %v2912 = vmul.f32 %v2803, %v2803
        %v2913 = vmul.f32 %v2804, %v2804
        %v2914 = vmul.f32 %v2805, %v2805
        %v2915 = vmul.f32 %v2806, %v2806
        %v2916 = vmul.f32 %v2807, %v2807
        %v2917 = vmul.f32 %v2808, %v2808
        %v2918 = vmul.f32 %v2809, %v2809
        %v2919 = vmul.f32 %v2810, %v2810
        %v2920 = vsel %vm2276, %v2888, 0.0
        %v2921 = vsel %vm2276, %v2889, 0.0
        %v2922 = vadd.f32 %v2920, %v2921
        %v2923 = vsel %vm2276, %v2890, 0.0
        %v2924 = vadd.f32 %v2922, %v2923
        %v2925 = vsel %vm2276, %v2891, 0.0
        %v2926 = vadd.f32 %v2924, %v2925
        %v2927 = vsel %vm2276, %v2892, 0.0
        %v2928 = vadd.f32 %v2926, %v2927
        %v2929 = vsel %vm2276, %v2893, 0.0
        %v2930 = vadd.f32 %v2928, %v2929
        %v2931 = vsel %vm2276, %v2894, 0.0
        %v2932 = vadd.f32 %v2930, %v2931
        %v2933 = vsel %vm2276, %v2895, 0.0
        %v2934 = vadd.f32 %v2932, %v2933
        %v2935 = vsel %vm2276, %v2896, 0.0
        %v2936 = vadd.f32 %v2934, %v2935
        %v2937 = vsel %vm2276, %v2897, 0.0
        %v2938 = vadd.f32 %v2936, %v2937
        %v2939 = vsel %vm2276, %v2898, 0.0
        %v2940 = vadd.f32 %v2938, %v2939
        %v2941 = vsel %vm2276, %v2899, 0.0
        %v2942 = vadd.f32 %v2940, %v2941
        %v2943 = vsel %vm2276, %v2900, 0.0
        %v2944 = vadd.f32 %v2942, %v2943
        %v2945 = vsel %vm2276, %v2901, 0.0
        %v2946 = vadd.f32 %v2944, %v2945
        %v2947 = vsel %vm2276, %v2902, 0.0
        %v2948 = vadd.f32 %v2946, %v2947
        %v2949 = vsel %vm2276, %v2903, 0.0
        %v2950 = vadd.f32 %v2948, %v2949
        %v2951 = vsel %vm2276, %v2904, 0.0
        %v2952 = vadd.f32 %v2950, %v2951
        %v2953 = vsel %vm2276, %v2905, 0.0
        %v2954 = vadd.f32 %v2952, %v2953
        %v2955 = vsel %vm2276, %v2906, 0.0
        %v2956 = vadd.f32 %v2954, %v2955
        %v2957 = vsel %vm2276, %v2907, 0.0
        %v2958 = vadd.f32 %v2956, %v2957
        %v2959 = vsel %vm2276, %v2908, 0.0
        %v2960 = vadd.f32 %v2958, %v2959
        %v2961 = vsel %vm2276, %v2909, 0.0
        %v2962 = vadd.f32 %v2960, %v2961
        %v2963 = vsel %vm2276, %v2910, 0.0
        %v2964 = vadd.f32 %v2962, %v2963
        %v2965 = vsel %vm2276, %v2911, 0.0
        %v2966 = vadd.f32 %v2964, %v2965
        %v2967 = vsel %vm2276, %v2912, 0.0
        %v2968 = vadd.f32 %v2966, %v2967
        %v2969 = vsel %vm2276, %v2913, 0.0
        %v2970 = vadd.f32 %v2968, %v2969
        %v2971 = vsel %vm2276, %v2914, 0.0
        %v2972 = vadd.f32 %v2970, %v2971
        %v2973 = vsel %vm2276, %v2915, 0.0
        %v2974 = vadd.f32 %v2972, %v2973
        %v2975 = vsel %vm2276, %v2916, 0.0
        %v2976 = vadd.f32 %v2974, %v2975
        %v2977 = vsel %vm2276, %v2917, 0.0
        %v2978 = vadd.f32 %v2976, %v2977
        %v2979 = vsel %vm2276, %v2918, 0.0
        %v2980 = vadd.f32 %v2978, %v2979
        %v2981 = vsel %vm2276, %v2919, 0.0
        %v2982 = vadd.f32 %v2980, %v2981
        %v2983 = vrot.slane %v2982, 4
        %v2984 = vadd.f32 %v2982, %v2983
        %v2985 = vrot.slane %v2984, 2
        %v2986 = vadd.f32 %v2984, %v2985
        %v2987 = vrot.slane %v2986, 1
        %v2988 = vadd.f32 %v2986, %v2987
        %v2989 = vadd.f32 %v2887, %v2988
        %2990 = vst.msk [vmem:[#allocation4] sm:$0x1] %vm2885, %v2989
      $region44: #{convolution_block.3} parent=31 // pred_fallthru
        _
      %p2991 = scmp.eq.s32.totalorder %s19, 1
      %p2992 = pnand %p2991, %p215
      %p2993 = pneg %p2992
      %p2994 = pnand %p2993, %p218
      %p2995 = pneg %p2994
      // Predicated region
      $region45: #{convolution_block.3} parent=31 // pred_check
        _
      $region46: #{convolution_block.3} parent=31 // pred_check_branch
        %2997 = sbr.rel (%p2994) target = $region48
      $region47: #{convolution_block.3} parent=31 // pred_region
        %v2998 = vld [vmem:[#allocation3] sm:$0x1]
        %v2999 = vmul.f32 %v2998, 0.001953125
        %v3000 = vld [vmem:[#allocation4] sm:$0x1]
        %v3001 = vmul.f32 %v3000, 0.001953125
        %v3002 = vmul.f32 %v2999, %v2999
        %v3003 = vsub.f32 %v3001, %v3002
        %v3004 = vmax.f32 %v3003, 0.0
        %v3005 = vld [vmem:[%s2 + $0x1] sm:$0x1]
        %v3006 = vadd.f32 %v3004, 1e-05
        %v3007 = vrsqrt.pop %v3006
        %v3008 = vmul.f32 %v3005, %v3007
        %vm3009 = vcmask 57344
        %3010 = vst.msk [vmem:[#allocation5] sm:$0x1] %vm3009, %v3008
        %v3011 = vld [vmem:[%s2 + $0x2] sm:$0x1]
        %v3012 = vmul.f32 %v3008, %v2999
        %v3013 = vsub.f32 %v3011, %v3012
        %3014 = vst.msk [vmem:[#allocation5 + $0x1] sm:$0x1] %vm3009, %v3013
      $region48: #{convolution_block.3} parent=31 // pred_fallthru
        _
      // Predicated region
      $region49: #{convolution_block.3} parent=31 // pred_check
        %p3015 = pneg %p2991
      $region50: #{convolution_block.3} parent=31 // pred_check_branch
        %3017 = sbr.rel (%p3015) target = $region52
      $region51: #{convolution_block.3} parent=31 // pred_region
        %v3018 = vld [vmem:[#allocation5] sm:$0x1]
        %v3019 = vlaneseq
        %v3020 = vshrl.u32 %v3019, 7
        %v3021 = vsub.s32 0, %v3020
        %v3022 = vrot.slane %v3018, %v3021
        %v3023 = vmul.f32 %v2779, %v3022
        %v3024 = vmul.f32 %v2780, %v3022
        %v3025 = vmul.f32 %v2781, %v3022
        %v3026 = vmul.f32 %v2782, %v3022
        %v3027 = vmul.f32 %v2783, %v3022
        %v3028 = vmul.f32 %v2784, %v3022
        %v3029 = vmul.f32 %v2785, %v3022
        %v3030 = vmul.f32 %v2786, %v3022
        %v3031 = vmul.f32 %v2787, %v3022
        %v3032 = vmul.f32 %v2788, %v3022
        %v3033 = vmul.f32 %v2789, %v3022
        %v3034 = vmul.f32 %v2790, %v3022
        %v3035 = vmul.f32 %v2791, %v3022
        %v3036 = vmul.f32 %v2792, %v3022
        %v3037 = vmul.f32 %v2793, %v3022
        %v3038 = vmul.f32 %v2794, %v3022
        %v3039 = vmul.f32 %v2795, %v3022
        %v3040 = vmul.f32 %v2796, %v3022
        %v3041 = vmul.f32 %v2797, %v3022
        %v3042 = vmul.f32 %v2798, %v3022
        %v3043 = vmul.f32 %v2799, %v3022
        %v3044 = vmul.f32 %v2800, %v3022
        %v3045 = vmul.f32 %v2801, %v3022
        %v3046 = vmul.f32 %v2802, %v3022
        %v3047 = vmul.f32 %v2803, %v3022
        %v3048 = vmul.f32 %v2804, %v3022
        %v3049 = vmul.f32 %v2805, %v3022
        %v3050 = vmul.f32 %v2806, %v3022
        %v3051 = vmul.f32 %v2807, %v3022
        %v3052 = vmul.f32 %v2808, %v3022
        %v3053 = vmul.f32 %v2809, %v3022
        %v3054 = vmul.f32 %v2810, %v3022
        %v3055 = vld [vmem:[#allocation5 + $0x1] sm:$0x1]
        %v3056 = vlaneseq
        %v3057 = vshrl.u32 %v3056, 7
        %v3058 = vsub.s32 0, %v3057
        %v3059 = vrot.slane %v3055, %v3058
        %v3060 = vadd.f32 %v3023, %v3059
        %v3061 = vadd.f32 %v3024, %v3059
        %v3062 = vadd.f32 %v3025, %v3059
        %v3063 = vadd.f32 %v3026, %v3059
        %v3064 = vadd.f32 %v3027, %v3059
        %v3065 = vadd.f32 %v3028, %v3059
        %v3066 = vadd.f32 %v3029, %v3059
        %v3067 = vadd.f32 %v3030, %v3059
        %v3068 = vadd.f32 %v3031, %v3059
        %v3069 = vadd.f32 %v3032, %v3059
        %v3070 = vadd.f32 %v3033, %v3059
        %v3071 = vadd.f32 %v3034, %v3059
        %v3072 = vadd.f32 %v3035, %v3059
        %v3073 = vadd.f32 %v3036, %v3059
        %v3074 = vadd.f32 %v3037, %v3059
        %v3075 = vadd.f32 %v3038, %v3059
        %v3076 = vadd.f32 %v3039, %v3059
        %v3077 = vadd.f32 %v3040, %v3059
        %v3078 = vadd.f32 %v3041, %v3059
        %v3079 = vadd.f32 %v3042, %v3059
        %v3080 = vadd.f32 %v3043, %v3059
        %v3081 = vadd.f32 %v3044, %v3059
        %v3082 = vadd.f32 %v3045, %v3059
        %v3083 = vadd.f32 %v3046, %v3059
        %v3084 = vadd.f32 %v3047, %v3059
        %v3085 = vadd.f32 %v3048, %v3059
        %v3086 = vadd.f32 %v3049, %v3059
        %v3087 = vadd.f32 %v3050, %v3059
        %v3088 = vadd.f32 %v3051, %v3059
        %v3089 = vadd.f32 %v3052, %v3059
        %v3090 = vadd.f32 %v3053, %v3059
        %v3091 = vadd.f32 %v3054, %v3059
        %3092 = vst.msk [vmem:[%s209] sm:$0xff] %vm2276, %v3060
        %3093 = vst.msk [vmem:[%s209 + $0x8] sm:$0xff] %vm2276, %v3061
        %3094 = vst.msk [vmem:[%s209 + $0x10] sm:$0xff] %vm2276, %v3062
        %3095 = vst.msk [vmem:[%s209 + $0x18] sm:$0xff] %vm2276, %v3063
        %3096 = vst.msk [vmem:[%s209 + $0x20] sm:$0xff] %vm2276, %v3064
        %3097 = vst.msk [vmem:[%s209 + $0x28] sm:$0xff] %vm2276, %v3065
        %3098 = vst.msk [vmem:[%s209 + $0x30] sm:$0xff] %vm2276, %v3066
        %3099 = vst.msk [vmem:[%s209 + $0x38] sm:$0xff] %vm2276, %v3067
        %3100 = vst.msk [vmem:[%s209 + $0x40] sm:$0xff] %vm2276, %v3068
        %3101 = vst.msk [vmem:[%s209 + $0x48] sm:$0xff] %vm2276, %v3069
        %3102 = vst.msk [vmem:[%s209 + $0x50] sm:$0xff] %vm2276, %v3070
        %3103 = vst.msk [vmem:[%s209 + $0x58] sm:$0xff] %vm2276, %v3071
        %3104 = vst.msk [vmem:[%s209 + $0x60] sm:$0xff] %vm2276, %v3072
        %3105 = vst.msk [vmem:[%s209 + $0x68] sm:$0xff] %vm2276, %v3073
        %3106 = vst.msk [vmem:[%s209 + $0x70] sm:$0xff] %vm2276, %v3074
        %3107 = vst.msk [vmem:[%s209 + $0x78] sm:$0xff] %vm2276, %v3075
        %3108 = vst.msk [vmem:[%s209 + $0x80] sm:$0xff] %vm2276, %v3076
        %3109 = vst.msk [vmem:[%s209 + $0x88] sm:$0xff] %vm2276, %v3077
        %3110 = vst.msk [vmem:[%s209 + $0x90] sm:$0xff] %vm2276, %v3078
        %3111 = vst.msk [vmem:[%s209 + $0x98] sm:$0xff] %vm2276, %v3079
        %3112 = vst.msk [vmem:[%s209 + $0xa0] sm:$0xff] %vm2276, %v3080
        %3113 = vst.msk [vmem:[%s209 + $0xa8] sm:$0xff] %vm2276, %v3081
        %3114 = vst.msk [vmem:[%s209 + $0xb0] sm:$0xff] %vm2276, %v3082
        %3115 = vst.msk [vmem:[%s209 + $0xb8] sm:$0xff] %vm2276, %v3083
        %3116 = vst.msk [vmem:[%s209 + $0xc0] sm:$0xff] %vm2276, %v3084
        %3117 = vst.msk [vmem:[%s209 + $0xc8] sm:$0xff] %vm2276, %v3085
        %3118 = vst.msk [vmem:[%s209 + $0xd0] sm:$0xff] %vm2276, %v3086
        %3119 = vst.msk [vmem:[%s209 + $0xd8] sm:$0xff] %vm2276, %v3087
        %3120 = vst.msk [vmem:[%s209 + $0xe0] sm:$0xff] %vm2276, %v3088
        %3121 = vst.msk [vmem:[%s209 + $0xe8] sm:$0xff] %vm2276, %v3089
        %3122 = vst.msk [vmem:[%s209 + $0xf0] sm:$0xff] %vm2276, %v3090
        %3123 = vst.msk [vmem:[%s209 + $0xf8] sm:$0xff] %vm2276, %v3091
      $region52: #{convolution_block.3} parent=31 // pred_fallthru
        _
      %s3124 = smul.u32 %s19, %s20
      %s3125 = smul.u32 %s19, %s21
      %s3126 = smul.u32 16, %s3125
      %p3127 = scmp.lt.s32.totalorder %s3124, 1
      %s3128 = scalar_select %p3127, %s3124, 1
      %p3129 = scmp.lt.s32.totalorder %s3126, 15
      %s3130 = scalar_select %p3129, %s3126, 15
      %s3131 = smul.addr %s3130, 2
      %s3132 = smul.addr %s3128, 32
      %s3133 = sadd.s32 %s3131, %s3132
      %s3134 = smul.addr %s3133, 8
      %s3135 = scalar_lea.vmem %s3, %s3134
      // Predicated region
      $region53: #{convolution_block.3} parent=31 // pred_check
        %p3136 = pneg %p125
      $region54: #{convolution_block.3} parent=31 // pred_check_branch
        %3138 = sbr.rel (%p3136) target = $region56
      $region55: #{convolution_block.3} parent=31 // pred_region
        %s3139 = smul.u32 %s19, %s20
        %s3140 = smul.u32 %s19, %s21
        %s3141 = smul.u32 16, %s3140
      $region56: #{convolution_block.3} parent=31 // pred_fallthru
        _
    $region32: #{convolution_block.3} parent=5 // pred_fallthru
      _
    %p3142 = scmp.le.s32.totalorder 2, %s9
    // Predicated region
    $region57: #{convolution_block.3} parent=5 // pred_check
      %p3143 = pneg %p3142
    $region58: #{convolution_block.3} parent=5 // pred_check_branch
      %3145 = sbr.rel (%p3143) target = $region60
    $region59: #{convolution_block.3} parent=5 // pred_region
      %s3146 = ssub.s32 %s9, 2
      // Predicated region
      $region61: #{convolution_block.3} parent=59 // pred_check
        %p3147 = pneg %p131
      $region62: #{convolution_block.3} parent=59 // pred_check_branch
        %3149 = sbr.rel (%p3147) target = $region64
      $region63: #{convolution_block.3} parent=59 // pred_region
        %s3150 = smul.u32 %s22, %s23
        %s3151 = smul.u32 %s22, %s24
        %s3152 = smul.u32 16, %s3151
        %p3153 = scmp.lt.s32.totalorder %s3150, 1
        %s3154 = scalar_select %p3153, %s3150, 1
        %p3155 = scmp.lt.s32.totalorder %s3152, 15
        %s3156 = scalar_select %p3155, %s3152, 15
        %s3157 = smul.addr %s3156, 2
        %s3158 = smul.addr %s3154, 32
        %s3159 = sadd.s32 %s3157, %s3158
        %s3160 = smul.addr %s3159, 8
        %s3161 = scalar_lea.vmem %s3, %s3160
      $region64: #{convolution_block.3} parent=59 // pred_fallthru
        _
    $region60: #{convolution_block.3} parent=5 // pred_fallthru
      _
  $region6: #{convolution_block.3} parent=0 // loop_footer
    %s13 = sadd.s32 1, %s9
  $region7: #{convolution_block.3} parent=0 // loop_footer_branch
    %8 = sbr.rel target = $region3
  $region8: #{convolution_block.3} parent=0 // loop_exit
    _

// kernel: convolution_block.2
$region0: #{convolution_block.2}
  #allocation0 [shape = 'u32[]', space=smem, size = 0x4, offset = 0x4, fixed_abs, tag = 'smem constant byte address 0x4 - core index']
  #allocation1 [shape = 'u32[144,128]{1,0:T(1,128)}', space=vmem, size = 0x12000, scoped, tag = 'internal scratch']
  #allocation2 [shape = 'bf16[18,18,8]{2,1,0:T(8,128)(2,1)}', space=vmem, size = 0x1b000, scoped, tag = 'scratch operand']
  #allocation3 [shape = 'f32[1,8]{1,0:T(1,128)}', space=vmem, size = 0x200, scoped, tag = 'scratch operand']
  #allocation4 [shape = 'f32[1,8]{1,0:T(1,128)}', space=vmem, size = 0x200, scoped, tag = 'scratch operand']
  #allocation5 [shape = 'f32[2,8]{1,0:T(2,128)}', space=vmem, size = 0x400, scoped, tag = 'scratch operand']
  %s0 = inlined_call_operand.vmem [shape: bf16[2,16,16,8], index: 0, kind: input, shape index: {}]
  %s1 = inlined_call_operand.vmem [shape: bf16[72,8], index: 1, kind: input, shape index: {}]
  %s2 = inlined_call_operand.vmem [shape: f32[3,8], index: 2, kind: input, shape index: {}]
  %s3 = inlined_call_operand.vmem [shape: bf16[2,16,16,8], index: 3, kind: output, shape index: {}]
  %s4 = sld [smem:[#allocation0]]
  $region65: #{convolution_block.2} parent=0
    _
  %s6 = ssub.s32 1, %s4
  %s7 = scalar_select 0, %s6, %s4
  loop: start=0, step=1, limit=6
  $region2: #{convolution_block.2} parent=0 // loop_pre_header
    _
  $region3: #{convolution_block.2} parent=0 // loop_header
    %s9 = sphi 0, %s13
    %p10 = scmp.ge.s32.totalorder %s9, 6
    %s16 = sphi 0, %s35
    %s17 = sphi 0, %s31
    %s18 = sphi 0, %s27
    %s19 = sphi 0, %s16
    %s20 = sphi 0, %s17
    %s21 = sphi 0, %s18
    %s22 = sphi 0, %s19
    %s23 = sphi 0, %s20
    %s24 = sphi 0, %s21
    %s38 = sphi 0, %s40
    %s41 = sphi 0, %s38
    %s42 = sphi 0, %s41
    %s58 = sphi 0, %s42
    %s62 = sphi 0, %s62
    %s64 = sphi 0, %s62
    %s65 = sphi 0, %s64
    %s79 = sphi 0, %s65
    %s83 = sphi 0, %s83
    %s85 = sphi 0, %s83
    %s86 = sphi 0, %s85
    %s100 = sphi 0, %s86
    %s112 = sphi 0, %s114
    %s115 = sphi 0, %s112
    %s116 = sphi 0, %s115
    %s132 = sphi 0, %s116
  $region4: #{convolution_block.2} parent=0 // loop_header_branch
    %12 = sbr.rel (%p10) target = $region8
  $region5: #{convolution_block.2} parent=0 // loop_body
    %s14 = ssub.s32 %s9, 1
    %s15 = ssub.s32 %s9, 2
    %s25 = sadd.s32 1, %s18
    %p26 = scmp.ge.s32.totalorder %s25, 1
    %s27 = scalar_select %p26, 0, %s25
    %s28 = sadd.s32 1, %s17
    %s29 = scalar_select %p26, %s28, %s17
    %p30 = scmp.ge.s32.totalorder %s29, 2
    %s31 = scalar_select %p30, 0, %s29
    %s32 = sadd.s32 1, %s16
    %s33 = scalar_select %p30, %s32, %s16
    %p34 = scmp.ge.s32.totalorder %s33, 2
    %s35 = scalar_select %p34, 0, %s33
    %s36 = ssub.s32 %s17, %s31
    %p37 = scmp.eq.s32.totalorder %s36, 0
    %s39 = sadd.s32 %s38, 1
    %s40 = scalar_select %p37, %s38, %s39
    %p43 = pneg %p37
    %p44 = scmp.eq.s32.totalorder %s9, 3
    %p45 = por %p43, %p44
    %p46 = scmp.ne.s32.totalorder %s38, %s41
    %p47 = scmp.eq.s32.totalorder %s9, 0
    %p48 = por %p46, %p47
    %p49 = scmp.ne.s32.totalorder %s38, %s41
    %p50 = scmp.eq.s32.totalorder %s14, 3
    %p51 = por %p49, %p50
    %p52 = scmp.ne.s32.totalorder %s41, %s42
    %p53 = scmp.eq.s32.totalorder %s14, 0
    %p54 = por %p52, %p53
    %p55 = scmp.ne.s32.totalorder %s41, %s42
    %p56 = scmp.eq.s32.totalorder %s15, 3
    %p57 = por %p55, %p56
    %p59 = scmp.ne.s32.totalorder %s42, %s58
    %p60 = scmp.eq.s32.totalorder %s15, 0
    %p61 = por %p59, %p60
    %s63 = sadd.s32 %s62, 1
    %p66 = scmp.eq.s32.totalorder %s9, 3
    %p67 = scmp.ne.s32.totalorder %s62, %s64
    %p68 = scmp.eq.s32.totalorder %s9, 0
    %p69 = por %p67, %p68
    %p70 = scmp.ne.s32.totalorder %s62, %s64
    %p71 = scmp.eq.s32.totalorder %s14, 3
    %p72 = por %p70, %p71
    %p73 = scmp.ne.s32.totalorder %s64, %s65
    %p74 = scmp.eq.s32.totalorder %s14, 0
    %p75 = por %p73, %p74
    %p76 = scmp.ne.s32.totalorder %s64, %s65
    %p77 = scmp.eq.s32.totalorder %s15, 3
    %p78 = por %p76, %p77
    %p80 = scmp.ne.s32.totalorder %s65, %s79
    %p81 = scmp.eq.s32.totalorder %s15, 0
    %p82 = por %p80, %p81
    %s84 = sadd.s32 %s83, 1
    %p87 = scmp.eq.s32.totalorder %s9, 3
    %p88 = scmp.ne.s32.totalorder %s83, %s85
    %p89 = scmp.eq.s32.totalorder %s9, 0
    %p90 = por %p88, %p89
    %p91 = scmp.ne.s32.totalorder %s83, %s85
    %p92 = scmp.eq.s32.totalorder %s14, 3
    %p93 = por %p91, %p92
    %p94 = scmp.ne.s32.totalorder %s85, %s86
    %p95 = scmp.eq.s32.totalorder %s14, 0
    %p96 = por %p94, %p95
    %p97 = scmp.ne.s32.totalorder %s85, %s86
    %p98 = scmp.eq.s32.totalorder %s15, 3
    %p99 = por %p97, %p98
    %p101 = scmp.ne.s32.totalorder %s86, %s100
    %p102 = scmp.eq.s32.totalorder %s15, 0
    %p103 = por %p101, %p102
    %s104 = smul.u32 %s16, %s17
    %s105 = smul.u32 %s16, %s18
    %s106 = smul.u32 %s35, %s31
    %s107 = smul.u32 %s35, %s27
    %s108 = ssub.s32 %s104, %s106
    %s109 = ssub.s32 %s105, %s107
    %s110 = sor.u32 %s108, %s109
    %p111 = scmp.eq.s32.totalorder %s110, 0
    %s113 = sadd.s32 %s112, 1
    %s114 = scalar_select %p111, %s112, %s113
    %p117 = pneg %p111
    %p118 = scmp.eq.s32.totalorder %s9, 3
    %p119 = por %p117, %p118
    %p120 = scmp.ne.s32.totalorder %s112, %s115
    %p121 = scmp.eq.s32.totalorder %s9, 0
    %p122 = por %p120, %p121
    %p123 = scmp.ne.s32.totalorder %s112, %s115
    %p124 = scmp.eq.s32.totalorder %s14, 3
    %p125 = por %p123, %p124
    %p126 = scmp.ne.s32.totalorder %s115, %s116
    %p127 = scmp.eq.s32.totalorder %s14, 0
    %p128 = por %p126, %p127
    %p129 = scmp.ne.s32.totalorder %s115, %s116
    %p130 = scmp.eq.s32.totalorder %s15, 3
    %p131 = por %p129, %p130
    %p133 = scmp.ne.s32.totalorder %s116, %s132
    %p134 = scmp.eq.s32.totalorder %s15, 0
    %p135 = por %p133, %p134
    %p136 = scmp.le.s32.totalorder 1, %s9
    %p137 = scmp.lt.s32.totalorder %s9, 5
    %p138 = pnand %p136, %p137
    %p139 = pneg %p138
    // Predicated region
    $region9: #{convolution_block.2} parent=5 // pred_check
      _
    $region10: #{convolution_block.2} parent=5 // pred_check_branch
      %141 = sbr.rel (%p138) target = $region12
    $region11: #{convolution_block.2} parent=5 // pred_region
      %s142 = ssub.s32 %s9, 1
      // Predicated region
      $region13: #{convolution_block.2} parent=11 // pred_check
        %p143 = pneg %p75
      $region14: #{convolution_block.2} parent=11 // pred_check_branch
        %145 = sbr.rel (%p143) target = $region16
      $region15: #{convolution_block.2} parent=11 // pred_region
        _
      $region16: #{convolution_block.2} parent=11 // pred_fallthru
        _
      // Predicated region
      $region17: #{convolution_block.2} parent=11 // pred_check
        %p146 = pneg %p96
      $region18: #{convolution_block.2} parent=11 // pred_check_branch
        %148 = sbr.rel (%p146) target = $region20
      $region19: #{convolution_block.2} parent=11 // pred_region
        _
      $region20: #{convolution_block.2} parent=11 // pred_fallthru
        _
    $region12: #{convolution_block.2} parent=5 // pred_fallthru
      _
    %p149 = scmp.lt.s32.totalorder %s9, 4
    // Predicated region
    $region21: #{convolution_block.2} parent=5 // pred_check
      %p150 = pneg %p149
    $region22: #{convolution_block.2} parent=5 // pred_check_branch
      %152 = sbr.rel (%p150) target = $region24
    $region23: #{convolution_block.2} parent=5 // pred_region
      // Predicated region
      $region25: #{convolution_block.2} parent=23 // pred_check
        %p153 = pneg %p48
      $region26: #{convolution_block.2} parent=23 // pred_check_branch
        %155 = sbr.rel (%p153) target = $region28
      $region27: #{convolution_block.2} parent=23 // pred_region
        %p156 = scmp.lt.s32.totalorder %s17, 1
        %s157 = scalar_select %p156, %s17, 1
        %s158 = smul.addr %s157, 32
        %s159 = smul.addr %s158, 4
        %s160 = scalar_lea.vmem %s0, %s159
      $region28: #{convolution_block.2} parent=23 // pred_fallthru
        _
    $region24: #{convolution_block.2} parent=5 // pred_fallthru
      _
    %p161 = scmp.le.s32.totalorder 1, %s9
    %p162 = scmp.lt.s32.totalorder %s9, 5
    %p163 = pnand %p161, %p162
    %p164 = pneg %p163
    // Predicated region
    $region29: #{convolution_block.2} parent=5 // pred_check
      _
    $region30: #{convolution_block.2} parent=5 // pred_check_branch
      %166 = sbr.rel (%p163) target = $region32
    $region31: #{convolution_block.2} parent=5 // pred_region
      %s167 = ssub.s32 %s9, 1
      %p168 = scmp.lt.s32.totalorder %s20, 1
      %s169 = scalar_select %p168, %s20, 1
      %s170 = smul.addr %s169, 32
      %s171 = smul.addr %s170, 4
      %s172 = scalar_lea.vmem %s0, %s171
      %p173 = pneg %p54
      %p174 = pneg %p51
      %p175 = pneg %p75
      %p176 = pneg %p72
      %p177 = pneg %p96
      %p178 = pneg %p93
      %p179 = pneg %p128
      %p180 = pneg %p125
      %s181 = smul.u32 %s19, %s20
      %s182 = smul.u32 %s19, %s21
      %s183 = smul.u32 16, %s182
      %p184 = scmp.lt.s32.totalorder %s181, 1
      %s185 = scalar_select %p184, %s181, 1
      %p186 = scmp.lt.s32.totalorder %s183, 15
      %s187 = scalar_select %p186, %s183, 15
      %s188 = smul.addr %s187, 2
      %s189 = smul.addr %s185, 32
      %s190 = sadd.s32 %s188, %s189
      %s191 = smul.addr %s190, 4
      %s192 = scalar_lea.vmem %s3, %s191
      %p193 = scmp.lt.s32.totalorder %s20, 1
      %s194 = scalar_select %p193, %s20, 1
      %s195 = smul.addr %s194, 32
      %s196 = smul.addr %s195, 4
      %s197 = scalar_lea.vmem %s0, %s196
      %s198 = smul.u32 %s19, %s20
      %s199 = smul.u32 %s19, %s21
      %s200 = smul.u32 16, %s199
      %p201 = scmp.lt.s32.totalorder %s198, 1
      %s202 = scalar_select %p201, %s198, 1
      %p203 = scmp.lt.s32.totalorder %s200, 15
      %s204 = scalar_select %p203, %s200, 15
      %s205 = smul.addr %s204, 2
      %s206 = smul.addr %s202, 32
      %s207 = sadd.s32 %s205, %s206
      %s208 = smul.addr %s207, 4
      %s209 = scalar_lea.vmem %s3, %s208
      %s210 = smul.u32 %s19, %s20
      %s211 = smul.u32 %s19, %s21
      %s212 = smul.u32 16, %s211
      %p214 = scmp.eq.s32.totalorder %s19, 0
      %p215 = scmp.eq.s32.totalorder %s20, 0
      %p216 = pnand %p214, %p215
      %p217 = pneg %p216
      %p218 = scmp.eq.s32.totalorder %s21, 0
      %p219 = pnand %p217, %p218
      %p220 = pneg %p219
      // Predicated region
      $region33: #{convolution_block.2} parent=31 // pred_check
        _
      $region34: #{convolution_block.2} parent=31 // pred_check_branch
        %222 = sbr.rel (%p219) target = $region36
      $region35: #{convolution_block.2} parent=31 // pred_region
        %vm223 = vcmask 57344
        %224 = vst.msk [vmem:[#allocation3] sm:$0x1] %vm223, 0.0
        %225 = vst.msk [vmem:[#allocation4] sm:$0x1] %vm223, 0.0
      $region36: #{convolution_block.2} parent=31 // pred_fallthru
        _
      // Predicated region
      $region37: #{convolution_block.2} parent=31 // pred_check
        %p226 = pneg %p218
      $region38: #{convolution_block.2} parent=31 // pred_check_branch
        %228 = sbr.rel (%p226) target = $region40
      $region39: #{convolution_block.2} parent=31 // pred_region
        %vm229 = vcmask 60416
        %230 = vst.msk [vmem:[#allocation2] sm:$0xf] %vm229, 0
        %231 = vst.msk [vmem:[#allocation2 + $0x4] sm:$0xf] %vm229, 0
        %vm232 = vcmask 57344
        %233 = vst.msk [vmem:[#allocation2 + $0x8] sm:$0x1] %vm232, 0
        %234 = vst.msk [vmem:[#allocation2 + $0xc] sm:$0xf] %vm229, 0
        %235 = vst.msk [vmem:[#allocation2 + $0x10] sm:$0xf] %vm229, 0
        %236 = vst.msk [vmem:[#allocation2 + $0x14] sm:$0x1] %vm232, 0
        %237 = vst.msk [vmem:[#allocation2 + $0x18] sm:$0xf] %vm229, 0
        %238 = vst.msk [vmem:[#allocation2 + $0x1c] sm:$0xf] %vm229, 0
        %239 = vst.msk [vmem:[#allocation2 + $0x20] sm:$0x1] %vm232, 0
        %240 = vst.msk [vmem:[#allocation2 + $0x24] sm:$0xf] %vm229, 0
        %241 = vst.msk [vmem:[#allocation2 + $0x28] sm:$0xf] %vm229, 0
        %242 = vst.msk [vmem:[#allocation2 + $0x2c] sm:$0x1] %vm232, 0
        %243 = vst.msk [vmem:[#allocation2 + $0x30] sm:$0xf] %vm229, 0
        %244 = vst.msk [vmem:[#allocation2 + $0x34] sm:$0xf] %vm229, 0
        %245 = vst.msk [vmem:[#allocation2 + $0x38] sm:$0x1] %vm232, 0
        %246 = vst.msk [vmem:[#allocation2 + $0x3c] sm:$0xf] %vm229, 0
        %247 = vst.msk [vmem:[#allocation2 + $0x40] sm:$0xf] %vm229, 0
        %248 = vst.msk [vmem:[#allocation2 + $0x44] sm:$0x1] %vm232, 0
        %249 = vst.msk [vmem:[#allocation2 + $0x48] sm:$0xf] %vm229, 0
        %250 = vst.msk [vmem:[#allocation2 + $0x4c] sm:$0xf] %vm229, 0
        %251 = vst.msk [vmem:[#allocation2 + $0x50] sm:$0x1] %vm232, 0
        %252 = vst.msk [vmem:[#allocation2 + $0x54] sm:$0xf] %vm229, 0
        %253 = vst.msk [vmem:[#allocation2 + $0x58] sm:$0xf] %vm229, 0
        %254 = vst.msk [vmem:[#allocation2 + $0x5c] sm:$0x1] %vm232, 0
        %255 = vst.msk [vmem:[#allocation2 + $0x60] sm:$0xf] %vm229, 0
        %256 = vst.msk [vmem:[#allocation2 + $0x64] sm:$0xf] %vm229, 0
        %257 = vst.msk [vmem:[#allocation2 + $0x68] sm:$0x1] %vm232, 0
        %258 = vst.msk [vmem:[#allocation2 + $0x6c] sm:$0xf] %vm229, 0
        %259 = vst.msk [vmem:[#allocation2 + $0x70] sm:$0xf] %vm229, 0
        %260 = vst.msk [vmem:[#allocation2 + $0x74] sm:$0x1] %vm232, 0
        %261 = vst.msk [vmem:[#allocation2 + $0x78] sm:$0xf] %vm229, 0
        %262 = vst.msk [vmem:[#allocation2 + $0x7c] sm:$0xf] %vm229, 0
        %263 = vst.msk [vmem:[#allocation2 + $0x80] sm:$0x1] %vm232, 0
        %264 = vst.msk [vmem:[#allocation2 + $0x84] sm:$0xf] %vm229, 0
        %265 = vst.msk [vmem:[#allocation2 + $0x88] sm:$0xf] %vm229, 0
        %266 = vst.msk [vmem:[#allocation2 + $0x8c] sm:$0x1] %vm232, 0
        %267 = vst.msk [vmem:[#allocation2 + $0x90] sm:$0xf] %vm229, 0
        %268 = vst.msk [vmem:[#allocation2 + $0x94] sm:$0xf] %vm229, 0
        %269 = vst.msk [vmem:[#allocation2 + $0x98] sm:$0x1] %vm232, 0
        %270 = vst.msk [vmem:[#allocation2 + $0x9c] sm:$0xf] %vm229, 0
        %271 = vst.msk [vmem:[#allocation2 + $0xa0] sm:$0xf] %vm229, 0
        %272 = vst.msk [vmem:[#allocation2 + $0xa4] sm:$0x1] %vm232, 0
        %273 = vst.msk [vmem:[#allocation2 + $0xa8] sm:$0xf] %vm229, 0
        %274 = vst.msk [vmem:[#allocation2 + $0xac] sm:$0xf] %vm229, 0
        %275 = vst.msk [vmem:[#allocation2 + $0xb0] sm:$0x1] %vm232, 0
        %276 = vst.msk [vmem:[#allocation2 + $0xb4] sm:$0xf] %vm229, 0
        %277 = vst.msk [vmem:[#allocation2 + $0xb8] sm:$0xf] %vm229, 0
        %278 = vst.msk [vmem:[#allocation2 + $0xbc] sm:$0x1] %vm232, 0
        %279 = vst.msk [vmem:[#allocation2 + $0xc0] sm:$0xf] %vm229, 0
        %280 = vst.msk [vmem:[#allocation2 + $0xc4] sm:$0xf] %vm229, 0
        %281 = vst.msk [vmem:[#allocation2 + $0xc8] sm:$0x1] %vm232, 0
        %282 = vst.msk [vmem:[#allocation2 + $0xcc] sm:$0xf] %vm229, 0
        %283 = vst.msk [vmem:[#allocation2 + $0xd0] sm:$0xf] %vm229, 0
        %284 = vst.msk [vmem:[#allocation2 + $0xd4] sm:$0x1] %vm232, 0
        %v285 = vld [vmem:[%s197] sm:$0xf]
        %v286 = vld [vmem:[%s197 + $0x4] sm:$0xf]
        %v287 = vld [vmem:[%s197 + $0x8] sm:$0xf]
        %v288 = vld [vmem:[%s197 + $0xc] sm:$0xf]
        %v289 = vld [vmem:[%s197 + $0x10] sm:$0xf]
        %v290 = vld [vmem:[%s197 + $0x14] sm:$0xf]
        %v291 = vld [vmem:[%s197 + $0x18] sm:$0xf]
        %v292 = vld [vmem:[%s197 + $0x1c] sm:$0xf]
        %v293 = vld [vmem:[%s197 + $0x20] sm:$0xf]
        %v294 = vld [vmem:[%s197 + $0x24] sm:$0xf]
        %v295 = vld [vmem:[%s197 + $0x28] sm:$0xf]
        %v296 = vld [vmem:[%s197 + $0x2c] sm:$0xf]
        %v297 = vld [vmem:[%s197 + $0x30] sm:$0xf]
        %v298 = vld [vmem:[%s197 + $0x34] sm:$0xf]
        %v299 = vld [vmem:[%s197 + $0x38] sm:$0xf]
        %v300 = vld [vmem:[%s197 + $0x3c] sm:$0xf]
        %v301 = vld [vmem:[%s197 + $0x40] sm:$0xf]
        %v302 = vld [vmem:[%s197 + $0x44] sm:$0xf]
        %v303 = vld [vmem:[%s197 + $0x48] sm:$0xf]
        %v304 = vld [vmem:[%s197 + $0x4c] sm:$0xf]
        %v305 = vld [vmem:[%s197 + $0x50] sm:$0xf]
        %v306 = vld [vmem:[%s197 + $0x54] sm:$0xf]
        %v307 = vld [vmem:[%s197 + $0x58] sm:$0xf]
        %v308 = vld [vmem:[%s197 + $0x5c] sm:$0xf]
        %v309 = vld [vmem:[%s197 + $0x60] sm:$0xf]
        %v310 = vld [vmem:[%s197 + $0x64] sm:$0xf]
        %v311 = vld [vmem:[%s197 + $0x68] sm:$0xf]
        %v312 = vld [vmem:[%s197 + $0x6c] sm:$0xf]
        %v313 = vld [vmem:[%s197 + $0x70] sm:$0xf]
        %v314 = vld [vmem:[%s197 + $0x74] sm:$0xf]
        %v315 = vld [vmem:[%s197 + $0x78] sm:$0xf]
        %v316 = vld [vmem:[%s197 + $0x7c] sm:$0xf]
        %vm317 = vsmask.f32 256
        %vm318 = vsmask.f32 4368
        %vm319 = vmor %vm317, %vm318
        %v321 = vshrl.u32 %v285, 16
        %v323 = vrot.slane %v321, 7
        %v324 = vshll.u32 %v285, 16
        %v326 = vor.u32 %v323, %v324
        %v327 = vrot.slane %v323, 4
        %v329 = vshrl.u32 %v286, 16
        %v331 = vrot.slane %v329, 7
        %v332 = vshll.u32 %v286, 16
        %v334 = vor.u32 %v331, %v332
        %v335 = vsel %vm319, %v327, %v334
        %v336 = vrot.slane %v331, 4
        %v338 = vshrl.u32 %v287, 16
        %v340 = vrot.slane %v338, 7
        %v341 = vshll.u32 %v287, 16
        %v343 = vor.u32 %v340, %v341
        %v344 = vrot.slane %v340, 4
        %v346 = vshrl.u32 %v288, 16
        %v348 = vrot.slane %v346, 7
        %v349 = vshll.u32 %v288, 16
        %v351 = vor.u32 %v348, %v349
        %v352 = vsel %vm319, %v344, %v351
        %v353 = vrot.slane %v348, 4
        %v355 = vshrl.u32 %v289, 16
        %v357 = vrot.slane %v355, 7
        %v358 = vshll.u32 %v289, 16
        %v360 = vor.u32 %v357, %v358
        %v361 = vrot.slane %v357, 4
        %v363 = vshrl.u32 %v290, 16
        %v365 = vrot.slane %v363, 7
        %v366 = vshll.u32 %v290, 16
        %v368 = vor.u32 %v365, %v366
        %v369 = vsel %vm319, %v361, %v368
        %v370 = vrot.slane %v365, 4
        %v372 = vshrl.u32 %v291, 16
        %v374 = vrot.slane %v372, 7
        %v375 = vshll.u32 %v291, 16
        %v377 = vor.u32 %v374, %v375
        %v378 = vrot.slane %v374, 4
        %v380 = vshrl.u32 %v292, 16
        %v382 = vrot.slane %v380, 7
        %v383 = vshll.u32 %v292, 16
        %v385 = vor.u32 %v382, %v383
        %v386 = vsel %vm319, %v378, %v385
        %v387 = vrot.slane %v382, 4
        %v389 = vshrl.u32 %v293, 16
        %v391 = vrot.slane %v389, 7
        %v392 = vshll.u32 %v293, 16
        %v394 = vor.u32 %v391, %v392
        %v395 = vrot.slane %v391, 4
        %v397 = vshrl.u32 %v294, 16
        %v399 = vrot.slane %v397, 7
        %v400 = vshll.u32 %v294, 16
        %v402 = vor.u32 %v399, %v400
        %v403 = vsel %vm319, %v395, %v402
        %v404 = vrot.slane %v399, 4
        %v406 = vshrl.u32 %v295, 16
        %v408 = vrot.slane %v406, 7
        %v409 = vshll.u32 %v295, 16
        %v411 = vor.u32 %v408, %v409
        %v412 = vrot.slane %v408, 4
        %v414 = vshrl.u32 %v296, 16
        %v416 = vrot.slane %v414, 7
        %v417 = vshll.u32 %v296, 16
        %v419 = vor.u32 %v416, %v417
        %v420 = vsel %vm319, %v412, %v419
        %v421 = vrot.slane %v416, 4
        %v423 = vshrl.u32 %v297, 16
        %v425 = vrot.slane %v423, 7
        %v426 = vshll.u32 %v297, 16
        %v428 = vor.u32 %v425, %v426
        %v429 = vrot.slane %v425, 4
        %v431 = vshrl.u32 %v298, 16
        %v433 = vrot.slane %v431, 7
        %v434 = vshll.u32 %v298, 16
        %v436 = vor.u32 %v433, %v434
        %v437 = vsel %vm319, %v429, %v436
        %v438 = vrot.slane %v433, 4
        %v440 = vshrl.u32 %v299, 16
        %v442 = vrot.slane %v440, 7
        %v443 = vshll.u32 %v299, 16
        %v445 = vor.u32 %v442, %v443
        %v446 = vrot.slane %v442, 4
        %v448 = vshrl.u32 %v300, 16
        %v450 = vrot.slane %v448, 7
        %v451 = vshll.u32 %v300, 16
        %v453 = vor.u32 %v450, %v451
        %v454 = vsel %vm319, %v446, %v453
        %v455 = vrot.slane %v450, 4
        %v457 = vshrl.u32 %v301, 16
        %v459 = vrot.slane %v457, 7
        %v460 = vshll.u32 %v301, 16
        %v462 = vor.u32 %v459, %v460
        %v463 = vrot.slane %v459, 4
        %v465 = vshrl.u32 %v302, 16
        %v467 = vrot.slane %v465, 7
        %v468 = vshll.u32 %v302, 16
        %v470 = vor.u32 %v467, %v468
        %v471 = vsel %vm319, %v463, %v470
        %v472 = vrot.slane %v467, 4
        %v474 = vshrl.u32 %v303, 16
        %v476 = vrot.slane %v474, 7
        %v477 = vshll.u32 %v303, 16
        %v479 = vor.u32 %v476, %v477
        %v480 = vrot.slane %v476, 4
        %v482 = vshrl.u32 %v304, 16
        %v484 = vrot.slane %v482, 7
        %v485 = vshll.u32 %v304, 16
        %v487 = vor.u32 %v484, %v485
        %v488 = vsel %vm319, %v480, %v487
        %v489 = vrot.slane %v484, 4
        %v491 = vshrl.u32 %v305, 16
        %v493 = vrot.slane %v491, 7
        %v494 = vshll.u32 %v305, 16
        %v496 = vor.u32 %v493, %v494
        %v497 = vrot.slane %v493, 4
        %v499 = vshrl.u32 %v306, 16
        %v501 = vrot.slane %v499, 7
        %v502 = vshll.u32 %v306, 16
        %v504 = vor.u32 %v501, %v502
        %v505 = vsel %vm319, %v497, %v504
        %v506 = vrot.slane %v501, 4
        %v508 = vshrl.u32 %v307, 16
        %v510 = vrot.slane %v508, 7
        %v511 = vshll.u32 %v307, 16
        %v513 = vor.u32 %v510, %v511
        %v514 = vrot.slane %v510, 4
        %v516 = vshrl.u32 %v308, 16
        %v518 = vrot.slane %v516, 7
        %v519 = vshll.u32 %v308, 16
        %v521 = vor.u32 %v518, %v519
        %v522 = vsel %vm319, %v514, %v521
        %v523 = vrot.slane %v518, 4
        %v525 = vshrl.u32 %v309, 16
        %v527 = vrot.slane %v525, 7
        %v528 = vshll.u32 %v309, 16
        %v530 = vor.u32 %v527, %v528
        %v531 = vrot.slane %v527, 4
        %v533 = vshrl.u32 %v310, 16
        %v535 = vrot.slane %v533, 7
        %v536 = vshll.u32 %v310, 16
        %v538 = vor.u32 %v535, %v536
        %v539 = vsel %vm319, %v531, %v538
        %v540 = vrot.slane %v535, 4
        %v542 = vshrl.u32 %v311, 16
        %v544 = vrot.slane %v542, 7
        %v545 = vshll.u32 %v311, 16
        %v547 = vor.u32 %v544, %v545
        %v548 = vrot.slane %v544, 4
        %v550 = vshrl.u32 %v312, 16
        %v552 = vrot.slane %v550, 7
        %v553 = vshll.u32 %v312, 16
        %v555 = vor.u32 %v552, %v553
        %v556 = vsel %vm319, %v548, %v555
        %v557 = vrot.slane %v552, 4
        %v559 = vshrl.u32 %v313, 16
        %v561 = vrot.slane %v559, 7
        %v562 = vshll.u32 %v313, 16
        %v564 = vor.u32 %v561, %v562
        %v565 = vrot.slane %v561, 4
        %v567 = vshrl.u32 %v314, 16
        %v569 = vrot.slane %v567, 7
        %v570 = vshll.u32 %v314, 16
        %v572 = vor.u32 %v569, %v570
        %v573 = vsel %vm319, %v565, %v572
        %v574 = vrot.slane %v569, 4
        %v576 = vshrl.u32 %v315, 16
        %v578 = vrot.slane %v576, 7
        %v579 = vshll.u32 %v315, 16
        %v581 = vor.u32 %v578, %v579
        %v582 = vrot.slane %v578, 4
        %v584 = vshrl.u32 %v316, 16
        %v586 = vrot.slane %v584, 7
        %v587 = vshll.u32 %v316, 16
        %v589 = vor.u32 %v586, %v587
        %v590 = vsel %vm319, %v582, %v589
        %v591 = vrot.slane %v586, 4
        %s640 = scalar_lea.vmem [#allocation2], 12
        %vm641 = vcmask 60416
        %vm642 = vsmask.f32 7938
        %vm643 = vmand %vm641, %vm642
        %v644 = vld [vmem:[%s640] sm:$0xf]
        %v645 = vsel %vm643, %v326, %v644
        %646 = vst [vmem:[%s640] sm:$0xf] %v645
        %647 = vst.msk [vmem:[%s640 + $0x4] sm:$0xf] %vm229, %v335
        %vm648 = vcmask 57344
        %vm649 = vmand %vm648, %vm317
        %v650 = vld [vmem:[%s640 + $0x8] sm:$0x1]
        %v651 = vsel %vm649, %v336, %v650
        %652 = vst [vmem:[%s640 + $0x8] sm:$0x1] %v651
        %v653 = vld [vmem:[%s640 + $0xc] sm:$0xf]
        %v654 = vsel %vm643, %v343, %v653
        %655 = vst [vmem:[%s640 + $0xc] sm:$0xf] %v654
        %656 = vst.msk [vmem:[%s640 + $0x10] sm:$0xf] %vm229, %v352
        %v657 = vld [vmem:[%s640 + $0x14] sm:$0x1]
        %v658 = vsel %vm649, %v353, %v657
        %659 = vst [vmem:[%s640 + $0x14] sm:$0x1] %v658
        %v660 = vld [vmem:[%s640 + $0x18] sm:$0xf]
        %v661 = vsel %vm643, %v360, %v660
        %662 = vst [vmem:[%s640 + $0x18] sm:$0xf] %v661
        %663 = vst.msk [vmem:[%s640 + $0x1c] sm:$0xf] %vm229, %v369
        %v664 = vld [vmem:[%s640 + $0x20] sm:$0x1]
        %v665 = vsel %vm649, %v370, %v664
        %666 = vst [vmem:[%s640 + $0x20] sm:$0x1] %v665
        %v667 = vld [vmem:[%s640 + $0x24] sm:$0xf]
        %v668 = vsel %vm643, %v377, %v667
        %669 = vst [vmem:[%s640 + $0x24] sm:$0xf] %v668
        %670 = vst.msk [vmem:[%s640 + $0x28] sm:$0xf] %vm229, %v386
        %v671 = vld [vmem:[%s640 + $0x2c] sm:$0x1]
        %v672 = vsel %vm649, %v387, %v671
        %673 = vst [vmem:[%s640 + $0x2c] sm:$0x1] %v672
        %v674 = vld [vmem:[%s640 + $0x30] sm:$0xf]
        %v675 = vsel %vm643, %v394, %v674
        %676 = vst [vmem:[%s640 + $0x30] sm:$0xf] %v675
        %677 = vst.msk [vmem:[%s640 + $0x34] sm:$0xf] %vm229, %v403
        %v678 = vld [vmem:[%s640 + $0x38] sm:$0x1]
        %v679 = vsel %vm649, %v404, %v678
        %680 = vst [vmem:[%s640 + $0x38] sm:$0x1] %v679
        %v681 = vld [vmem:[%s640 + $0x3c] sm:$0xf]
        %v682 = vsel %vm643, %v411, %v681
        %683 = vst [vmem:[%s640 + $0x3c] sm:$0xf] %v682
        %684 = vst.msk [vmem:[%s640 + $0x40] sm:$0xf] %vm229, %v420
        %v685 = vld [vmem:[%s640 + $0x44] sm:$0x1]
        %v686 = vsel %vm649, %v421, %v685
        %687 = vst [vmem:[%s640 + $0x44] sm:$0x1] %v686
        %v688 = vld [vmem:[%s640 + $0x48] sm:$0xf]
        %v689 = vsel %vm643, %v428, %v688
        %690 = vst [vmem:[%s640 + $0x48] sm:$0xf] %v689
        %691 = vst.msk [vmem:[%s640 + $0x4c] sm:$0xf] %vm229, %v437
        %v692 = vld [vmem:[%s640 + $0x50] sm:$0x1]
        %v693 = vsel %vm649, %v438, %v692
        %694 = vst [vmem:[%s640 + $0x50] sm:$0x1] %v693
        %v695 = vld [vmem:[%s640 + $0x54] sm:$0xf]
        %v696 = vsel %vm643, %v445, %v695
        %697 = vst [vmem:[%s640 + $0x54] sm:$0xf] %v696
        %698 = vst.msk [vmem:[%s640 + $0x58] sm:$0xf] %vm229, %v454
        %v699 = vld [vmem:[%s640 + $0x5c] sm:$0x1]
        %v700 = vsel %vm649, %v455, %v699
        %701 = vst [vmem:[%s640 + $0x5c] sm:$0x1] %v700
        %v702 = vld [vmem:[%s640 + $0x60] sm:$0xf]
        %v703 = vsel %vm643, %v462, %v702
        %704 = vst [vmem:[%s640 + $0x60] sm:$0xf] %v703
        %705 = vst.msk [vmem:[%s640 + $0x64] sm:$0xf] %vm229, %v471
        %v706 = vld [vmem:[%s640 + $0x68] sm:$0x1]
        %v707 = vsel %vm649, %v472, %v706
        %708 = vst [vmem:[%s640 + $0x68] sm:$0x1] %v707
        %v709 = vld [vmem:[%s640 + $0x6c] sm:$0xf]
        %v710 = vsel %vm643, %v479, %v709
        %711 = vst [vmem:[%s640 + $0x6c] sm:$0xf] %v710
        %712 = vst.msk [vmem:[%s640 + $0x70] sm:$0xf] %vm229, %v488
        %v713 = vld [vmem:[%s640 + $0x74] sm:$0x1]
        %v714 = vsel %vm649, %v489, %v713
        %715 = vst [vmem:[%s640 + $0x74] sm:$0x1] %v714
        %v716 = vld [vmem:[%s640 + $0x78] sm:$0xf]
        %v717 = vsel %vm643, %v496, %v716
        %718 = vst [vmem:[%s640 + $0x78] sm:$0xf] %v717
        %719 = vst.msk [vmem:[%s640 + $0x7c] sm:$0xf] %vm229, %v505
        %v720 = vld [vmem:[%s640 + $0x80] sm:$0x1]
        %v721 = vsel %vm649, %v506, %v720
        %722 = vst [vmem:[%s640 + $0x80] sm:$0x1] %v721
        %v723 = vld [vmem:[%s640 + $0x84] sm:$0xf]
        %v724 = vsel %vm643, %v513, %v723
        %725 = vst [vmem:[%s640 + $0x84] sm:$0xf] %v724
        %726 = vst.msk [vmem:[%s640 + $0x88] sm:$0xf] %vm229, %v522
        %v727 = vld [vmem:[%s640 + $0x8c] sm:$0x1]
        %v728 = vsel %vm649, %v523, %v727
        %729 = vst [vmem:[%s640 + $0x8c] sm:$0x1] %v728
        %v730 = vld [vmem:[%s640 + $0x90] sm:$0xf]
        %v731 = vsel %vm643, %v530, %v730
        %732 = vst [vmem:[%s640 + $0x90] sm:$0xf] %v731
        %733 = vst.msk [vmem:[%s640 + $0x94] sm:$0xf] %vm229, %v539
        %v734 = vld [vmem:[%s640 + $0x98] sm:$0x1]
        %v735 = vsel %vm649, %v540, %v734
        %736 = vst [vmem:[%s640 + $0x98] sm:$0x1] %v735
        %v737 = vld [vmem:[%s640 + $0x9c] sm:$0xf]
        %v738 = vsel %vm643, %v547, %v737
        %739 = vst [vmem:[%s640 + $0x9c] sm:$0xf] %v738
        %740 = vst.msk [vmem:[%s640 + $0xa0] sm:$0xf] %vm229, %v556
        %v741 = vld [vmem:[%s640 + $0xa4] sm:$0x1]
        %v742 = vsel %vm649, %v557, %v741
        %743 = vst [vmem:[%s640 + $0xa4] sm:$0x1] %v742
        %v744 = vld [vmem:[%s640 + $0xa8] sm:$0xf]
        %v745 = vsel %vm643, %v564, %v744
        %746 = vst [vmem:[%s640 + $0xa8] sm:$0xf] %v745
        %747 = vst.msk [vmem:[%s640 + $0xac] sm:$0xf] %vm229, %v573
        %v748 = vld [vmem:[%s640 + $0xb0] sm:$0x1]
        %v749 = vsel %vm649, %v574, %v748
        %750 = vst [vmem:[%s640 + $0xb0] sm:$0x1] %v749
        %v751 = vld [vmem:[%s640 + $0xb4] sm:$0xf]
        %v752 = vsel %vm643, %v581, %v751
        %753 = vst [vmem:[%s640 + $0xb4] sm:$0xf] %v752
        %754 = vst.msk [vmem:[%s640 + $0xb8] sm:$0xf] %vm229, %v590
        %v755 = vld [vmem:[%s640 + $0xbc] sm:$0x1]
        %v756 = vsel %vm649, %v591, %v755
        %757 = vst [vmem:[%s640 + $0xbc] sm:$0x1] %v756
      $region40: #{convolution_block.2} parent=31 // pred_fallthru
        _
      %s758 = smul.u32 %s21, 16
      %s759 = smul.u32 %s758, 3
      %s760 = smul.addr %s759, 4
      %s761 = scalar_lea.vmem [#allocation2], %s760
      %v762 = vld [vmem:[%s761] sm:$0xf]
      %v763 = vld [vmem:[%s761 + $0x4] sm:$0xf]
      %v764 = vld [vmem:[%s761 + $0x8] sm:$0x1]
      %v765 = vld [vmem:[%s761 + $0xc] sm:$0xf]
      %v766 = vld [vmem:[%s761 + $0x10] sm:$0xf]
      %v767 = vld [vmem:[%s761 + $0x14] sm:$0x1]
      %v768 = vld [vmem:[%s761 + $0x18] sm:$0xf]
      %v769 = vld [vmem:[%s761 + $0x1c] sm:$0xf]
      %v770 = vld [vmem:[%s761 + $0x20] sm:$0x1]
      %v771 = vld [vmem:[%s761 + $0x24] sm:$0xf]
      %v772 = vld [vmem:[%s761 + $0x28] sm:$0xf]
      %v773 = vld [vmem:[%s761 + $0x2c] sm:$0x1]
      %v774 = vld [vmem:[%s761 + $0x30] sm:$0xf]
      %v775 = vld [vmem:[%s761 + $0x34] sm:$0xf]
      %v776 = vld [vmem:[%s761 + $0x38] sm:$0x1]
      %v777 = vld [vmem:[%s761 + $0x3c] sm:$0xf]
      %v778 = vld [vmem:[%s761 + $0x40] sm:$0xf]
      %v779 = vld [vmem:[%s761 + $0x44] sm:$0x1]
      %v780 = vld [vmem:[%s761 + $0x48] sm:$0xf]
      %v781 = vld [vmem:[%s761 + $0x4c] sm:$0xf]
      %v782 = vld [vmem:[%s761 + $0x50] sm:$0x1]
      %v783 = vld [vmem:[%s761 + $0x54] sm:$0xf]
      %v784 = vld [vmem:[%s761 + $0x58] sm:$0xf]
      %v785 = vld [vmem:[%s761 + $0x5c] sm:$0x1]
      %v786 = vld [vmem:[%s761 + $0x60] sm:$0xf]
      %v787 = vld [vmem:[%s761 + $0x64] sm:$0xf]
      %v788 = vld [vmem:[%s761 + $0x68] sm:$0x1]
      %v789 = vld [vmem:[%s761 + $0x6c] sm:$0xf]
      %v790 = vld [vmem:[%s761 + $0x70] sm:$0xf]
      %v791 = vld [vmem:[%s761 + $0x74] sm:$0x1]
      %v792 = vld [vmem:[%s761 + $0x78] sm:$0xf]
      %v793 = vld [vmem:[%s761 + $0x7c] sm:$0xf]
      %v794 = vld [vmem:[%s761 + $0x80] sm:$0x1]
      %v795 = vld [vmem:[%s761 + $0x84] sm:$0xf]
      %v796 = vld [vmem:[%s761 + $0x88] sm:$0xf]
      %v797 = vld [vmem:[%s761 + $0x8c] sm:$0x1]
      %v798 = vld [vmem:[%s761 + $0x90] sm:$0xf]
      %v799 = vld [vmem:[%s761 + $0x94] sm:$0xf]
      %v800 = vld [vmem:[%s761 + $0x98] sm:$0x1]
      %v801 = vld [vmem:[%s761 + $0x9c] sm:$0xf]
      %v802 = vld [vmem:[%s761 + $0xa0] sm:$0xf]
      %v803 = vld [vmem:[%s761 + $0xa4] sm:$0x1]
      %v804 = vld [vmem:[%s761 + $0xa8] sm:$0xf]
      %v805 = vld [vmem:[%s761 + $0xac] sm:$0xf]
      %v806 = vld [vmem:[%s761 + $0xb0] sm:$0x1]
      %v807 = vld [vmem:[%s761 + $0xb4] sm:$0xf]
      %v808 = vld [vmem:[%s761 + $0xb8] sm:$0xf]
      %v809 = vld [vmem:[%s761 + $0xbc] sm:$0x1]
      %s810 = sadd.s32 %s758, 1
      %s811 = smul.u32 %s810, 3
      %s812 = smul.addr %s811, 4
      %s813 = scalar_lea.vmem [#allocation2], %s812
      %v814 = vld [vmem:[%s813] sm:$0xf]
      %v815 = vld [vmem:[%s813 + $0x4] sm:$0xf]
      %v816 = vld [vmem:[%s813 + $0x8] sm:$0x1]
      %v817 = vld [vmem:[%s813 + $0xc] sm:$0xf]
      %v818 = vld [vmem:[%s813 + $0x10] sm:$0xf]
      %v819 = vld [vmem:[%s813 + $0x14] sm:$0x1]
      %v820 = vld [vmem:[%s813 + $0x18] sm:$0xf]
      %v821 = vld [vmem:[%s813 + $0x1c] sm:$0xf]
      %v822 = vld [vmem:[%s813 + $0x20] sm:$0x1]
      %v823 = vld [vmem:[%s813 + $0x24] sm:$0xf]
      %v824 = vld [vmem:[%s813 + $0x28] sm:$0xf]
      %v825 = vld [vmem:[%s813 + $0x2c] sm:$0x1]
      %v826 = vld [vmem:[%s813 + $0x30] sm:$0xf]
      %v827 = vld [vmem:[%s813 + $0x34] sm:$0xf]
      %v828 = vld [vmem:[%s813 + $0x38] sm:$0x1]
      %v829 = vld [vmem:[%s813 + $0x3c] sm:$0xf]
      %v830 = vld [vmem:[%s813 + $0x40] sm:$0xf]
      %v831 = vld [vmem:[%s813 + $0x44] sm:$0x1]
      %v832 = vld [vmem:[%s813 + $0x48] sm:$0xf]
      %v833 = vld [vmem:[%s813 + $0x4c] sm:$0xf]
      %v834 = vld [vmem:[%s813 + $0x50] sm:$0x1]
      %v835 = vld [vmem:[%s813 + $0x54] sm:$0xf]
      %v836 = vld [vmem:[%s813 + $0x58] sm:$0xf]
      %v837 = vld [vmem:[%s813 + $0x5c] sm:$0x1]
      %v838 = vld [vmem:[%s813 + $0x60] sm:$0xf]
      %v839 = vld [vmem:[%s813 + $0x64] sm:$0xf]
      %v840 = vld [vmem:[%s813 + $0x68] sm:$0x1]
      %v841 = vld [vmem:[%s813 + $0x6c] sm:$0xf]
      %v842 = vld [vmem:[%s813 + $0x70] sm:$0xf]
      %v843 = vld [vmem:[%s813 + $0x74] sm:$0x1]
      %v844 = vld [vmem:[%s813 + $0x78] sm:$0xf]
      %v845 = vld [vmem:[%s813 + $0x7c] sm:$0xf]
      %v846 = vld [vmem:[%s813 + $0x80] sm:$0x1]
      %v847 = vld [vmem:[%s813 + $0x84] sm:$0xf]
      %v848 = vld [vmem:[%s813 + $0x88] sm:$0xf]
      %v849 = vld [vmem:[%s813 + $0x8c] sm:$0x1]
      %v850 = vld [vmem:[%s813 + $0x90] sm:$0xf]
      %v851 = vld [vmem:[%s813 + $0x94] sm:$0xf]
      %v852 = vld [vmem:[%s813 + $0x98] sm:$0x1]
      %v853 = vld [vmem:[%s813 + $0x9c] sm:$0xf]
      %v854 = vld [vmem:[%s813 + $0xa0] sm:$0xf]
      %v855 = vld [vmem:[%s813 + $0xa4] sm:$0x1]
      %v856 = vld [vmem:[%s813 + $0xa8] sm:$0xf]
      %v857 = vld [vmem:[%s813 + $0xac] sm:$0xf]
      %v858 = vld [vmem:[%s813 + $0xb0] sm:$0x1]
      %v859 = vld [vmem:[%s813 + $0xb4] sm:$0xf]
      %v860 = vld [vmem:[%s813 + $0xb8] sm:$0xf]
      %v861 = vld [vmem:[%s813 + $0xbc] sm:$0x1]
      %s862 = sadd.s32 %s758, 2
      %s863 = smul.u32 %s862, 3
      %s864 = smul.addr %s863, 4
      %s865 = scalar_lea.vmem [#allocation2], %s864
      %v866 = vld [vmem:[%s865] sm:$0xf]
      %v867 = vld [vmem:[%s865 + $0x4] sm:$0xf]
      %v868 = vld [vmem:[%s865 + $0x8] sm:$0x1]
      %v869 = vld [vmem:[%s865 + $0xc] sm:$0xf]
      %v870 = vld [vmem:[%s865 + $0x10] sm:$0xf]
      %v871 = vld [vmem:[%s865 + $0x14] sm:$0x1]
      %v872 = vld [vmem:[%s865 + $0x18] sm:$0xf]
      %v873 = vld [vmem:[%s865 + $0x1c] sm:$0xf]
      %v874 = vld [vmem:[%s865 + $0x20] sm:$0x1]
      %v875 = vld [vmem:[%s865 + $0x24] sm:$0xf]
      %v876 = vld [vmem:[%s865 + $0x28] sm:$0xf]
      %v877 = vld [vmem:[%s865 + $0x2c] sm:$0x1]
      %v878 = vld [vmem:[%s865 + $0x30] sm:$0xf]
      %v879 = vld [vmem:[%s865 + $0x34] sm:$0xf]
      %v880 = vld [vmem:[%s865 + $0x38] sm:$0x1]
      %v881 = vld [vmem:[%s865 + $0x3c] sm:$0xf]
      %v882 = vld [vmem:[%s865 + $0x40] sm:$0xf]
      %v883 = vld [vmem:[%s865 + $0x44] sm:$0x1]
      %v884 = vld [vmem:[%s865 + $0x48] sm:$0xf]
      %v885 = vld [vmem:[%s865 + $0x4c] sm:$0xf]
      %v886 = vld [vmem:[%s865 + $0x50] sm:$0x1]
      %v887 = vld [vmem:[%s865 + $0x54] sm:$0xf]
      %v888 = vld [vmem:[%s865 + $0x58] sm:$0xf]
      %v889 = vld [vmem:[%s865 + $0x5c] sm:$0x1]
      %v890 = vld [vmem:[%s865 + $0x60] sm:$0xf]
      %v891 = vld [vmem:[%s865 + $0x64] sm:$0xf]
      %v892 = vld [vmem:[%s865 + $0x68] sm:$0x1]
      %v893 = vld [vmem:[%s865 + $0x6c] sm:$0xf]
      %v894 = vld [vmem:[%s865 + $0x70] sm:$0xf]
      %v895 = vld [vmem:[%s865 + $0x74] sm:$0x1]
      %v896 = vld [vmem:[%s865 + $0x78] sm:$0xf]
      %v897 = vld [vmem:[%s865 + $0x7c] sm:$0xf]
      %v898 = vld [vmem:[%s865 + $0x80] sm:$0x1]
      %v899 = vld [vmem:[%s865 + $0x84] sm:$0xf]
      %v900 = vld [vmem:[%s865 + $0x88] sm:$0xf]
      %v901 = vld [vmem:[%s865 + $0x8c] sm:$0x1]
      %v902 = vld [vmem:[%s865 + $0x90] sm:$0xf]
      %v903 = vld [vmem:[%s865 + $0x94] sm:$0xf]
      %v904 = vld [vmem:[%s865 + $0x98] sm:$0x1]
      %v905 = vld [vmem:[%s865 + $0x9c] sm:$0xf]
      %v906 = vld [vmem:[%s865 + $0xa0] sm:$0xf]
      %v907 = vld [vmem:[%s865 + $0xa4] sm:$0x1]
      %v908 = vld [vmem:[%s865 + $0xa8] sm:$0xf]
      %v909 = vld [vmem:[%s865 + $0xac] sm:$0xf]
      %v910 = vld [vmem:[%s865 + $0xb0] sm:$0x1]
      %v911 = vld [vmem:[%s865 + $0xb4] sm:$0xf]
      %v912 = vld [vmem:[%s865 + $0xb8] sm:$0xf]
      %v913 = vld [vmem:[%s865 + $0xbc] sm:$0x1]
      %v946 = vunpack.c.l.b16 %v762
      %v947 = vunpack.c.l.b16 %v763
      %v948 = vunpack.c.l.b16 %v765
      %v949 = vunpack.c.l.b16 %v766
      %v950 = vunpack.c.l.b16 %v768
      %v951 = vunpack.c.l.b16 %v769
      %v952 = vunpack.c.l.b16 %v771
      %v953 = vunpack.c.l.b16 %v772
      %v954 = vunpack.c.l.b16 %v774
      %v955 = vunpack.c.l.b16 %v775
      %v956 = vunpack.c.l.b16 %v777
      %v957 = vunpack.c.l.b16 %v778
      %v958 = vunpack.c.l.b16 %v780
      %v959 = vunpack.c.l.b16 %v781
      %v960 = vunpack.c.l.b16 %v783
      %v961 = vunpack.c.l.b16 %v784
      %v962 = vunpack.c.l.b16 %v786
      %v963 = vunpack.c.l.b16 %v787
      %v964 = vunpack.c.l.b16 %v789
      %v965 = vunpack.c.l.b16 %v790
      %v966 = vunpack.c.l.b16 %v792
      %v967 = vunpack.c.l.b16 %v793
      %v968 = vunpack.c.l.b16 %v795
      %v969 = vunpack.c.l.b16 %v796
      %v970 = vunpack.c.l.b16 %v798
      %v971 = vunpack.c.l.b16 %v799
      %v972 = vunpack.c.l.b16 %v801
      %v973 = vunpack.c.l.b16 %v802
      %v974 = vunpack.c.l.b16 %v804
      %v975 = vunpack.c.l.b16 %v805
      %v976 = vunpack.c.l.b16 %v807
      %v977 = vunpack.c.l.b16 %v808
      %v978 = vpack.c.b16 %v947, %v946
      %v979 = vpack.c.b16 %v949, %v948
      %v980 = vpack.c.b16 %v951, %v950
      %v981 = vpack.c.b16 %v953, %v952
      %v982 = vpack.c.b16 %v955, %v954
      %v983 = vpack.c.b16 %v957, %v956
      %v984 = vpack.c.b16 %v959, %v958
      %v985 = vpack.c.b16 %v961, %v960
      %v986 = vpack.c.b16 %v963, %v962
      %v987 = vpack.c.b16 %v965, %v964
      %v988 = vpack.c.b16 %v967, %v966
      %v989 = vpack.c.b16 %v969, %v968
      %v990 = vpack.c.b16 %v971, %v970
      %v991 = vpack.c.b16 %v973, %v972
      %v992 = vpack.c.b16 %v975, %v974
      %v993 = vpack.c.b16 %v977, %v976
      %v1010 = vunpack.c.l.b16 %v764
      %v1011 = vunpack.c.l.b16 %v767
      %v1012 = vunpack.c.l.b16 %v770
      %v1013 = vunpack.c.l.b16 %v773
      %v1014 = vunpack.c.l.b16 %v776
      %v1015 = vunpack.c.l.b16 %v779
      %v1016 = vunpack.c.l.b16 %v782
      %v1017 = vunpack.c.l.b16 %v785
      %v1018 = vunpack.c.l.b16 %v788
      %v1019 = vunpack.c.l.b16 %v791
      %v1020 = vunpack.c.l.b16 %v794
      %v1021 = vunpack.c.l.b16 %v797
      %v1022 = vunpack.c.l.b16 %v800
      %v1023 = vunpack.c.l.b16 %v803
      %v1024 = vunpack.c.l.b16 %v806
      %v1025 = vunpack.c.l.b16 %v809
      %v1026 = vpack.c.b16 %v1010, %v1010
      %v1027 = vpack.c.b16 %v1011, %v1011
      %v1028 = vpack.c.b16 %v1012, %v1012
      %v1029 = vpack.c.b16 %v1013, %v1013
      %v1030 = vpack.c.b16 %v1014, %v1014
      %v1031 = vpack.c.b16 %v1015, %v1015
      %v1032 = vpack.c.b16 %v1016, %v1016
      %v1033 = vpack.c.b16 %v1017, %v1017
      %v1034 = vpack.c.b16 %v1018, %v1018
      %v1035 = vpack.c.b16 %v1019, %v1019
      %v1036 = vpack.c.b16 %v1020, %v1020
      %v1037 = vpack.c.b16 %v1021, %v1021
      %v1038 = vpack.c.b16 %v1022, %v1022
      %v1039 = vpack.c.b16 %v1023, %v1023
      %v1040 = vpack.c.b16 %v1024, %v1024
      %v1041 = vpack.c.b16 %v1025, %v1025
      %vm1042 = vsmask.f32 7424
      %v1044 = vshrl.u32 %v978, 16
      %v1046 = vshll.u32 %v978, 16
      %v1048 = vrot.slane %v1046, 1
      %v1049 = vor.u32 %v1044, %v1048
      %v1051 = vshll.u32 %v1026, 16
      %v1053 = vrot.slane %v1051, 1
      %v1054 = vsel %vm1042, %v1049, %v1053
      %v1056 = vshrl.u32 %v979, 16
      %v1058 = vshll.u32 %v979, 16
      %v1060 = vrot.slane %v1058, 1
      %v1061 = vor.u32 %v1056, %v1060
      %v1063 = vshll.u32 %v1027, 16
      %v1065 = vrot.slane %v1063, 1
      %v1066 = vsel %vm1042, %v1061, %v1065
      %v1068 = vshrl.u32 %v980, 16
      %v1070 = vshll.u32 %v980, 16
      %v1072 = vrot.slane %v1070, 1
      %v1073 = vor.u32 %v1068, %v1072
      %v1075 = vshll.u32 %v1028, 16
      %v1077 = vrot.slane %v1075, 1
      %v1078 = vsel %vm1042, %v1073, %v1077
      %v1080 = vshrl.u32 %v981, 16
      %v1082 = vshll.u32 %v981, 16
      %v1084 = vrot.slane %v1082, 1
      %v1085 = vor.u32 %v1080, %v1084
      %v1087 = vshll.u32 %v1029, 16
      %v1089 = vrot.slane %v1087, 1
      %v1090 = vsel %vm1042, %v1085, %v1089
      %v1092 = vshrl.u32 %v982, 16
      %v1094 = vshll.u32 %v982, 16
      %v1096 = vrot.slane %v1094, 1
      %v1097 = vor.u32 %v1092, %v1096
      %v1099 = vshll.u32 %v1030, 16
      %v1101 = vrot.slane %v1099, 1
      %v1102 = vsel %vm1042, %v1097, %v1101
      %v1104 = vshrl.u32 %v983, 16
      %v1106 = vshll.u32 %v983, 16
      %v1108 = vrot.slane %v1106, 1
      %v1109 = vor.u32 %v1104, %v1108
      %v1111 = vshll.u32 %v1031, 16
      %v1113 = vrot.slane %v1111, 1
      %v1114 = vsel %vm1042, %v1109, %v1113
      %v1116 = vshrl.u32 %v984, 16
      %v1118 = vshll.u32 %v984, 16
      %v1120 = vrot.slane %v1118, 1
      %v1121 = vor.u32 %v1116, %v1120
      %v1123 = vshll.u32 %v1032, 16
      %v1125 = vrot.slane %v1123, 1
      %v1126 = vsel %vm1042, %v1121, %v1125
      %v1128 = vshrl.u32 %v985, 16
      %v1130 = vshll.u32 %v985, 16
      %v1132 = vrot.slane %v1130, 1
      %v1133 = vor.u32 %v1128, %v1132
      %v1135 = vshll.u32 %v1033, 16
      %v1137 = vrot.slane %v1135, 1
      %v1138 = vsel %vm1042, %v1133, %v1137
      %v1140 = vshrl.u32 %v986, 16
      %v1142 = vshll.u32 %v986, 16
      %v1144 = vrot.slane %v1142, 1
      %v1145 = vor.u32 %v1140, %v1144
      %v1147 = vshll.u32 %v1034, 16
      %v1149 = vrot.slane %v1147, 1
      %v1150 = vsel %vm1042, %v1145, %v1149
      %v1152 = vshrl.u32 %v987, 16
      %v1154 = vshll.u32 %v987, 16
      %v1156 = vrot.slane %v1154, 1
      %v1157 = vor.u32 %v1152, %v1156
      %v1159 = vshll.u32 %v1035, 16
      %v1161 = vrot.slane %v1159, 1
      %v1162 = vsel %vm1042, %v1157, %v1161
      %v1164 = vshrl.u32 %v988, 16
      %v1166 = vshll.u32 %v988, 16
      %v1168 = vrot.slane %v1166, 1
      %v1169 = vor.u32 %v1164, %v1168
      %v1171 = vshll.u32 %v1036, 16
      %v1173 = vrot.slane %v1171, 1
      %v1174 = vsel %vm1042, %v1169, %v1173
      %v1176 = vshrl.u32 %v989, 16
      %v1178 = vshll.u32 %v989, 16
      %v1180 = vrot.slane %v1178, 1
      %v1181 = vor.u32 %v1176, %v1180
      %v1183 = vshll.u32 %v1037, 16
      %v1185 = vrot.slane %v1183, 1
      %v1186 = vsel %vm1042, %v1181, %v1185
      %v1188 = vshrl.u32 %v990, 16
      %v1190 = vshll.u32 %v990, 16
      %v1192 = vrot.slane %v1190, 1
      %v1193 = vor.u32 %v1188, %v1192
      %v1195 = vshll.u32 %v1038, 16
      %v1197 = vrot.slane %v1195, 1
      %v1198 = vsel %vm1042, %v1193, %v1197
      %v1200 = vshrl.u32 %v991, 16
      %v1202 = vshll.u32 %v991, 16
      %v1204 = vrot.slane %v1202, 1
      %v1205 = vor.u32 %v1200, %v1204
      %v1207 = vshll.u32 %v1039, 16
      %v1209 = vrot.slane %v1207, 1
      %v1210 = vsel %vm1042, %v1205, %v1209
      %v1212 = vshrl.u32 %v992, 16
      %v1214 = vshll.u32 %v992, 16
      %v1216 = vrot.slane %v1214, 1
      %v1217 = vor.u32 %v1212, %v1216
      %v1219 = vshll.u32 %v1040, 16
      %v1221 = vrot.slane %v1219, 1
      %v1222 = vsel %vm1042, %v1217, %v1221
      %v1224 = vshrl.u32 %v993, 16
      %v1226 = vshll.u32 %v993, 16
      %v1228 = vrot.slane %v1226, 1
      %v1229 = vor.u32 %v1224, %v1228
      %v1231 = vshll.u32 %v1041, 16
      %v1233 = vrot.slane %v1231, 1
      %v1234 = vsel %vm1042, %v1229, %v1233
      %1235 = vrot.lane.b32.xlu0 %v1054, 8
      %v1236 = vpop.permute.xlu0 %1235
      %1237 = vrot.lane.b32.xlu0 %v1066, 8
      %v1238 = vpop.permute.xlu0 %1237
      %1239 = vrot.lane.b32.xlu0 %v1078, 8
      %v1240 = vpop.permute.xlu0 %1239
      %1241 = vrot.lane.b32.xlu0 %v1090, 8
      %v1242 = vpop.permute.xlu0 %1241
      %1243 = vrot.lane.b32.xlu0 %v1102, 8
      %v1244 = vpop.permute.xlu0 %1243
      %1245 = vrot.lane.b32.xlu0 %v1114, 8
      %v1246 = vpop.permute.xlu0 %1245
      %1247 = vrot.lane.b32.xlu0 %v1126, 8
      %v1248 = vpop.permute.xlu0 %1247
      %1249 = vrot.lane.b32.xlu0 %v1138, 8
      %v1250 = vpop.permute.xlu0 %1249
      %1251 = vrot.lane.b32.xlu0 %v1150, 8
      %v1252 = vpop.permute.xlu0 %1251
      %1253 = vrot.lane.b32.xlu0 %v1162, 8
      %v1254 = vpop.permute.xlu0 %1253
      %1255 = vrot.lane.b32.xlu0 %v1174, 8
      %v1256 = vpop.permute.xlu0 %1255
      %1257 = vrot.lane.b32.xlu0 %v1186, 8
      %v1258 = vpop.permute.xlu0 %1257
      %1259 = vrot.lane.b32.xlu0 %v1198, 8
      %v1260 = vpop.permute.xlu0 %1259
      %1261 = vrot.lane.b32.xlu0 %v1210, 8
      %v1262 = vpop.permute.xlu0 %1261
      %1263 = vrot.lane.b32.xlu0 %v1222, 8
      %v1264 = vpop.permute.xlu0 %1263
      %1265 = vrot.lane.b32.xlu0 %v1234, 8
      %v1266 = vpop.permute.xlu0 %1265
      %vm1267 = vcmask 1046528
      %v1268 = vrot.slane %v978, 1
      %v1269 = vrot.slane %v1026, 1
      %v1270 = vsel %vm1267, %v1268, %v1269
      %v1271 = vrot.slane %v979, 1
      %v1272 = vrot.slane %v1027, 1
      %v1273 = vsel %vm1267, %v1271, %v1272
      %v1274 = vrot.slane %v980, 1
      %v1275 = vrot.slane %v1028, 1
      %v1276 = vsel %vm1267, %v1274, %v1275
      %v1277 = vrot.slane %v981, 1
      %v1278 = vrot.slane %v1029, 1
      %v1279 = vsel %vm1267, %v1277, %v1278
      %v1280 = vrot.slane %v982, 1
      %v1281 = vrot.slane %v1030, 1
      %v1282 = vsel %vm1267, %v1280, %v1281
      %v1283 = vrot.slane %v983, 1
      %v1284 = vrot.slane %v1031, 1
      %v1285 = vsel %vm1267, %v1283, %v1284
      %v1286 = vrot.slane %v984, 1
      %v1287 = vrot.slane %v1032, 1
      %v1288 = vsel %vm1267, %v1286, %v1287
      %v1289 = vrot.slane %v985, 1
      %v1290 = vrot.slane %v1033, 1
      %v1291 = vsel %vm1267, %v1289, %v1290
      %v1292 = vrot.slane %v986, 1
      %v1293 = vrot.slane %v1034, 1
      %v1294 = vsel %vm1267, %v1292, %v1293
      %v1295 = vrot.slane %v987, 1
      %v1296 = vrot.slane %v1035, 1
      %v1297 = vsel %vm1267, %v1295, %v1296
      %v1298 = vrot.slane %v988, 1
      %v1299 = vrot.slane %v1036, 1
      %v1300 = vsel %vm1267, %v1298, %v1299
      %v1301 = vrot.slane %v989, 1
      %v1302 = vrot.slane %v1037, 1
      %v1303 = vsel %vm1267, %v1301, %v1302
      %v1304 = vrot.slane %v990, 1
      %v1305 = vrot.slane %v1038, 1
      %v1306 = vsel %vm1267, %v1304, %v1305
      %v1307 = vrot.slane %v991, 1
      %v1308 = vrot.slane %v1039, 1
      %v1309 = vsel %vm1267, %v1307, %v1308
      %v1310 = vrot.slane %v992, 1
      %v1311 = vrot.slane %v1040, 1
      %v1312 = vsel %vm1267, %v1310, %v1311
      %v1313 = vrot.slane %v993, 1
      %v1314 = vrot.slane %v1041, 1
      %v1315 = vsel %vm1267, %v1313, %v1314
      %1316 = vrot.lane.b32.xlu0 %v1270, 16
      %v1317 = vpop.permute.xlu0 %1316
      %1318 = vrot.lane.b32.xlu0 %v1273, 16
      %v1319 = vpop.permute.xlu0 %1318
      %1320 = vrot.lane.b32.xlu0 %v1276, 16
      %v1321 = vpop.permute.xlu0 %1320
      %1322 = vrot.lane.b32.xlu0 %v1279, 16
      %v1323 = vpop.permute.xlu0 %1322
      %1324 = vrot.lane.b32.xlu0 %v1282, 16
      %v1325 = vpop.permute.xlu0 %1324
      %1326 = vrot.lane.b32.xlu0 %v1285, 16
      %v1327 = vpop.permute.xlu0 %1326
      %1328 = vrot.lane.b32.xlu0 %v1288, 16
      %v1329 = vpop.permute.xlu0 %1328
      %1330 = vrot.lane.b32.xlu0 %v1291, 16
      %v1331 = vpop.permute.xlu0 %1330
      %1332 = vrot.lane.b32.xlu0 %v1294, 16
      %v1333 = vpop.permute.xlu0 %1332
      %1334 = vrot.lane.b32.xlu0 %v1297, 16
      %v1335 = vpop.permute.xlu0 %1334
      %1336 = vrot.lane.b32.xlu0 %v1300, 16
      %v1337 = vpop.permute.xlu0 %1336
      %1338 = vrot.lane.b32.xlu0 %v1303, 16
      %v1339 = vpop.permute.xlu0 %1338
      %1340 = vrot.lane.b32.xlu0 %v1306, 16
      %v1341 = vpop.permute.xlu0 %1340
      %1342 = vrot.lane.b32.xlu0 %v1309, 16
      %v1343 = vpop.permute.xlu0 %1342
      %1344 = vrot.lane.b32.xlu0 %v1312, 16
      %v1345 = vpop.permute.xlu0 %1344
      %1346 = vrot.lane.b32.xlu0 %v1315, 16
      %v1347 = vpop.permute.xlu0 %1346
      %v1380 = vunpack.c.l.b16 %v814
      %v1381 = vunpack.c.l.b16 %v815
      %v1382 = vunpack.c.l.b16 %v817
      %v1383 = vunpack.c.l.b16 %v818
      %v1384 = vunpack.c.l.b16 %v820
      %v1385 = vunpack.c.l.b16 %v821
      %v1386 = vunpack.c.l.b16 %v823
      %v1387 = vunpack.c.l.b16 %v824
      %v1388 = vunpack.c.l.b16 %v826
      %v1389 = vunpack.c.l.b16 %v827
      %v1390 = vunpack.c.l.b16 %v829
      %v1391 = vunpack.c.l.b16 %v830
      %v1392 = vunpack.c.l.b16 %v832
      %v1393 = vunpack.c.l.b16 %v833
      %v1394 = vunpack.c.l.b16 %v835
      %v1395 = vunpack.c.l.b16 %v836
      %v1396 = vunpack.c.l.b16 %v838
      %v1397 = vunpack.c.l.b16 %v839
      %v1398 = vunpack.c.l.b16 %v841
      %v1399 = vunpack.c.l.b16 %v842
      %v1400 = vunpack.c.l.b16 %v844
      %v1401 = vunpack.c.l.b16 %v845
      %v1402 = vunpack.c.l.b16 %v847
      %v1403 = vunpack.c.l.b16 %v848
      %v1404 = vunpack.c.l.b16 %v850
      %v1405 = vunpack.c.l.b16 %v851
      %v1406 = vunpack.c.l.b16 %v853
      %v1407 = vunpack.c.l.b16 %v854
      %v1408 = vunpack.c.l.b16 %v856
      %v1409 = vunpack.c.l.b16 %v857
      %v1410 = vunpack.c.l.b16 %v859
      %v1411 = vunpack.c.l.b16 %v860
      %v1412 = vpack.c.b16 %v1381, %v1380
      %v1413 = vpack.c.b16 %v1383, %v1382
      %v1414 = vpack.c.b16 %v1385, %v1384
      %v1415 = vpack.c.b16 %v1387, %v1386
      %v1416 = vpack.c.b16 %v1389, %v1388
      %v1417 = vpack.c.b16 %v1391, %v1390
      %v1418 = vpack.c.b16 %v1393, %v1392
      %v1419 = vpack.c.b16 %v1395, %v1394
      %v1420 = vpack.c.b16 %v1397, %v1396
      %v1421 = vpack.c.b16 %v1399, %v1398
      %v1422 = vpack.c.b16 %v1401, %v1400
      %v1423 = vpack.c.b16 %v1403, %v1402
      %v1424 = vpack.c.b16 %v1405, %v1404
      %v1425 = vpack.c.b16 %v1407, %v1406
      %v1426 = vpack.c.b16 %v1409, %v1408
      %v1427 = vpack.c.b16 %v1411, %v1410
      %1428 = vrot.lane.b32.xlu0 %v1412, 24
      %v1429 = vpop.permute.xlu0 %1428
      %1430 = vrot.lane.b32.xlu0 %v1413, 24
      %v1431 = vpop.permute.xlu0 %1430
      %1432 = vrot.lane.b32.xlu0 %v1414, 24
      %v1433 = vpop.permute.xlu0 %1432
      %1434 = vrot.lane.b32.xlu0 %v1415, 24
      %v1435 = vpop.permute.xlu0 %1434
      %1436 = vrot.lane.b32.xlu0 %v1416, 24
      %v1437 = vpop.permute.xlu0 %1436
      %1438 = vrot.lane.b32.xlu0 %v1417, 24
      %v1439 = vpop.permute.xlu0 %1438
      %1440 = vrot.lane.b32.xlu0 %v1418, 24
      %v1441 = vpop.permute.xlu0 %1440
      %1442 = vrot.lane.b32.xlu0 %v1419, 24
      %v1443 = vpop.permute.xlu0 %1442
      %1444 = vrot.lane.b32.xlu0 %v1420, 24
      %v1445 = vpop.permute.xlu0 %1444
      %1446 = vrot.lane.b32.xlu0 %v1421, 24
      %v1447 = vpop.permute.xlu0 %1446
      %1448 = vrot.lane.b32.xlu0 %v1422, 24
      %v1449 = vpop.permute.xlu0 %1448
      %1450 = vrot.lane.b32.xlu0 %v1423, 24
      %v1451 = vpop.permute.xlu0 %1450
      %1452 = vrot.lane.b32.xlu0 %v1424, 24
      %v1453 = vpop.permute.xlu0 %1452
      %1454 = vrot.lane.b32.xlu0 %v1425, 24
      %v1455 = vpop.permute.xlu0 %1454
      %1456 = vrot.lane.b32.xlu0 %v1426, 24
      %v1457 = vpop.permute.xlu0 %1456
      %1458 = vrot.lane.b32.xlu0 %v1427, 24
      %v1459 = vpop.permute.xlu0 %1458
      %v1476 = vunpack.c.l.b16 %v816
      %v1477 = vunpack.c.l.b16 %v819
      %v1478 = vunpack.c.l.b16 %v822
      %v1479 = vunpack.c.l.b16 %v825
      %v1480 = vunpack.c.l.b16 %v828
      %v1481 = vunpack.c.l.b16 %v831
      %v1482 = vunpack.c.l.b16 %v834
      %v1483 = vunpack.c.l.b16 %v837
      %v1484 = vunpack.c.l.b16 %v840
      %v1485 = vunpack.c.l.b16 %v843
      %v1486 = vunpack.c.l.b16 %v846
      %v1487 = vunpack.c.l.b16 %v849
      %v1488 = vunpack.c.l.b16 %v852
      %v1489 = vunpack.c.l.b16 %v855
      %v1490 = vunpack.c.l.b16 %v858
      %v1491 = vunpack.c.l.b16 %v861
      %v1492 = vpack.c.b16 %v1476, %v1476
      %v1493 = vpack.c.b16 %v1477, %v1477
      %v1494 = vpack.c.b16 %v1478, %v1478
      %v1495 = vpack.c.b16 %v1479, %v1479
      %v1496 = vpack.c.b16 %v1480, %v1480
      %v1497 = vpack.c.b16 %v1481, %v1481
      %v1498 = vpack.c.b16 %v1482, %v1482
      %v1499 = vpack.c.b16 %v1483, %v1483
      %v1500 = vpack.c.b16 %v1484, %v1484
      %v1501 = vpack.c.b16 %v1485, %v1485
      %v1502 = vpack.c.b16 %v1486, %v1486
      %v1503 = vpack.c.b16 %v1487, %v1487
      %v1504 = vpack.c.b16 %v1488, %v1488
      %v1505 = vpack.c.b16 %v1489, %v1489
      %v1506 = vpack.c.b16 %v1490, %v1490
      %v1507 = vpack.c.b16 %v1491, %v1491
      %v1509 = vshrl.u32 %v1412, 16
      %v1511 = vshll.u32 %v1412, 16
      %v1513 = vrot.slane %v1511, 1
      %v1514 = vor.u32 %v1509, %v1513
      %v1516 = vshll.u32 %v1492, 16
      %v1518 = vrot.slane %v1516, 1
      %v1519 = vsel %vm1042, %v1514, %v1518
      %v1521 = vshrl.u32 %v1413, 16
      %v1523 = vshll.u32 %v1413, 16
      %v1525 = vrot.slane %v1523, 1
      %v1526 = vor.u32 %v1521, %v1525
      %v1528 = vshll.u32 %v1493, 16
      %v1530 = vrot.slane %v1528, 1
      %v1531 = vsel %vm1042, %v1526, %v1530
      %v1533 = vshrl.u32 %v1414, 16
      %v1535 = vshll.u32 %v1414, 16
      %v1537 = vrot.slane %v1535, 1
      %v1538 = vor.u32 %v1533, %v1537
      %v1540 = vshll.u32 %v1494, 16
      %v1542 = vrot.slane %v1540, 1
      %v1543 = vsel %vm1042, %v1538, %v1542
      %v1545 = vshrl.u32 %v1415, 16
      %v1547 = vshll.u32 %v1415, 16
      %v1549 = vrot.slane %v1547, 1
      %v1550 = vor.u32 %v1545, %v1549
      %v1552 = vshll.u32 %v1495, 16
      %v1554 = vrot.slane %v1552, 1
      %v1555 = vsel %vm1042, %v1550, %v1554
      %v1557 = vshrl.u32 %v1416, 16
      %v1559 = vshll.u32 %v1416, 16
      %v1561 = vrot.slane %v1559, 1
      %v1562 = vor.u32 %v1557, %v1561
      %v1564 = vshll.u32 %v1496, 16
      %v1566 = vrot.slane %v1564, 1
      %v1567 = vsel %vm1042, %v1562, %v1566
      %v1569 = vshrl.u32 %v1417, 16
      %v1571 = vshll.u32 %v1417, 16
      %v1573 = vrot.slane %v1571, 1
      %v1574 = vor.u32 %v1569, %v1573
      %v1576 = vshll.u32 %v1497, 16
      %v1578 = vrot.slane %v1576, 1
      %v1579 = vsel %vm1042, %v1574, %v1578
      %v1581 = vshrl.u32 %v1418, 16
      %v1583 = vshll.u32 %v1418, 16
      %v1585 = vrot.slane %v1583, 1
      %v1586 = vor.u32 %v1581, %v1585
      %v1588 = vshll.u32 %v1498, 16
      %v1590 = vrot.slane %v1588, 1
      %v1591 = vsel %vm1042, %v1586, %v1590
      %v1593 = vshrl.u32 %v1419, 16
      %v1595 = vshll.u32 %v1419, 16
      %v1597 = vrot.slane %v1595, 1
      %v1598 = vor.u32 %v1593, %v1597
      %v1600 = vshll.u32 %v1499, 16
      %v1602 = vrot.slane %v1600, 1
      %v1603 = vsel %vm1042, %v1598, %v1602
      %v1605 = vshrl.u32 %v1420, 16
      %v1607 = vshll.u32 %v1420, 16
      %v1609 = vrot.slane %v1607, 1
      %v1610 = vor.u32 %v1605, %v1609
      %v1612 = vshll.u32 %v1500, 16
      %v1614 = vrot.slane %v1612, 1
      %v1615 = vsel %vm1042, %v1610, %v1614
      %v1617 = vshrl.u32 %v1421, 16
      %v1619 = vshll.u32 %v1421, 16
      %v1621 = vrot.slane %v1619, 1
      %v1622 = vor.u32 %v1617, %v1621
      %v1624 = vshll.u32 %v1501, 16
      %v1626 = vrot.slane %v1624, 1
      %v1627 = vsel %vm1042, %v1622, %v1626
      %v1629 = vshrl.u32 %v1422, 16
      %v1631 = vshll.u32 %v1422, 16
      %v1633 = vrot.slane %v1631, 1
      %v1634 = vor.u32 %v1629, %v1633
      %v1636 = vshll.u32 %v1502, 16
      %v1638 = vrot.slane %v1636, 1
      %v1639 = vsel %vm1042, %v1634, %v1638
      %v1641 = vshrl.u32 %v1423, 16
      %v1643 = vshll.u32 %v1423, 16
      %v1645 = vrot.slane %v1643, 1
      %v1646 = vor.u32 %v1641, %v1645
      %v1648 = vshll.u32 %v1503, 16
      %v1650 = vrot.slane %v1648, 1
      %v1651 = vsel %vm1042, %v1646, %v1650
      %v1653 = vshrl.u32 %v1424, 16
      %v1655 = vshll.u32 %v1424, 16
      %v1657 = vrot.slane %v1655, 1
      %v1658 = vor.u32 %v1653, %v1657
      %v1660 = vshll.u32 %v1504, 16
      %v1662 = vrot.slane %v1660, 1
      %v1663 = vsel %vm1042, %v1658, %v1662
      %v1665 = vshrl.u32 %v1425, 16
      %v1667 = vshll.u32 %v1425, 16
      %v1669 = vrot.slane %v1667, 1
      %v1670 = vor.u32 %v1665, %v1669
      %v1672 = vshll.u32 %v1505, 16
      %v1674 = vrot.slane %v1672, 1
      %v1675 = vsel %vm1042, %v1670, %v1674
      %v1677 = vshrl.u32 %v1426, 16
      %v1679 = vshll.u32 %v1426, 16
      %v1681 = vrot.slane %v1679, 1
      %v1682 = vor.u32 %v1677, %v1681
      %v1684 = vshll.u32 %v1506, 16
      %v1686 = vrot.slane %v1684, 1
      %v1687 = vsel %vm1042, %v1682, %v1686
      %v1689 = vshrl.u32 %v1427, 16
      %v1691 = vshll.u32 %v1427, 16
      %v1693 = vrot.slane %v1691, 1
      %v1694 = vor.u32 %v1689, %v1693
      %v1696 = vshll.u32 %v1507, 16
      %v1698 = vrot.slane %v1696, 1
      %v1699 = vsel %vm1042, %v1694, %v1698
      %1700 = vrot.lane.b32.xlu0 %v1519, 32
      %v1701 = vpop.permute.xlu0 %1700
      %1702 = vrot.lane.b32.xlu0 %v1531, 32
      %v1703 = vpop.permute.xlu0 %1702
      %1704 = vrot.lane.b32.xlu0 %v1543, 32
      %v1705 = vpop.permute.xlu0 %1704
      %1706 = vrot.lane.b32.xlu0 %v1555, 32
      %v1707 = vpop.permute.xlu0 %1706
      %1708 = vrot.lane.b32.xlu0 %v1567, 32
      %v1709 = vpop.permute.xlu0 %1708
      %1710 = vrot.lane.b32.xlu0 %v1579, 32
      %v1711 = vpop.permute.xlu0 %1710
      %1712 = vrot.lane.b32.xlu0 %v1591, 32
      %v1713 = vpop.permute.xlu0 %1712
      %1714 = vrot.lane.b32.xlu0 %v1603, 32
      %v1715 = vpop.permute.xlu0 %1714
      %1716 = vrot.lane.b32.xlu0 %v1615, 32
      %v1717 = vpop.permute.xlu0 %1716
      %1718 = vrot.lane.b32.xlu0 %v1627, 32
      %v1719 = vpop.permute.xlu0 %1718
      %1720 = vrot.lane.b32.xlu0 %v1639, 32
      %v1721 = vpop.permute.xlu0 %1720
      %1722 = vrot.lane.b32.xlu0 %v1651, 32
      %v1723 = vpop.permute.xlu0 %1722
      %1724 = vrot.lane.b32.xlu0 %v1663, 32
      %v1725 = vpop.permute.xlu0 %1724
      %1726 = vrot.lane.b32.xlu0 %v1675, 32
      %v1727 = vpop.permute.xlu0 %1726
      %1728 = vrot.lane.b32.xlu0 %v1687, 32
      %v1729 = vpop.permute.xlu0 %1728
      %1730 = vrot.lane.b32.xlu0 %v1699, 32
      %v1731 = vpop.permute.xlu0 %1730
      %v1732 = vrot.slane %v1412, 1
      %v1733 = vrot.slane %v1492, 1
      %v1734 = vsel %vm1267, %v1732, %v1733
      %v1735 = vrot.slane %v1413, 1
      %v1736 = vrot.slane %v1493, 1
      %v1737 = vsel %vm1267, %v1735, %v1736
      %v1738 = vrot.slane %v1414, 1
      %v1739 = vrot.slane %v1494, 1
      %v1740 = vsel %vm1267, %v1738, %v1739
      %v1741 = vrot.slane %v1415, 1
      %v1742 = vrot.slane %v1495, 1
      %v1743 = vsel %vm1267, %v1741, %v1742
      %v1744 = vrot.slane %v1416, 1
      %v1745 = vrot.slane %v1496, 1
      %v1746 = vsel %vm1267, %v1744, %v1745
      %v1747 = vrot.slane %v1417, 1
      %v1748 = vrot.slane %v1497, 1
      %v1749 = vsel %vm1267, %v1747, %v1748
      %v1750 = vrot.slane %v1418, 1
      %v1751 = vrot.slane %v1498, 1
      %v1752 = vsel %vm1267, %v1750, %v1751
      %v1753 = vrot.slane %v1419, 1
      %v1754 = vrot.slane %v1499, 1
      %v1755 = vsel %vm1267, %v1753, %v1754
      %v1756 = vrot.slane %v1420, 1
      %v1757 = vrot.slane %v1500, 1
      %v1758 = vsel %vm1267, %v1756, %v1757
      %v1759 = vrot.slane %v1421, 1
      %v1760 = vrot.slane %v1501, 1
      %v1761 = vsel %vm1267, %v1759, %v1760
      %v1762 = vrot.slane %v1422, 1
      %v1763 = vrot.slane %v1502, 1
      %v1764 = vsel %vm1267, %v1762, %v1763
      %v1765 = vrot.slane %v1423, 1
      %v1766 = vrot.slane %v1503, 1
      %v1767 = vsel %vm1267, %v1765, %v1766
      %v1768 = vrot.slane %v1424, 1
      %v1769 = vrot.slane %v1504, 1
      %v1770 = vsel %vm1267, %v1768, %v1769
      %v1771 = vrot.slane %v1425, 1
      %v1772 = vrot.slane %v1505, 1
      %v1773 = vsel %vm1267, %v1771, %v1772
      %v1774 = vrot.slane %v1426, 1
      %v1775 = vrot.slane %v1506, 1
      %v1776 = vsel %vm1267, %v1774, %v1775
      %v1777 = vrot.slane %v1427, 1
      %v1778 = vrot.slane %v1507, 1
      %v1779 = vsel %vm1267, %v1777, %v1778
      %1780 = vrot.lane.b32.xlu0 %v1734, 40
      %v1781 = vpop.permute.xlu0 %1780
      %1782 = vrot.lane.b32.xlu0 %v1737, 40
      %v1783 = vpop.permute.xlu0 %1782
      %1784 = vrot.lane.b32.xlu0 %v1740, 40
      %v1785 = vpop.permute.xlu0 %1784
      %1786 = vrot.lane.b32.xlu0 %v1743, 40
      %v1787 = vpop.permute.xlu0 %1786
      %1788 = vrot.lane.b32.xlu0 %v1746, 40
      %v1789 = vpop.permute.xlu0 %1788
      %1790 = vrot.lane.b32.xlu0 %v1749, 40
      %v1791 = vpop.permute.xlu0 %1790
      %1792 = vrot.lane.b32.xlu0 %v1752, 40
      %v1793 = vpop.permute.xlu0 %1792
      %1794 = vrot.lane.b32.xlu0 %v1755, 40
      %v1795 = vpop.permute.xlu0 %1794
      %1796 = vrot.lane.b32.xlu0 %v1758, 40
      %v1797 = vpop.permute.xlu0 %1796
      %1798 = vrot.lane.b32.xlu0 %v1761, 40
      %v1799 = vpop.permute.xlu0 %1798
      %1800 = vrot.lane.b32.xlu0 %v1764, 40
      %v1801 = vpop.permute.xlu0 %1800
      %1802 = vrot.lane.b32.xlu0 %v1767, 40
      %v1803 = vpop.permute.xlu0 %1802
      %1804 = vrot.lane.b32.xlu0 %v1770, 40
      %v1805 = vpop.permute.xlu0 %1804
      %1806 = vrot.lane.b32.xlu0 %v1773, 40
      %v1807 = vpop.permute.xlu0 %1806
      %1808 = vrot.lane.b32.xlu0 %v1776, 40
      %v1809 = vpop.permute.xlu0 %1808
      %1810 = vrot.lane.b32.xlu0 %v1779, 40
      %v1811 = vpop.permute.xlu0 %1810
      %v1844 = vunpack.c.l.b16 %v866
      %v1845 = vunpack.c.l.b16 %v867
      %v1846 = vunpack.c.l.b16 %v869
      %v1847 = vunpack.c.l.b16 %v870
      %v1848 = vunpack.c.l.b16 %v872
      %v1849 = vunpack.c.l.b16 %v873
      %v1850 = vunpack.c.l.b16 %v875
      %v1851 = vunpack.c.l.b16 %v876
      %v1852 = vunpack.c.l.b16 %v878
      %v1853 = vunpack.c.l.b16 %v879
      %v1854 = vunpack.c.l.b16 %v881
      %v1855 = vunpack.c.l.b16 %v882
      %v1856 = vunpack.c.l.b16 %v884
      %v1857 = vunpack.c.l.b16 %v885
      %v1858 = vunpack.c.l.b16 %v887
      %v1859 = vunpack.c.l.b16 %v888
      %v1860 = vunpack.c.l.b16 %v890
      %v1861 = vunpack.c.l.b16 %v891
      %v1862 = vunpack.c.l.b16 %v893
      %v1863 = vunpack.c.l.b16 %v894
      %v1864 = vunpack.c.l.b16 %v896
      %v1865 = vunpack.c.l.b16 %v897
      %v1866 = vunpack.c.l.b16 %v899
      %v1867 = vunpack.c.l.b16 %v900
      %v1868 = vunpack.c.l.b16 %v902
      %v1869 = vunpack.c.l.b16 %v903
      %v1870 = vunpack.c.l.b16 %v905
      %v1871 = vunpack.c.l.b16 %v906
      %v1872 = vunpack.c.l.b16 %v908
      %v1873 = vunpack.c.l.b16 %v909
      %v1874 = vunpack.c.l.b16 %v911
      %v1875 = vunpack.c.l.b16 %v912
      %v1876 = vpack.c.b16 %v1845, %v1844
      %v1877 = vpack.c.b16 %v1847, %v1846
      %v1878 = vpack.c.b16 %v1849, %v1848
      %v1879 = vpack.c.b16 %v1851, %v1850
      %v1880 = vpack.c.b16 %v1853, %v1852
      %v1881 = vpack.c.b16 %v1855, %v1854
      %v1882 = vpack.c.b16 %v1857, %v1856
      %v1883 = vpack.c.b16 %v1859, %v1858
      %v1884 = vpack.c.b16 %v1861, %v1860
      %v1885 = vpack.c.b16 %v1863, %v1862
      %v1886 = vpack.c.b16 %v1865, %v1864
      %v1887 = vpack.c.b16 %v1867, %v1866
      %v1888 = vpack.c.b16 %v1869, %v1868
      %v1889 = vpack.c.b16 %v1871, %v1870
      %v1890 = vpack.c.b16 %v1873, %v1872
      %v1891 = vpack.c.b16 %v1875, %v1874
      %1892 = vrot.lane.b32.xlu0 %v1876, 48
      %v1893 = vpop.permute.xlu0 %1892
      %1894 = vrot.lane.b32.xlu0 %v1877, 48
      %v1895 = vpop.permute.xlu0 %1894
      %1896 = vrot.lane.b32.xlu0 %v1878, 48
      %v1897 = vpop.permute.xlu0 %1896
      %1898 = vrot.lane.b32.xlu0 %v1879, 48
      %v1899 = vpop.permute.xlu0 %1898
      %1900 = vrot.lane.b32.xlu0 %v1880, 48
      %v1901 = vpop.permute.xlu0 %1900
      %1902 = vrot.lane.b32.xlu0 %v1881, 48
      %v1903 = vpop.permute.xlu0 %1902
      %1904 = vrot.lane.b32.xlu0 %v1882, 48
      %v1905 = vpop.permute.xlu0 %1904
      %1906 = vrot.lane.b32.xlu0 %v1883, 48
      %v1907 = vpop.permute.xlu0 %1906
      %1908 = vrot.lane.b32.xlu0 %v1884, 48
      %v1909 = vpop.permute.xlu0 %1908
      %1910 = vrot.lane.b32.xlu0 %v1885, 48
      %v1911 = vpop.permute.xlu0 %1910
      %1912 = vrot.lane.b32.xlu0 %v1886, 48
      %v1913 = vpop.permute.xlu0 %1912
      %1914 = vrot.lane.b32.xlu0 %v1887, 48
      %v1915 = vpop.permute.xlu0 %1914
      %1916 = vrot.lane.b32.xlu0 %v1888, 48
      %v1917 = vpop.permute.xlu0 %1916
      %1918 = vrot.lane.b32.xlu0 %v1889, 48
      %v1919 = vpop.permute.xlu0 %1918
      %1920 = vrot.lane.b32.xlu0 %v1890, 48
      %v1921 = vpop.permute.xlu0 %1920
      %1922 = vrot.lane.b32.xlu0 %v1891, 48
      %v1923 = vpop.permute.xlu0 %1922
      %v1940 = vunpack.c.l.b16 %v868
      %v1941 = vunpack.c.l.b16 %v871
      %v1942 = vunpack.c.l.b16 %v874
      %v1943 = vunpack.c.l.b16 %v877
      %v1944 = vunpack.c.l.b16 %v880
      %v1945 = vunpack.c.l.b16 %v883
      %v1946 = vunpack.c.l.b16 %v886
      %v1947 = vunpack.c.l.b16 %v889
      %v1948 = vunpack.c.l.b16 %v892
      %v1949 = vunpack.c.l.b16 %v895
      %v1950 = vunpack.c.l.b16 %v898
      %v1951 = vunpack.c.l.b16 %v901
      %v1952 = vunpack.c.l.b16 %v904
      %v1953 = vunpack.c.l.b16 %v907
      %v1954 = vunpack.c.l.b16 %v910
      %v1955 = vunpack.c.l.b16 %v913
      %v1956 = vpack.c.b16 %v1940, %v1940
      %v1957 = vpack.c.b16 %v1941, %v1941
      %v1958 = vpack.c.b16 %v1942, %v1942
      %v1959 = vpack.c.b16 %v1943, %v1943
      %v1960 = vpack.c.b16 %v1944, %v1944
      %v1961 = vpack.c.b16 %v1945, %v1945
      %v1962 = vpack.c.b16 %v1946, %v1946
      %v1963 = vpack.c.b16 %v1947, %v1947
      %v1964 = vpack.c.b16 %v1948, %v1948
      %v1965 = vpack.c.b16 %v1949, %v1949
      %v1966 = vpack.c.b16 %v1950, %v1950
      %v1967 = vpack.c.b16 %v1951, %v1951
      %v1968 = vpack.c.b16 %v1952, %v1952
      %v1969 = vpack.c.b16 %v1953, %v1953
      %v1970 = vpack.c.b16 %v1954, %v1954
      %v1971 = vpack.c.b16 %v1955, %v1955
      %v1973 = vshrl.u32 %v1876, 16
      %v1975 = vshll.u32 %v1876, 16
      %v1977 = vrot.slane %v1975, 1
      %v1978 = vor.u32 %v1973, %v1977
      %v1980 = vshll.u32 %v1956, 16
      %v1982 = vrot.slane %v1980, 1
      %v1983 = vsel %vm1042, %v1978, %v1982
      %v1985 = vshrl.u32 %v1877, 16
      %v1987 = vshll.u32 %v1877, 16
      %v1989 = vrot.slane %v1987, 1
      %v1990 = vor.u32 %v1985, %v1989
      %v1992 = vshll.u32 %v1957, 16
      %v1994 = vrot.slane %v1992, 1
      %v1995 = vsel %vm1042, %v1990, %v1994
      %v1997 = vshrl.u32 %v1878, 16
      %v1999 = vshll.u32 %v1878, 16
      %v2001 = vrot.slane %v1999, 1
      %v2002 = vor.u32 %v1997, %v2001
      %v2004 = vshll.u32 %v1958, 16
      %v2006 = vrot.slane %v2004, 1
      %v2007 = vsel %vm1042, %v2002, %v2006
      %v2009 = vshrl.u32 %v1879, 16
      %v2011 = vshll.u32 %v1879, 16
      %v2013 = vrot.slane %v2011, 1
      %v2014 = vor.u32 %v2009, %v2013
      %v2016 = vshll.u32 %v1959, 16
      %v2018 = vrot.slane %v2016, 1
      %v2019 = vsel %vm1042, %v2014, %v2018
      %v2021 = vshrl.u32 %v1880, 16
      %v2023 = vshll.u32 %v1880, 16
      %v2025 = vrot.slane %v2023, 1
      %v2026 = vor.u32 %v2021, %v2025
      %v2028 = vshll.u32 %v1960, 16
      %v2030 = vrot.slane %v2028, 1
      %v2031 = vsel %vm1042, %v2026, %v2030
      %v2033 = vshrl.u32 %v1881, 16
      %v2035 = vshll.u32 %v1881, 16
      %v2037 = vrot.slane %v2035, 1
      %v2038 = vor.u32 %v2033, %v2037
      %v2040 = vshll.u32 %v1961, 16
      %v2042 = vrot.slane %v2040, 1
      %v2043 = vsel %vm1042, %v2038, %v2042
      %v2045 = vshrl.u32 %v1882, 16
      %v2047 = vshll.u32 %v1882, 16
      %v2049 = vrot.slane %v2047, 1
      %v2050 = vor.u32 %v2045, %v2049
      %v2052 = vshll.u32 %v1962, 16
      %v2054 = vrot.slane %v2052, 1
      %v2055 = vsel %vm1042, %v2050, %v2054
      %v2057 = vshrl.u32 %v1883, 16
      %v2059 = vshll.u32 %v1883, 16
      %v2061 = vrot.slane %v2059, 1
      %v2062 = vor.u32 %v2057, %v2061
      %v2064 = vshll.u32 %v1963, 16
      %v2066 = vrot.slane %v2064, 1
      %v2067 = vsel %vm1042, %v2062, %v2066
      %v2069 = vshrl.u32 %v1884, 16
      %v2071 = vshll.u32 %v1884, 16
      %v2073 = vrot.slane %v2071, 1
      %v2074 = vor.u32 %v2069, %v2073
      %v2076 = vshll.u32 %v1964, 16
      %v2078 = vrot.slane %v2076, 1
      %v2079 = vsel %vm1042, %v2074, %v2078
      %v2081 = vshrl.u32 %v1885, 16
      %v2083 = vshll.u32 %v1885, 16
      %v2085 = vrot.slane %v2083, 1
      %v2086 = vor.u32 %v2081, %v2085
      %v2088 = vshll.u32 %v1965, 16
      %v2090 = vrot.slane %v2088, 1
      %v2091 = vsel %vm1042, %v2086, %v2090
      %v2093 = vshrl.u32 %v1886, 16
      %v2095 = vshll.u32 %v1886, 16
      %v2097 = vrot.slane %v2095, 1
      %v2098 = vor.u32 %v2093, %v2097
      %v2100 = vshll.u32 %v1966, 16
      %v2102 = vrot.slane %v2100, 1
      %v2103 = vsel %vm1042, %v2098, %v2102
      %v2105 = vshrl.u32 %v1887, 16
      %v2107 = vshll.u32 %v1887, 16
      %v2109 = vrot.slane %v2107, 1
      %v2110 = vor.u32 %v2105, %v2109
      %v2112 = vshll.u32 %v1967, 16
      %v2114 = vrot.slane %v2112, 1
      %v2115 = vsel %vm1042, %v2110, %v2114
      %v2117 = vshrl.u32 %v1888, 16
      %v2119 = vshll.u32 %v1888, 16
      %v2121 = vrot.slane %v2119, 1
      %v2122 = vor.u32 %v2117, %v2121
      %v2124 = vshll.u32 %v1968, 16
      %v2126 = vrot.slane %v2124, 1
      %v2127 = vsel %vm1042, %v2122, %v2126
      %v2129 = vshrl.u32 %v1889, 16
      %v2131 = vshll.u32 %v1889, 16
      %v2133 = vrot.slane %v2131, 1
      %v2134 = vor.u32 %v2129, %v2133
      %v2136 = vshll.u32 %v1969, 16
      %v2138 = vrot.slane %v2136, 1
      %v2139 = vsel %vm1042, %v2134, %v2138
      %v2141 = vshrl.u32 %v1890, 16
      %v2143 = vshll.u32 %v1890, 16
      %v2145 = vrot.slane %v2143, 1
      %v2146 = vor.u32 %v2141, %v2145
      %v2148 = vshll.u32 %v1970, 16
      %v2150 = vrot.slane %v2148, 1
      %v2151 = vsel %vm1042, %v2146, %v2150
      %v2153 = vshrl.u32 %v1891, 16
      %v2155 = vshll.u32 %v1891, 16
      %v2157 = vrot.slane %v2155, 1
      %v2158 = vor.u32 %v2153, %v2157
      %v2160 = vshll.u32 %v1971, 16
      %v2162 = vrot.slane %v2160, 1
      %v2163 = vsel %vm1042, %v2158, %v2162
      %2164 = vrot.lane.b32.xlu0 %v1983, 56
      %v2165 = vpop.permute.xlu0 %2164
      %2166 = vrot.lane.b32.xlu0 %v1995, 56
      %v2167 = vpop.permute.xlu0 %2166
      %2168 = vrot.lane.b32.xlu0 %v2007, 56
      %v2169 = vpop.permute.xlu0 %2168
      %2170 = vrot.lane.b32.xlu0 %v2019, 56
      %v2171 = vpop.permute.xlu0 %2170
      %2172 = vrot.lane.b32.xlu0 %v2031, 56
      %v2173 = vpop.permute.xlu0 %2172
      %2174 = vrot.lane.b32.xlu0 %v2043, 56
      %v2175 = vpop.permute.xlu0 %2174
      %2176 = vrot.lane.b32.xlu0 %v2055, 56
      %v2177 = vpop.permute.xlu0 %2176
      %2178 = vrot.lane.b32.xlu0 %v2067, 56
      %v2179 = vpop.permute.xlu0 %2178
      %2180 = vrot.lane.b32.xlu0 %v2079, 56
      %v2181 = vpop.permute.xlu0 %2180
      %2182 = vrot.lane.b32.xlu0 %v2091, 56
      %v2183 = vpop.permute.xlu0 %2182
      %2184 = vrot.lane.b32.xlu0 %v2103, 56
      %v2185 = vpop.permute.xlu0 %2184
      %2186 = vrot.lane.b32.xlu0 %v2115, 56
      %v2187 = vpop.permute.xlu0 %2186
      %2188 = vrot.lane.b32.xlu0 %v2127, 56
      %v2189 = vpop.permute.xlu0 %2188
      %2190 = vrot.lane.b32.xlu0 %v2139, 56
      %v2191 = vpop.permute.xlu0 %2190
      %2192 = vrot.lane.b32.xlu0 %v2151, 56
      %v2193 = vpop.permute.xlu0 %2192
      %2194 = vrot.lane.b32.xlu0 %v2163, 56
      %v2195 = vpop.permute.xlu0 %2194
      %v2196 = vrot.slane %v1876, 1
      %v2197 = vrot.slane %v1956, 1
      %v2198 = vsel %vm1267, %v2196, %v2197
      %v2199 = vrot.slane %v1877, 1
      %v2200 = vrot.slane %v1957, 1
      %v2201 = vsel %vm1267, %v2199, %v2200
      %v2202 = vrot.slane %v1878, 1
      %v2203 = vrot.slane %v1958, 1
      %v2204 = vsel %vm1267, %v2202, %v2203
      %v2205 = vrot.slane %v1879, 1
      %v2206 = vrot.slane %v1959, 1
      %v2207 = vsel %vm1267, %v2205, %v2206
      %v2208 = vrot.slane %v1880, 1
      %v2209 = vrot.slane %v1960, 1
      %v2210 = vsel %vm1267, %v2208, %v2209
      %v2211 = vrot.slane %v1881, 1
      %v2212 = vrot.slane %v1961, 1
      %v2213 = vsel %vm1267, %v2211, %v2212
      %v2214 = vrot.slane %v1882, 1
      %v2215 = vrot.slane %v1962, 1
      %v2216 = vsel %vm1267, %v2214, %v2215
      %v2217 = vrot.slane %v1883, 1
      %v2218 = vrot.slane %v1963, 1
      %v2219 = vsel %vm1267, %v2217, %v2218
      %v2220 = vrot.slane %v1884, 1
      %v2221 = vrot.slane %v1964, 1
      %v2222 = vsel %vm1267, %v2220, %v2221
      %v2223 = vrot.slane %v1885, 1
      %v2224 = vrot.slane %v1965, 1
      %v2225 = vsel %vm1267, %v2223, %v2224
      %v2226 = vrot.slane %v1886, 1
      %v2227 = vrot.slane %v1966, 1
      %v2228 = vsel %vm1267, %v2226, %v2227
      %v2229 = vrot.slane %v1887, 1
      %v2230 = vrot.slane %v1967, 1
      %v2231 = vsel %vm1267, %v2229, %v2230
      %v2232 = vrot.slane %v1888, 1
      %v2233 = vrot.slane %v1968, 1
      %v2234 = vsel %vm1267, %v2232, %v2233
      %v2235 = vrot.slane %v1889, 1
      %v2236 = vrot.slane %v1969, 1
      %v2237 = vsel %vm1267, %v2235, %v2236
      %v2238 = vrot.slane %v1890, 1
      %v2239 = vrot.slane %v1970, 1
      %v2240 = vsel %vm1267, %v2238, %v2239
      %v2241 = vrot.slane %v1891, 1
      %v2242 = vrot.slane %v1971, 1
      %v2243 = vsel %vm1267, %v2241, %v2242
      %2244 = vrot.lane.b32.xlu0 %v2198, 64
      %v2245 = vpop.permute.xlu0 %2244
      %2246 = vrot.lane.b32.xlu0 %v2201, 64
      %v2247 = vpop.permute.xlu0 %2246
      %2248 = vrot.lane.b32.xlu0 %v2204, 64
      %v2249 = vpop.permute.xlu0 %2248
      %2250 = vrot.lane.b32.xlu0 %v2207, 64
      %v2251 = vpop.permute.xlu0 %2250
      %2252 = vrot.lane.b32.xlu0 %v2210, 64
      %v2253 = vpop.permute.xlu0 %2252
      %2254 = vrot.lane.b32.xlu0 %v2213, 64
      %v2255 = vpop.permute.xlu0 %2254
      %2256 = vrot.lane.b32.xlu0 %v2216, 64
      %v2257 = vpop.permute.xlu0 %2256
      %2258 = vrot.lane.b32.xlu0 %v2219, 64
      %v2259 = vpop.permute.xlu0 %2258
      %2260 = vrot.lane.b32.xlu0 %v2222, 64
      %v2261 = vpop.permute.xlu0 %2260
      %2262 = vrot.lane.b32.xlu0 %v2225, 64
      %v2263 = vpop.permute.xlu0 %2262
      %2264 = vrot.lane.b32.xlu0 %v2228, 64
      %v2265 = vpop.permute.xlu0 %2264
      %2266 = vrot.lane.b32.xlu0 %v2231, 64
      %v2267 = vpop.permute.xlu0 %2266
      %2268 = vrot.lane.b32.xlu0 %v2234, 64
      %v2269 = vpop.permute.xlu0 %2268
      %2270 = vrot.lane.b32.xlu0 %v2237, 64
      %v2271 = vpop.permute.xlu0 %2270
      %2272 = vrot.lane.b32.xlu0 %v2240, 64
      %v2273 = vpop.permute.xlu0 %2272
      %2274 = vrot.lane.b32.xlu0 %v2243, 64
      %v2275 = vpop.permute.xlu0 %2274
      %vm2276 = vcmask 64512
      %v2278 = vsel %vm2276, %v978, %v1236
      %v2280 = vsel %vm2276, %v979, %v1238
      %v2282 = vsel %vm2276, %v980, %v1240
      %v2284 = vsel %vm2276, %v981, %v1242
      %v2286 = vsel %vm2276, %v982, %v1244
      %v2288 = vsel %vm2276, %v983, %v1246
      %v2290 = vsel %vm2276, %v984, %v1248
      %v2292 = vsel %vm2276, %v985, %v1250
      %v2294 = vsel %vm2276, %v986, %v1252
      %v2296 = vsel %vm2276, %v987, %v1254
      %v2298 = vsel %vm2276, %v988, %v1256
      %v2300 = vsel %vm2276, %v989, %v1258
      %v2302 = vsel %vm2276, %v990, %v1260
      %v2304 = vsel %vm2276, %v991, %v1262
      %v2306 = vsel %vm2276, %v992, %v1264
      %v2308 = vsel %vm2276, %v993, %v1266
      %vm2309 = vcmask 130048
      %v2311 = vsel %vm2309, %v2278, %v1317
      %v2313 = vsel %vm2309, %v2280, %v1319
      %v2315 = vsel %vm2309, %v2282, %v1321
      %v2317 = vsel %vm2309, %v2284, %v1323
      %v2319 = vsel %vm2309, %v2286, %v1325
      %v2321 = vsel %vm2309, %v2288, %v1327
      %v2323 = vsel %vm2309, %v2290, %v1329
      %v2325 = vsel %vm2309, %v2292, %v1331
      %v2327 = vsel %vm2309, %v2294, %v1333
      %v2329 = vsel %vm2309, %v2296, %v1335
      %v2331 = vsel %vm2309, %v2298, %v1337
      %v2333 = vsel %vm2309, %v2300, %v1339
      %v2335 = vsel %vm2309, %v2302, %v1341
      %v2337 = vsel %vm2309, %v2304, %v1343
      %v2339 = vsel %vm2309, %v2306, %v1345
      %v2341 = vsel %vm2309, %v2308, %v1347
      %vm2342 = vcmask 195584
      %v2344 = vsel %vm2342, %v2311, %v1429
      %v2346 = vsel %vm2342, %v2313, %v1431
      %v2348 = vsel %vm2342, %v2315, %v1433
      %v2350 = vsel %vm2342, %v2317, %v1435
      %v2352 = vsel %vm2342, %v2319, %v1437
      %v2354 = vsel %vm2342, %v2321, %v1439
      %v2356 = vsel %vm2342, %v2323, %v1441
      %v2358 = vsel %vm2342, %v2325, %v1443
      %v2360 = vsel %vm2342, %v2327, %v1445
      %v2362 = vsel %vm2342, %v2329, %v1447
      %v2364 = vsel %vm2342, %v2331, %v1449
      %v2366 = vsel %vm2342, %v2333, %v1451
      %v2368 = vsel %vm2342, %v2335, %v1453
      %v2370 = vsel %vm2342, %v2337, %v1455
      %v2372 = vsel %vm2342, %v2339, %v1457
      %v2374 = vsel %vm2342, %v2341, %v1459
      %vm2375 = vcmask 261120
      %v2377 = vsel %vm2375, %v2344, %v1701
      %v2379 = vsel %vm2375, %v2346, %v1703
      %v2381 = vsel %vm2375, %v2348, %v1705
      %v2383 = vsel %vm2375, %v2350, %v1707
      %v2385 = vsel %vm2375, %v2352, %v1709
      %v2387 = vsel %vm2375, %v2354, %v1711
      %v2389 = vsel %vm2375, %v2356, %v1713
      %v2391 = vsel %vm2375, %v2358, %v1715
      %v2393 = vsel %vm2375, %v2360, %v1717
      %v2395 = vsel %vm2375, %v2362, %v1719
      %v2397 = vsel %vm2375, %v2364, %v1721
      %v2399 = vsel %vm2375, %v2366, %v1723
      %v2401 = vsel %vm2375, %v2368, %v1725
      %v2403 = vsel %vm2375, %v2370, %v1727
      %v2405 = vsel %vm2375, %v2372, %v1729
      %v2407 = vsel %vm2375, %v2374, %v1731
      %vm2408 = vcmask 326656
      %v2410 = vsel %vm2408, %v2377, %v1781
      %v2412 = vsel %vm2408, %v2379, %v1783
      %v2414 = vsel %vm2408, %v2381, %v1785
      %v2416 = vsel %vm2408, %v2383, %v1787
      %v2418 = vsel %vm2408, %v2385, %v1789
      %v2420 = vsel %vm2408, %v2387, %v1791
      %v2422 = vsel %vm2408, %v2389, %v1793
      %v2424 = vsel %vm2408, %v2391, %v1795
      %v2426 = vsel %vm2408, %v2393, %v1797
      %v2428 = vsel %vm2408, %v2395, %v1799
      %v2430 = vsel %vm2408, %v2397, %v1801
      %v2432 = vsel %vm2408, %v2399, %v1803
      %v2434 = vsel %vm2408, %v2401, %v1805
      %v2436 = vsel %vm2408, %v2403, %v1807
      %v2438 = vsel %vm2408, %v2405, %v1809
      %v2440 = vsel %vm2408, %v2407, %v1811
      %vm2441 = vcmask 392192
      %v2443 = vsel %vm2441, %v2410, %v1893
      %v2445 = vsel %vm2441, %v2412, %v1895
      %v2447 = vsel %vm2441, %v2414, %v1897
      %v2449 = vsel %vm2441, %v2416, %v1899
      %v2451 = vsel %vm2441, %v2418, %v1901
      %v2453 = vsel %vm2441, %v2420, %v1903
      %v2455 = vsel %vm2441, %v2422, %v1905
      %v2457 = vsel %vm2441, %v2424, %v1907
      %v2459 = vsel %vm2441, %v2426, %v1909
      %v2461 = vsel %vm2441, %v2428, %v1911
      %v2463 = vsel %vm2441, %v2430, %v1913
      %v2465 = vsel %vm2441, %v2432, %v1915
      %v2467 = vsel %vm2441, %v2434, %v1917
      %v2469 = vsel %vm2441, %v2436, %v1919
      %v2471 = vsel %vm2441, %v2438, %v1921
      %v2473 = vsel %vm2441, %v2440, %v1923
      %vm2474 = vcmask 457728
      %v2476 = vsel %vm2474, %v2443, %v2165
      %v2478 = vsel %vm2474, %v2445, %v2167
      %v2480 = vsel %vm2474, %v2447, %v2169
      %v2482 = vsel %vm2474, %v2449, %v2171
      %v2484 = vsel %vm2474, %v2451, %v2173
      %v2486 = vsel %vm2474, %v2453, %v2175
      %v2488 = vsel %vm2474, %v2455, %v2177
      %v2490 = vsel %vm2474, %v2457, %v2179
      %v2492 = vsel %vm2474, %v2459, %v2181
      %v2494 = vsel %vm2474, %v2461, %v2183
      %v2496 = vsel %vm2474, %v2463, %v2185
      %v2498 = vsel %vm2474, %v2465, %v2187
      %v2500 = vsel %vm2474, %v2467, %v2189
      %v2502 = vsel %vm2474, %v2469, %v2191
      %v2504 = vsel %vm2474, %v2471, %v2193
      %v2506 = vsel %vm2474, %v2473, %v2195
      %vm2507 = vcmask 523264
      %v2509 = vsel %vm2507, %v2476, %v2245
      %v2511 = vsel %vm2507, %v2478, %v2247
      %v2513 = vsel %vm2507, %v2480, %v2249
      %v2515 = vsel %vm2507, %v2482, %v2251
      %v2517 = vsel %vm2507, %v2484, %v2253
      %v2519 = vsel %vm2507, %v2486, %v2255
      %v2521 = vsel %vm2507, %v2488, %v2257
      %v2523 = vsel %vm2507, %v2490, %v2259
      %v2525 = vsel %vm2507, %v2492, %v2261
      %v2527 = vsel %vm2507, %v2494, %v2263
      %v2529 = vsel %vm2507, %v2496, %v2265
      %v2531 = vsel %vm2507, %v2498, %v2267
      %v2533 = vsel %vm2507, %v2500, %v2269
      %v2535 = vsel %vm2507, %v2502, %v2271
      %v2537 = vsel %vm2507, %v2504, %v2273
      %v2539 = vsel %vm2507, %v2506, %v2275
      %v2540 = vld [vmem:[%s1] sm:$0xf]
      %v2541 = vld [vmem:[%s1 + $0x4] sm:$0xf]
      %v2542 = vld [vmem:[%s1 + $0x8] sm:$0xf]
      %v2543 = vld [vmem:[%s1 + $0xc] sm:$0xf]
      %v2544 = vld [vmem:[%s1 + $0x10] sm:$0xf]
      %v2545 = vld [vmem:[%s1 + $0x14] sm:$0xf]
      %v2546 = vld [vmem:[%s1 + $0x18] sm:$0xf]
      %v2547 = vld [vmem:[%s1 + $0x1c] sm:$0xf]
      %v2548 = vld [vmem:[%s1 + $0x20] sm:$0xf]
      %v2549 = vld [vmem:[%s2] sm:$0x1]
      %v2550 = vlaneseq
      %v2551 = vshrl.u32 %v2550, 7
      %v2552 = vsub.s32 0, %v2551
      %v2553 = vrot.slane %v2549, %v2552
      %v2563 = vunpack.c.l.b16 %v2540
      %v2564 = vunpack.c.l.b16 %v2541
      %v2565 = vunpack.c.l.b16 %v2542
      %v2566 = vunpack.c.l.b16 %v2543
      %v2567 = vunpack.c.l.b16 %v2544
      %v2568 = vunpack.c.l.b16 %v2545
      %v2569 = vunpack.c.l.b16 %v2546
      %v2570 = vunpack.c.l.b16 %v2547
      %v2571 = vunpack.c.l.b16 %v2548
      %v2572 = vpack.c.b16 %v2564, %v2563
      %v2573 = vpack.c.b16 %v2566, %v2565
      %v2574 = vpack.c.b16 %v2568, %v2567
      %v2575 = vpack.c.b16 %v2570, %v2569
      %v2576 = vpack.c.b16 %v2571, %v2571
      %vm2581 = vcmask 588800
      %v2582 = vsel %vm2581, %v2509, 0
      %v2584 = vsel %vm2581, %v2511, 0
      %v2586 = vsel %vm2581, %v2513, 0
      %v2588 = vsel %vm2581, %v2515, 0
      %v2590 = vsel %vm2581, %v2517, 0
      %v2592 = vsel %vm2581, %v2519, 0
      %v2594 = vsel %vm2581, %v2521, 0
      %v2596 = vsel %vm2581, %v2523, 0
      %v2598 = vsel %vm2581, %v2525, 0
      %v2600 = vsel %vm2581, %v2527, 0
      %v2602 = vsel %vm2581, %v2529, 0
      %v2604 = vsel %vm2581, %v2531, 0
      %v2606 = vsel %vm2581, %v2533, 0
      %v2608 = vsel %vm2581, %v2535, 0
      %v2610 = vsel %vm2581, %v2537, 0
      %v2612 = vsel %vm2581, %v2539, 0
      %vm2614 = vcmask 1043456
      %v2616 = vsel %vm2614, %v2576, 0
      %2618 = vmatprep.subr.bf16.mxu0 0
      %2619 = vmatpush1.bf16.msra.mxu0 %v2572
      %2620 = vmatprep.subr.bf16.mxu0 0
      %2621 = vmatpush1.bf16.msra.mxu0 %v2573
      %2622 = vmatprep.subr.bf16.mxu0 0
      %2623 = vmatpush1.bf16.msra.mxu0 %v2574
      %2624 = vmatprep.subr.bf16.mxu0 0
      %2625 = vmatpush1.bf16.msra.mxu0 %v2575
      %2626 = vmatprep.subr.bf16.mxu0 0
      %2627 = vmatpush1.bf16.msra.mxu0 %v2616
      %2628 = vmatprep.subr.bf16.mxu0 0
      %2629 = vmatpush1.bf16.msra.mxu0 0
      %2630 = vmatprep.subr.bf16.mxu0 0
      %2631 = vmatpush1.bf16.msra.mxu0 0
      %2632 = vmatprep.subr.bf16.mxu0 0
      %2633 = vmatpush1.bf16.msra.mxu0 0
      %2634 = vmatprep.subr.bf16.mxu0 0
      %2635 = vmatpush1.bf16.msra.mxu0 0
      %2636 = vmatprep.subr.bf16.mxu0 0
      %2637 = vmatpush1.bf16.msra.mxu0 0
      %2638 = vmatprep.subr.bf16.mxu0 0
      %2639 = vmatpush1.bf16.msra.mxu0 0
      %2640 = vmatprep.subr.bf16.mxu0 0
      %2641 = vmatpush1.bf16.msra.mxu0 0
      %2642 = vmatprep.subr.bf16.mxu0 0
      %2643 = vmatpush1.bf16.msra.mxu0 0
      %2644 = vmatprep.subr.bf16.mxu0 0
      %2645 = vmatpush1.bf16.msra.mxu0 0
      %2646 = vmatprep.subr.bf16.mxu0 0
      %2647 = vmatpush1.bf16.msra.mxu0 0
      %2648 = vmatprep.subr.bf16.mxu0 0
      %2649 = vmatpush1.bf16.msra.mxu0 0
      %2650 = vmatprep.mubr.bf16.mxu0 0
      %2651 = vmatmul.mubr.bf16.gmra.mrb[0].mxu0 %v2582
      %v2652 = vpop.f32.mrb[0].mxu0
      %v2653 = vadd.f32 %v2553, %v2652
      %v2654 = vpop.f32.mrb[0].mxu0
      %v2655 = vpop.f32.mrb[0].mxu0
      %v2656 = vadd.f32 %v2553, %v2655
      %v2657 = vpop.f32.mrb[0].mxu0
      %2658 = vmatprep.mubr.bf16.mxu0 0
      %2659 = vmatmul.mubr.bf16.gmra.mrb[0].mxu0 %v2584
      %v2660 = vpop.f32.mrb[0].mxu0
      %v2661 = vadd.f32 %v2553, %v2660
      %v2662 = vpop.f32.mrb[0].mxu0
      %v2663 = vpop.f32.mrb[0].mxu0
      %v2664 = vadd.f32 %v2553, %v2663
      %v2665 = vpop.f32.mrb[0].mxu0
      %2666 = vmatprep.mubr.bf16.mxu0 0
      %2667 = vmatmul.mubr.bf16.gmra.mrb[0].mxu0 %v2586
      %v2668 = vpop.f32.mrb[0].mxu0
      %v2669 = vadd.f32 %v2553, %v2668
      %v2670 = vpop.f32.mrb[0].mxu0
      %v2671 = vpop.f32.mrb[0].mxu0
      %v2672 = vadd.f32 %v2553, %v2671
      %v2673 = vpop.f32.mrb[0].mxu0
      %2674 = vmatprep.mubr.bf16.mxu0 0
      %2675 = vmatmul.mubr.bf16.gmra.mrb[0].mxu0 %v2588
      %v2676 = vpop.f32.mrb[0].mxu0
      %v2677 = vadd.f32 %v2553, %v2676
      %v2678 = vpop.f32.mrb[0].mxu0
      %v2679 = vpop.f32.mrb[0].mxu0
      %v2680 = vadd.f32 %v2553, %v2679
      %v2681 = vpop.f32.mrb[0].mxu0
      %2682 = vmatprep.mubr.bf16.mxu0 0
      %2683 = vmatmul.mubr.bf16.gmra.mrb[0].mxu0 %v2590
      %v2684 = vpop.f32.mrb[0].mxu0
      %v2685 = vadd.f32 %v2553, %v2684
      %v2686 = vpop.f32.mrb[0].mxu0
      %v2687 = vpop.f32.mrb[0].mxu0
      %v2688 = vadd.f32 %v2553, %v2687
      %v2689 = vpop.f32.mrb[0].mxu0
      %2690 = vmatprep.mubr.bf16.mxu0 0
      %2691 = vmatmul.mubr.bf16.gmra.mrb[0].mxu0 %v2592
      %v2692 = vpop.f32.mrb[0].mxu0
      %v2693 = vadd.f32 %v2553, %v2692
      %v2694 = vpop.f32.mrb[0].mxu0
      %v2695 = vpop.f32.mrb[0].mxu0
      %v2696 = vadd.f32 %v2553, %v2695
      %v2697 = vpop.f32.mrb[0].mxu0
      %2698 = vmatprep.mubr.bf16.mxu0 0
      %2699 = vmatmul.mubr.bf16.gmra.mrb[0].mxu0 %v2594
      %v2700 = vpop.f32.mrb[0].mxu0
      %v2701 = vadd.f32 %v2553, %v2700
      %v2702 = vpop.f32.mrb[0].mxu0
      %v2703 = vpop.f32.mrb[0].mxu0
      %v2704 = vadd.f32 %v2553, %v2703
      %v2705 = vpop.f32.mrb[0].mxu0
      %2706 = vmatprep.mubr.bf16.mxu0 0
      %2707 = vmatmul.mubr.bf16.gmra.mrb[0].mxu0 %v2596
      %v2708 = vpop.f32.mrb[0].mxu0
      %v2709 = vadd.f32 %v2553, %v2708
      %v2710 = vpop.f32.mrb[0].mxu0
      %v2711 = vpop.f32.mrb[0].mxu0
      %v2712 = vadd.f32 %v2553, %v2711
      %v2713 = vpop.f32.mrb[0].mxu0
      %2714 = vmatprep.mubr.bf16.mxu0 0
      %2715 = vmatmul.mubr.bf16.gmra.mrb[0].mxu0 %v2598
      %v2716 = vpop.f32.mrb[0].mxu0
      %v2717 = vadd.f32 %v2553, %v2716
      %v2718 = vpop.f32.mrb[0].mxu0
      %v2719 = vpop.f32.mrb[0].mxu0
      %v2720 = vadd.f32 %v2553, %v2719
      %v2721 = vpop.f32.mrb[0].mxu0
      %2722 = vmatprep.mubr.bf16.mxu0 0
      %2723 = vmatmul.mubr.bf16.gmra.mrb[0].mxu0 %v2600
      %v2724 = vpop.f32.mrb[0].mxu0
      %v2725 = vadd.f32 %v2553, %v2724
      %v2726 = vpop.f32.mrb[0].mxu0
      %v2727 = vpop.f32.mrb[0].mxu0
      %v2728 = vadd.f32 %v2553, %v2727
      %v2729 = vpop.f32.mrb[0].mxu0
      %2730 = vmatprep.mubr.bf16.mxu0 0
      %2731 = vmatmul.mubr.bf16.gmra.mrb[0].mxu0 %v2602
      %v2732 = vpop.f32.mrb[0].mxu0
      %v2733 = vadd.f32 %v2553, %v2732
      %v2734 = vpop.f32.mrb[0].mxu0
      %v2735 = vpop.f32.mrb[0].mxu0
      %v2736 = vadd.f32 %v2553, %v2735
      %v2737 = vpop.f32.mrb[0].mxu0
      %2738 = vmatprep.mubr.bf16.mxu0 0
      %2739 = vmatmul.mubr.bf16.gmra.mrb[0].mxu0 %v2604
      %v2740 = vpop.f32.mrb[0].mxu0
      %v2741 = vadd.f32 %v2553, %v2740
      %v2742 = vpop.f32.mrb[0].mxu0
      %v2743 = vpop.f32.mrb[0].mxu0
      %v2744 = vadd.f32 %v2553, %v2743
      %v2745 = vpop.f32.mrb[0].mxu0
      %2746 = vmatprep.mubr.bf16.mxu0 0
      %2747 = vmatmul.mubr.bf16.gmra.mrb[0].mxu0 %v2606
      %v2748 = vpop.f32.mrb[0].mxu0
      %v2749 = vadd.f32 %v2553, %v2748
      %v2750 = vpop.f32.mrb[0].mxu0
      %v2751 = vpop.f32.mrb[0].mxu0
      %v2752 = vadd.f32 %v2553, %v2751
      %v2753 = vpop.f32.mrb[0].mxu0
      %2754 = vmatprep.mubr.bf16.mxu0 0
      %2755 = vmatmul.mubr.bf16.gmra.mrb[0].mxu0 %v2608
      %v2756 = vpop.f32.mrb[0].mxu0
      %v2757 = vadd.f32 %v2553, %v2756
      %v2758 = vpop.f32.mrb[0].mxu0
      %v2759 = vpop.f32.mrb[0].mxu0
      %v2760 = vadd.f32 %v2553, %v2759
      %v2761 = vpop.f32.mrb[0].mxu0
      %2762 = vmatprep.mubr.bf16.mxu0 0
      %2763 = vmatmul.mubr.bf16.gmra.mrb[0].mxu0 %v2610
      %v2764 = vpop.f32.mrb[0].mxu0
      %v2765 = vadd.f32 %v2553, %v2764
      %v2766 = vpop.f32.mrb[0].mxu0
      %v2767 = vpop.f32.mrb[0].mxu0
      %v2768 = vadd.f32 %v2553, %v2767
      %v2769 = vpop.f32.mrb[0].mxu0
      %2770 = vmatprep.mubr.bf16.mxu0 0
      %2771 = vmatmul.mubr.bf16.gmra.mrb[0].mxu0 %v2612
      %v2772 = vpop.f32.mrb[0].mxu0
      %v2773 = vadd.f32 %v2553, %v2772
      %v2774 = vpop.f32.mrb[0].mxu0
      %v2775 = vpop.f32.mrb[0].mxu0
      %v2776 = vadd.f32 %v2553, %v2775
      %v2777 = vpop.f32.mrb[0].mxu0
      %2778 = vdwg.mxu0
      %v2779 = vmax.f32 %v2653, 0.0
      %v2780 = vmax.f32 %v2656, 0.0
      %v2781 = vmax.f32 %v2661, 0.0
      %v2782 = vmax.f32 %v2664, 0.0
      %v2783 = vmax.f32 %v2669, 0.0
      %v2784 = vmax.f32 %v2672, 0.0
      %v2785 = vmax.f32 %v2677, 0.0
      %v2786 = vmax.f32 %v2680, 0.0
      %v2787 = vmax.f32 %v2685, 0.0
      %v2788 = vmax.f32 %v2688, 0.0
      %v2789 = vmax.f32 %v2693, 0.0
      %v2790 = vmax.f32 %v2696, 0.0
      %v2791 = vmax.f32 %v2701, 0.0
      %v2792 = vmax.f32 %v2704, 0.0
      %v2793 = vmax.f32 %v2709, 0.0
      %v2794 = vmax.f32 %v2712, 0.0
      %v2795 = vmax.f32 %v2717, 0.0
      %v2796 = vmax.f32 %v2720, 0.0
      %v2797 = vmax.f32 %v2725, 0.0
      %v2798 = vmax.f32 %v2728, 0.0
      %v2799 = vmax.f32 %v2733, 0.0
      %v2800 = vmax.f32 %v2736, 0.0
      %v2801 = vmax.f32 %v2741, 0.0
      %v2802 = vmax.f32 %v2744, 0.0
      %v2803 = vmax.f32 %v2749, 0.0
      %v2804 = vmax.f32 %v2752, 0.0
      %v2805 = vmax.f32 %v2757, 0.0
      %v2806 = vmax.f32 %v2760, 0.0
      %v2807 = vmax.f32 %v2765, 0.0
      %v2808 = vmax.f32 %v2768, 0.0
      %v2809 = vmax.f32 %v2773, 0.0
      %v2810 = vmax.f32 %v2776, 0.0
      // Predicated region
      $region41: #{convolution_block.2} parent=31 // pred_check
        %p2811 = pneg %p214
      $region42: #{convolution_block.2} parent=31 // pred_check_branch
        %2813 = sbr.rel (%p2811) target = $region44
      $region43: #{convolution_block.2} parent=31 // pred_region
        %v2814 = vld [vmem:[#allocation3] sm:$0x1]
        %v2815 = vsel %vm2276, %v2779, 0.0
        %v2816 = vsel %vm2276, %v2780, 0.0
        %v2817 = vadd.f32 %v2815, %v2816
        %v2818 = vsel %vm2276, %v2781, 0.0
        %v2819 = vadd.f32 %v2817, %v2818
        %v2820 = vsel %vm2276, %v2782, 0.0
        %v2821 = vadd.f32 %v2819, %v2820
        %v2822 = vsel %vm2276, %v2783, 0.0
        %v2823 = vadd.f32 %v2821, %v2822
        %v2824 = vsel %vm2276, %v2784, 0.0
        %v2825 = vadd.f32 %v2823, %v2824
        %v2826 = vsel %vm2276, %v2785, 0.0
        %v2827 = vadd.f32 %v2825, %v2826
        %v2828 = vsel %vm2276, %v2786, 0.0
        %v2829 = vadd.f32 %v2827, %v2828
        %v2830 = vsel %vm2276, %v2787, 0.0
        %v2831 = vadd.f32 %v2829, %v2830
        %v2832 = vsel %vm2276, %v2788, 0.0
        %v2833 = vadd.f32 %v2831, %v2832
        %v2834 = vsel %vm2276, %v2789, 0.0
        %v2835 = vadd.f32 %v2833, %v2834
        %v2836 = vsel %vm2276, %v2790, 0.0
        %v2837 = vadd.f32 %v2835, %v2836
        %v2838 = vsel %vm2276, %v2791, 0.0
        %v2839 = vadd.f32 %v2837, %v2838
        %v2840 = vsel %vm2276, %v2792, 0.0
        %v2841 = vadd.f32 %v2839, %v2840
        %v2842 = vsel %vm2276, %v2793, 0.0
        %v2843 = vadd.f32 %v2841, %v2842
        %v2844 = vsel %vm2276, %v2794, 0.0
        %v2845 = vadd.f32 %v2843, %v2844
        %v2846 = vsel %vm2276, %v2795, 0.0
        %v2847 = vadd.f32 %v2845, %v2846
        %v2848 = vsel %vm2276, %v2796, 0.0
        %v2849 = vadd.f32 %v2847, %v2848
        %v2850 = vsel %vm2276, %v2797, 0.0
        %v2851 = vadd.f32 %v2849, %v2850
        %v2852 = vsel %vm2276, %v2798, 0.0
        %v2853 = vadd.f32 %v2851, %v2852
        %v2854 = vsel %vm2276, %v2799, 0.0
        %v2855 = vadd.f32 %v2853, %v2854
        %v2856 = vsel %vm2276, %v2800, 0.0
        %v2857 = vadd.f32 %v2855, %v2856
        %v2858 = vsel %vm2276, %v2801, 0.0
        %v2859 = vadd.f32 %v2857, %v2858
        %v2860 = vsel %vm2276, %v2802, 0.0
        %v2861 = vadd.f32 %v2859, %v2860
        %v2862 = vsel %vm2276, %v2803, 0.0
        %v2863 = vadd.f32 %v2861, %v2862
        %v2864 = vsel %vm2276, %v2804, 0.0
        %v2865 = vadd.f32 %v2863, %v2864
        %v2866 = vsel %vm2276, %v2805, 0.0
        %v2867 = vadd.f32 %v2865, %v2866
        %v2868 = vsel %vm2276, %v2806, 0.0
        %v2869 = vadd.f32 %v2867, %v2868
        %v2870 = vsel %vm2276, %v2807, 0.0
        %v2871 = vadd.f32 %v2869, %v2870
        %v2872 = vsel %vm2276, %v2808, 0.0
        %v2873 = vadd.f32 %v2871, %v2872
        %v2874 = vsel %vm2276, %v2809, 0.0
        %v2875 = vadd.f32 %v2873, %v2874
        %v2876 = vsel %vm2276, %v2810, 0.0
        %v2877 = vadd.f32 %v2875, %v2876
        %v2878 = vrot.slane %v2877, 4
        %v2879 = vadd.f32 %v2877, %v2878
        %v2880 = vrot.slane %v2879, 2
        %v2881 = vadd.f32 %v2879, %v2880
        %v2882 = vrot.slane %v2881, 1
        %v2883 = vadd.f32 %v2881, %v2882
        %v2884 = vadd.f32 %v2814, %v2883
        %vm2885 = vcmask 57344
        %2886 = vst.msk [vmem:[#allocation3] sm:$0x1] %vm2885, %v2884
        %v2887 = vld [vmem:[#allocation4] sm:$0x1]
        %v2888 = vmul.f32 %v2779, %v2779
        %v2889 = vmul.f32 %v2780, %v2780
        %v2890 = vmul.f32 %v2781, %v2781
        %v2891 = vmul.f32 %v2782, %v2782
        %v2892 = vmul.f32 %v2783, %v2783
        %v2893 = vmul.f32 %v2784, %v2784
        %v2894 = vmul.f32 %v2785, %v2785
        %v2895 = vmul.f32 %v2786, %v2786
        %v2896 = vmul.f32 %v2787, %v2787
        %v2897 = vmul.f32 %v2788, %v2788
        %v2898 = vmul.f32 %v2789, %v2789
        %v2899 = vmul.f32 %v2790, %v2790
        %v2900 = vmul.f32 %v2791, %v2791
        %v2901 = vmul.f32 %v2792, %v2792
        %v2902 = vmul.f32 %v2793, %v2793
        %v2903 = vmul.f32 %v2794, %v2794
        %v2904 = vmul.f32 %v2795, %v2795
        %v2905 = vmul.f32 %v2796, %v2796
        %v2906 = vmul.f32 %v2797, %v2797
        %v2907 = vmul.f32 %v2798, %v2798
        %v2908 = vmul.f32 %v2799, %v2799
        %v2909 = vmul.f32 %v2800, %v2800
        %v2910 = vmul.f32 %v2801, %v2801
        %v2911 = vmul.f32 %v2802, %v2802
        %v2912 = vmul.f32 %v2803, %v2803
        %v2913 = vmul.f32 %v2804, %v2804
        %v2914 = vmul.f32 %v2805, %v2805
        %v2915 = vmul.f32 %v2806, %v2806
        %v2916 = vmul.f32 %v2807, %v2807
        %v2917 = vmul.f32 %v2808, %v2808
        %v2918 = vmul.f32 %v2809, %v2809
        %v2919 = vmul.f32 %v2810, %v2810
        %v2920 = vsel %vm2276, %v2888, 0.0
        %v2921 = vsel %vm2276, %v2889, 0.0
        %v2922 = vadd.f32 %v2920, %v2921
        %v2923 = vsel %vm2276, %v2890, 0.0
        %v2924 = vadd.f32 %v2922, %v2923
        %v2925 = vsel %vm2276, %v2891, 0.0
        %v2926 = vadd.f32 %v2924, %v2925
        %v2927 = vsel %vm2276, %v2892, 0.0
        %v2928 = vadd.f32 %v2926, %v2927
        %v2929 = vsel %vm2276, %v2893, 0.0
        %v2930 = vadd.f32 %v2928, %v2929
        %v2931 = vsel %vm2276, %v2894, 0.0
        %v2932 = vadd.f32 %v2930, %v2931
        %v2933 = vsel %vm2276, %v2895, 0.0
        %v2934 = vadd.f32 %v2932, %v2933
        %v2935 = vsel %vm2276, %v2896, 0.0
        %v2936 = vadd.f32 %v2934, %v2935
        %v2937 = vsel %vm2276, %v2897, 0.0
        %v2938 = vadd.f32 %v2936, %v2937
        %v2939 = vsel %vm2276, %v2898, 0.0
        %v2940 = vadd.f32 %v2938, %v2939
        %v2941 = vsel %vm2276, %v2899, 0.0
        %v2942 = vadd.f32 %v2940, %v2941
        %v2943 = vsel %vm2276, %v2900, 0.0
        %v2944 = vadd.f32 %v2942, %v2943
        %v2945 = vsel %vm2276, %v2901, 0.0
        %v2946 = vadd.f32 %v2944, %v2945
        %v2947 = vsel %vm2276, %v2902, 0.0
        %v2948 = vadd.f32 %v2946, %v2947
        %v2949 = vsel %vm2276, %v2903, 0.0
        %v2950 = vadd.f32 %v2948, %v2949
        %v2951 = vsel %vm2276, %v2904, 0.0
        %v2952 = vadd.f32 %v2950, %v2951
        %v2953 = vsel %vm2276, %v2905, 0.0
        %v2954 = vadd.f32 %v2952, %v2953
        %v2955 = vsel %vm2276, %v2906, 0.0
        %v2956 = vadd.f32 %v2954, %v2955
        %v2957 = vsel %vm2276, %v2907, 0.0
        %v2958 = vadd.f32 %v2956, %v2957
        %v2959 = vsel %vm2276, %v2908, 0.0
        %v2960 = vadd.f32 %v2958, %v2959
        %v2961 = vsel %vm2276, %v2909, 0.0
        %v2962 = vadd.f32 %v2960, %v2961
        %v2963 = vsel %vm2276, %v2910, 0.0
        %v2964 = vadd.f32 %v2962, %v2963
        %v2965 = vsel %vm2276, %v2911, 0.0
        %v2966 = vadd.f32 %v2964, %v2965
        %v2967 = vsel %vm2276, %v2912, 0.0
        %v2968 = vadd.f32 %v2966, %v2967
        %v2969 = vsel %vm2276, %v2913, 0.0
        %v2970 = vadd.f32 %v2968, %v2969
        %v2971 = vsel %vm2276, %v2914, 0.0
        %v2972 = vadd.f32 %v2970, %v2971
        %v2973 = vsel %vm2276, %v2915, 0.0
        %v2974 = vadd.f32 %v2972, %v2973
        %v2975 = vsel %vm2276, %v2916, 0.0
        %v2976 = vadd.f32 %v2974, %v2975
        %v2977 = vsel %vm2276, %v2917, 0.0
        %v2978 = vadd.f32 %v2976, %v2977
        %v2979 = vsel %vm2276, %v2918, 0.0
        %v2980 = vadd.f32 %v2978, %v2979
        %v2981 = vsel %vm2276, %v2919, 0.0
        %v2982 = vadd.f32 %v2980, %v2981
        %v2983 = vrot.slane %v2982, 4
        %v2984 = vadd.f32 %v2982, %v2983
        %v2985 = vrot.slane %v2984, 2
        %v2986 = vadd.f32 %v2984, %v2985
        %v2987 = vrot.slane %v2986, 1
        %v2988 = vadd.f32 %v2986, %v2987
        %v2989 = vadd.f32 %v2887, %v2988
        %2990 = vst.msk [vmem:[#allocation4] sm:$0x1] %vm2885, %v2989
      $region44: #{convolution_block.2} parent=31 // pred_fallthru
        _
      %p2991 = scmp.eq.s32.totalorder %s19, 1
      %p2992 = pnand %p2991, %p215
      %p2993 = pneg %p2992
      %p2994 = pnand %p2993, %p218
      %p2995 = pneg %p2994
      // Predicated region
      $region45: #{convolution_block.2} parent=31 // pred_check
        _
      $region46: #{convolution_block.2} parent=31 // pred_check_branch
        %2997 = sbr.rel (%p2994) target = $region48
      $region47: #{convolution_block.2} parent=31 // pred_region
        %v2998 = vld [vmem:[#allocation3] sm:$0x1]
        %v2999 = vmul.f32 %v2998, 0.001953125
        %v3000 = vld [vmem:[#allocation4] sm:$0x1]
        %v3001 = vmul.f32 %v3000, 0.001953125
        %v3002 = vmul.f32 %v2999, %v2999
        %v3003 = vsub.f32 %v3001, %v3002
        %v3004 = vmax.f32 %v3003, 0.0
        %v3005 = vld [vmem:[%s2 + $0x1] sm:$0x1]
        %v3006 = vadd.f32 %v3004, 1e-05
        %v3007 = vrsqrt.pop %v3006
        %v3008 = vmul.f32 %v3005, %v3007
        %vm3009 = vcmask 57344
        %3010 = vst.msk [vmem:[#allocation5] sm:$0x1] %vm3009, %v3008
        %v3011 = vld [vmem:[%s2 + $0x2] sm:$0x1]
        %v3012 = vmul.f32 %v3008, %v2999
        %v3013 = vsub.f32 %v3011, %v3012
        %3014 = vst.msk [vmem:[#allocation5 + $0x1] sm:$0x1] %vm3009, %v3013
      $region48: #{convolution_block.2} parent=31 // pred_fallthru
        _
      // Predicated region
      $region49: #{convolution_block.2} parent=31 // pred_check
        %p3015 = pneg %p2991
      $region50: #{convolution_block.2} parent=31 // pred_check_branch
        %3017 = sbr.rel (%p3015) target = $region52
      $region51: #{convolution_block.2} parent=31 // pred_region
        %v3018 = vld [vmem:[#allocation5] sm:$0x1]
        %v3019 = vlaneseq
        %v3020 = vshrl.u32 %v3019, 7
        %v3021 = vsub.s32 0, %v3020
        %v3022 = vrot.slane %v3018, %v3021
        %v3023 = vmul.f32 %v2779, %v3022
        %v3024 = vmul.f32 %v2780, %v3022
        %v3025 = vmul.f32 %v2781, %v3022
        %v3026 = vmul.f32 %v2782, %v3022
        %v3027 = vmul.f32 %v2783, %v3022
        %v3028 = vmul.f32 %v2784, %v3022
        %v3029 = vmul.f32 %v2785, %v3022
        %v3030 = vmul.f32 %v2786, %v3022
        %v3031 = vmul.f32 %v2787, %v3022
        %v3032 = vmul.f32 %v2788, %v3022
        %v3033 = vmul.f32 %v2789, %v3022
        %v3034 = vmul.f32 %v2790, %v3022
        %v3035 = vmul.f32 %v2791, %v3022
        %v3036 = vmul.f32 %v2792, %v3022
        %v3037 = vmul.f32 %v2793, %v3022
        %v3038 = vmul.f32 %v2794, %v3022
        %v3039 = vmul.f32 %v2795, %v3022
        %v3040 = vmul.f32 %v2796, %v3022
        %v3041 = vmul.f32 %v2797, %v3022
        %v3042 = vmul.f32 %v2798, %v3022
        %v3043 = vmul.f32 %v2799, %v3022
        %v3044 = vmul.f32 %v2800, %v3022
        %v3045 = vmul.f32 %v2801, %v3022
        %v3046 = vmul.f32 %v2802, %v3022
        %v3047 = vmul.f32 %v2803, %v3022
        %v3048 = vmul.f32 %v2804, %v3022
        %v3049 = vmul.f32 %v2805, %v3022
        %v3050 = vmul.f32 %v2806, %v3022
        %v3051 = vmul.f32 %v2807, %v3022
        %v3052 = vmul.f32 %v2808, %v3022
        %v3053 = vmul.f32 %v2809, %v3022
        %v3054 = vmul.f32 %v2810, %v3022
        %v3055 = vld [vmem:[#allocation5 + $0x1] sm:$0x1]
        %v3056 = vlaneseq
        %v3057 = vshrl.u32 %v3056, 7
        %v3058 = vsub.s32 0, %v3057
        %v3059 = vrot.slane %v3055, %v3058
        %v3060 = vadd.f32 %v3023, %v3059
        %v3061 = vadd.f32 %v3024, %v3059
        %v3062 = vadd.f32 %v3025, %v3059
        %v3063 = vadd.f32 %v3026, %v3059
        %v3064 = vadd.f32 %v3027, %v3059
        %v3065 = vadd.f32 %v3028, %v3059
        %v3066 = vadd.f32 %v3029, %v3059
        %v3067 = vadd.f32 %v3030, %v3059
        %v3068 = vadd.f32 %v3031, %v3059
        %v3069 = vadd.f32 %v3032, %v3059
        %v3070 = vadd.f32 %v3033, %v3059
        %v3071 = vadd.f32 %v3034, %v3059
        %v3072 = vadd.f32 %v3035, %v3059
        %v3073 = vadd.f32 %v3036, %v3059
        %v3074 = vadd.f32 %v3037, %v3059
        %v3075 = vadd.f32 %v3038, %v3059
        %v3076 = vadd.f32 %v3039, %v3059
        %v3077 = vadd.f32 %v3040, %v3059
        %v3078 = vadd.f32 %v3041, %v3059
        %v3079 = vadd.f32 %v3042, %v3059
        %v3080 = vadd.f32 %v3043, %v3059
        %v3081 = vadd.f32 %v3044, %v3059
        %v3082 = vadd.f32 %v3045, %v3059
        %v3083 = vadd.f32 %v3046, %v3059
        %v3084 = vadd.f32 %v3047, %v3059
        %v3085 = vadd.f32 %v3048, %v3059
        %v3086 = vadd.f32 %v3049, %v3059
        %v3087 = vadd.f32 %v3050, %v3059
        %v3088 = vadd.f32 %v3051, %v3059
        %v3089 = vadd.f32 %v3052, %v3059
        %v3090 = vadd.f32 %v3053, %v3059
        %v3091 = vadd.f32 %v3054, %v3059
        %v3092 = vpack.c.bf16 %v3061, %v3060
        %v3093 = vpack.c.bf16 %v3063, %v3062
        %v3094 = vpack.c.bf16 %v3065, %v3064
        %v3095 = vpack.c.bf16 %v3067, %v3066
        %v3096 = vpack.c.bf16 %v3069, %v3068
        %v3097 = vpack.c.bf16 %v3071, %v3070
        %v3098 = vpack.c.bf16 %v3073, %v3072
        %v3099 = vpack.c.bf16 %v3075, %v3074
        %v3100 = vpack.c.bf16 %v3077, %v3076
        %v3101 = vpack.c.bf16 %v3079, %v3078
        %v3102 = vpack.c.bf16 %v3081, %v3080
        %v3103 = vpack.c.bf16 %v3083, %v3082
        %v3104 = vpack.c.bf16 %v3085, %v3084
        %v3105 = vpack.c.bf16 %v3087, %v3086
        %v3106 = vpack.c.bf16 %v3089, %v3088
        %v3107 = vpack.c.bf16 %v3091, %v3090
        %v3124 = vunpack.c.l.b16 %v3092
        %v3125 = vunpack.c.h.b16 %v3092
        %v3126 = vunpack.c.l.b16 %v3093
        %v3127 = vunpack.c.h.b16 %v3093
        %v3128 = vunpack.c.l.b16 %v3094
        %v3129 = vunpack.c.h.b16 %v3094
        %v3130 = vunpack.c.l.b16 %v3095
        %v3131 = vunpack.c.h.b16 %v3095
        %v3132 = vunpack.c.l.b16 %v3096
        %v3133 = vunpack.c.h.b16 %v3096
        %v3134 = vunpack.c.l.b16 %v3097
        %v3135 = vunpack.c.h.b16 %v3097
        %v3136 = vunpack.c.l.b16 %v3098
        %v3137 = vunpack.c.h.b16 %v3098
        %v3138 = vunpack.c.l.b16 %v3099
        %v3139 = vunpack.c.h.b16 %v3099
        %v3140 = vunpack.c.l.b16 %v3100
        %v3141 = vunpack.c.h.b16 %v3100
        %v3142 = vunpack.c.l.b16 %v3101
        %v3143 = vunpack.c.h.b16 %v3101
        %v3144 = vunpack.c.l.b16 %v3102
        %v3145 = vunpack.c.h.b16 %v3102
        %v3146 = vunpack.c.l.b16 %v3103
        %v3147 = vunpack.c.h.b16 %v3103
        %v3148 = vunpack.c.l.b16 %v3104
        %v3149 = vunpack.c.h.b16 %v3104
        %v3150 = vunpack.c.l.b16 %v3105
        %v3151 = vunpack.c.h.b16 %v3105
        %v3152 = vunpack.c.l.b16 %v3106
        %v3153 = vunpack.c.h.b16 %v3106
        %v3154 = vunpack.c.l.b16 %v3107
        %v3155 = vunpack.c.h.b16 %v3107
        %v3156 = vpack.c.b16 %v3124, %v3124
        %v3157 = vpack.c.b16 %v3125, %v3125
        %v3158 = vpack.c.b16 %v3126, %v3126
        %v3159 = vpack.c.b16 %v3127, %v3127
        %v3160 = vpack.c.b16 %v3128, %v3128
        %v3161 = vpack.c.b16 %v3129, %v3129
        %v3162 = vpack.c.b16 %v3130, %v3130
        %v3163 = vpack.c.b16 %v3131, %v3131
        %v3164 = vpack.c.b16 %v3132, %v3132
        %v3165 = vpack.c.b16 %v3133, %v3133
        %v3166 = vpack.c.b16 %v3134, %v3134
        %v3167 = vpack.c.b16 %v3135, %v3135
        %v3168 = vpack.c.b16 %v3136, %v3136
        %v3169 = vpack.c.b16 %v3137, %v3137
        %v3170 = vpack.c.b16 %v3138, %v3138
        %v3171 = vpack.c.b16 %v3139, %v3139
        %v3172 = vpack.c.b16 %v3140, %v3140
        %v3173 = vpack.c.b16 %v3141, %v3141
        %v3174 = vpack.c.b16 %v3142, %v3142
        %v3175 = vpack.c.b16 %v3143, %v3143
        %v3176 = vpack.c.b16 %v3144, %v3144
        %v3177 = vpack.c.b16 %v3145, %v3145
        %v3178 = vpack.c.b16 %v3146, %v3146
        %v3179 = vpack.c.b16 %v3147, %v3147
        %v3180 = vpack.c.b16 %v3148, %v3148
        %v3181 = vpack.c.b16 %v3149, %v3149
        %v3182 = vpack.c.b16 %v3150, %v3150
        %v3183 = vpack.c.b16 %v3151, %v3151
        %v3184 = vpack.c.b16 %v3152, %v3152
        %v3185 = vpack.c.b16 %v3153, %v3153
        %v3186 = vpack.c.b16 %v3154, %v3154
        %v3187 = vpack.c.b16 %v3155, %v3155
        %vm3220 = vcmask 60416
        %3221 = vst.msk [vmem:[%s209] sm:$0xf] %vm3220, %v3156
        %3222 = vst.msk [vmem:[%s209 + $0x4] sm:$0xf] %vm3220, %v3157
        %3223 = vst.msk [vmem:[%s209 + $0x8] sm:$0xf] %vm3220, %v3158
        %3224 = vst.msk [vmem:[%s209 + $0xc] sm:$0xf] %vm3220, %v3159
        %3225 = vst.msk [vmem:[%s209 + $0x10] sm:$0xf] %vm3220, %v3160
        %3226 = vst.msk [vmem:[%s209 + $0x14] sm:$0xf] %vm3220, %v3161
        %3227 = vst.msk [vmem:[%s209 + $0x18] sm:$0xf] %vm3220, %v3162
        %3228 = vst.msk [vmem:[%s209 + $0x1c] sm:$0xf] %vm3220, %v3163
        %3229 = vst.msk [vmem:[%s209 + $0x20] sm:$0xf] %vm3220, %v3164
        %3230 = vst.msk [vmem:[%s209 + $0x24] sm:$0xf] %vm3220, %v3165
        %3231 = vst.msk [vmem:[%s209 + $0x28] sm:$0xf] %vm3220, %v3166
        %3232 = vst.msk [vmem:[%s209 + $0x2c] sm:$0xf] %vm3220, %v3167
        %3233 = vst.msk [vmem:[%s209 + $0x30] sm:$0xf] %vm3220, %v3168
        %3234 = vst.msk [vmem:[%s209 + $0x34] sm:$0xf] %vm3220, %v3169
        %3235 = vst.msk [vmem:[%s209 + $0x38] sm:$0xf] %vm3220, %v3170
        %3236 = vst.msk [vmem:[%s209 + $0x3c] sm:$0xf] %vm3220, %v3171
        %3237 = vst.msk [vmem:[%s209 + $0x40] sm:$0xf] %vm3220, %v3172
        %3238 = vst.msk [vmem:[%s209 + $0x44] sm:$0xf] %vm3220, %v3173
        %3239 = vst.msk [vmem:[%s209 + $0x48] sm:$0xf] %vm3220, %v3174
        %3240 = vst.msk [vmem:[%s209 + $0x4c] sm:$0xf] %vm3220, %v3175
        %3241 = vst.msk [vmem:[%s209 + $0x50] sm:$0xf] %vm3220, %v3176
        %3242 = vst.msk [vmem:[%s209 + $0x54] sm:$0xf] %vm3220, %v3177
        %3243 = vst.msk [vmem:[%s209 + $0x58] sm:$0xf] %vm3220, %v3178
        %3244 = vst.msk [vmem:[%s209 + $0x5c] sm:$0xf] %vm3220, %v3179
        %3245 = vst.msk [vmem:[%s209 + $0x60] sm:$0xf] %vm3220, %v3180
        %3246 = vst.msk [vmem:[%s209 + $0x64] sm:$0xf] %vm3220, %v3181
        %3247 = vst.msk [vmem:[%s209 + $0x68] sm:$0xf] %vm3220, %v3182
        %3248 = vst.msk [vmem:[%s209 + $0x6c] sm:$0xf] %vm3220, %v3183
        %3249 = vst.msk [vmem:[%s209 + $0x70] sm:$0xf] %vm3220, %v3184
        %3250 = vst.msk [vmem:[%s209 + $0x74] sm:$0xf] %vm3220, %v3185
        %3251 = vst.msk [vmem:[%s209 + $0x78] sm:$0xf] %vm3220, %v3186
        %3252 = vst.msk [vmem:[%s209 + $0x7c] sm:$0xf] %vm3220, %v3187
      $region52: #{convolution_block.2} parent=31 // pred_fallthru
        _
      %s3253 = smul.u32 %s19, %s20
      %s3254 = smul.u32 %s19, %s21
      %s3255 = smul.u32 16, %s3254
      %p3256 = scmp.lt.s32.totalorder %s3253, 1
      %s3257 = scalar_select %p3256, %s3253, 1
      %p3258 = scmp.lt.s32.totalorder %s3255, 15
      %s3259 = scalar_select %p3258, %s3255, 15
      %s3260 = smul.addr %s3259, 2
      %s3261 = smul.addr %s3257, 32
      %s3262 = sadd.s32 %s3260, %s3261
      %s3263 = smul.addr %s3262, 4
      %s3264 = scalar_lea.vmem %s3, %s3263
      // Predicated region
      $region53: #{convolution_block.2} parent=31 // pred_check
        %p3265 = pneg %p125
      $region54: #{convolution_block.2} parent=31 // pred_check_branch
        %3267 = sbr.rel (%p3265) target = $region56
      $region55: #{convolution_block.2} parent=31 // pred_region
        %s3268 = smul.u32 %s19, %s20
        %s3269 = smul.u32 %s19, %s21
        %s3270 = smul.u32 16, %s3269
      $region56: #{convolution_block.2} parent=31 // pred_fallthru
        _
    $region32: #{convolution_block.2} parent=5 // pred_fallthru
      _
    %p3271 = scmp.le.s32.totalorder 2, %s9
    // Predicated region
    $region57: #{convolution_block.2} parent=5 // pred_check
      %p3272 = pneg %p3271
    $region58: #{convolution_block.2} parent=5 // pred_check_branch
      %3274 = sbr.rel (%p3272) target = $region60
    $region59: #{convolution_block.2} parent=5 // pred_region
      %s3275 = ssub.s32 %s9, 2
      // Predicated region
      $region61: #{convolution_block.2} parent=59 // pred_check
        %p3276 = pneg %p131
      $region62: #{convolution_block.2} parent=59 // pred_check_branch
        %3278 = sbr.rel (%p3276) target = $region64
      $region63: #{convolution_block.2} parent=59 // pred_region
        %s3279 = smul.u32 %s22, %s23
        %s3280 = smul.u32 %s22, %s24
        %s3281 = smul.u32 16, %s3280
        %p3282 = scmp.lt.s32.totalorder %s3279, 1
        %s3283 = scalar_select %p3282, %s3279, 1
        %p3284 = scmp.lt.s32.totalorder %s3281, 15
        %s3285 = scalar_select %p3284, %s3281, 15
        %s3286 = smul.addr %s3285, 2
        %s3287 = smul.addr %s3283, 32
        %s3288 = sadd.s32 %s3286, %s3287
        %s3289 = smul.addr %s3288, 4
        %s3290 = scalar_lea.vmem %s3, %s3289
      $region64: #{convolution_block.2} parent=59 // pred_fallthru
        _
    $region60: #{convolution_block.2} parent=5 // pred_fallthru
      _
  $region6: #{convolution_block.2} parent=0 // loop_footer
    %s13 = sadd.s32 1, %s9
  $region7: #{convolution_block.2} parent=0 // loop_footer_branch
    %8 = sbr.rel target = $region3
  $region8: #{convolution_block.2} parent=0 // loop_exit
    _

</llo_original>
